<compile_context>
chip_gen: v7x
topology: tpu7x:2x2x1
jax: 0.10.0
libtpu: 0.0.40
codegen_flags: <defaults>
</compile_context>

<pallas_src>
import jax
import jax.numpy as jnp
from jax import lax
from jax.experimental import pallas as pl
from jax.experimental.pallas import tpu as pltpu

INPUT_SIZE = 6
HIDDEN = 64          # logical hidden size (PyTorch module)
HIDDEN_PAD = 128     # padded hidden size -> 128-lane-aligned gate tiles
OUT_PAD = 128        # padded fc output width -> lane-dense output store
NUM_LAYERS = 2       # hard-coded as two explicit layers inside the kernel


def lstm_kernel(x_ref, len_ref,
                wih0_ref, b0_ref, whh0_ref, whh1_ref, wih1_ref, b1_ref,
                fcw_ref, fcb_ref,
                out_ref,
                xproj_ref, hseq_ref):
    """Whole-sequence 2-layer LSTM + fc. Everything lives in VMEM."""
    T, B, In = x_ref.shape
    Hp = hseq_ref.shape[2]
    G = 4 * Hp

    # ---- (1) hoisted layer-0 input projection: one big matmul over all t ----
    x_all = x_ref[...].reshape(T * B, In).astype(jnp.bfloat16)      # (T*B, In)
    xproj = (jnp.dot(x_all, wih0_ref[...],
                     preferred_element_type=jnp.float32)
             + b0_ref[...])                                         # (T*B, 4Hp) f32
    xproj_ref[...] = xproj.reshape(T, B, G)

    lens = len_ref[...]            # (B, 1) int32
    whh0 = whh0_ref[...]           # (Hp, 4Hp) bf16
    whh1 = whh1_ref[...]           # (Hp, 4Hp) bf16
    wih1 = wih1_ref[...]           # (Hp, 4Hp) bf16
    b1 = b1_ref[...]               # (1, 4Hp)  f32

    def activate(gates, c_prev):
        # PyTorch gate order: i, f, g, o — each slice is a full 128-lane tile.
        i = jax.nn.sigmoid(gates[:, 0:Hp])
        f = jax.nn.sigmoid(gates[:, Hp:2 * Hp])
        g = jnp.tanh(gates[:, 2 * Hp:3 * Hp])
        o = jax.nn.sigmoid(gates[:, 3 * Hp:4 * Hp])
        c_new = f * c_prev + i * g
        h_new = o * jnp.tanh(c_new)
        return h_new, c_new

    def step(t, carry):
        h0, c0, h1, c1 = carry          # each (B, Hp) f32, live in vregs
        valid = t < lens                # (B, 1) bool

        # ---- (2) de-fused recurrent matmuls (no zero-padded weight tiles) ----
        # rec0 is on the critical path; rec1 only needs last step's h1, so it
        # has a full step of slack and overlaps with the layer-0 chain.
        rec0 = jnp.dot(h0.astype(jnp.bfloat16), whh0,
                       preferred_element_type=jnp.float32)          # (B, 4Hp)
        rec1 = jnp.dot(h1.astype(jnp.bfloat16), whh1,
                       preferred_element_type=jnp.float32)          # (B, 4Hp)

        # layer 0 (bias b0 already folded into xproj)
        gates0 = xproj_ref[t] + rec0
        h0n, c0n = activate(gates0, c0)
        h0n = jnp.where(valid, h0n, h0)
        c0n = jnp.where(valid, c0n, c0)

        # layer 1 (input = layer-0 hidden state of this step); wih1 kept as a
        # separate dot so whh1's contribution stays off the h0n critical path.
        gates1 = (jnp.dot(h0n.astype(jnp.bfloat16), wih1,
                          preferred_element_type=jnp.float32)
                  + rec1 + b1)
        h1n, c1n = activate(gates1, c1)
        h1n = jnp.where(valid, h1n, h1)
        c1n = jnp.where(valid, c1n, c1)

        # pad_packed_sequence zeroes padded outputs; lane-dense (B, 128) store
        hseq_ref[t] = jnp.where(valid, h1n, 0.0)
        return (h0n, c0n, h1n, c1n)

    zeros = jnp.zeros((B, Hp), jnp.float32)   # PyTorch default h0/c0 = 0
    lax.fori_loop(0, T, step, (zeros, zeros, zeros, zeros), unroll=True)

    # ---- (3) fc head: one big matmul + single bulk (lane-dense) store ----
    h_all = hseq_ref[...].reshape(T * B, Hp).astype(jnp.bfloat16)
    out = (jnp.dot(h_all, fcw_ref[...], preferred_element_type=jnp.float32)
           + fcb_ref[...])
    out_ref[...] = out.reshape(T, B, out_ref.shape[2])


def init_params(key, input_size=INPUT_SIZE, hidden=HIDDEN):
    """Deterministic synthetic parameters (PyTorch-style uniform(-k, k))."""
    k = 1.0 / jnp.sqrt(hidden)
    keys = jax.random.split(key, 10)
    u = lambda kk, shape: jax.random.uniform(kk, shape, jnp.float32, -k, k)

    wih0 = u(keys[0], (4 * hidden, input_size))   # weight_ih_l0
    whh0 = u(keys[1], (4 * hidden, hidden))       # weight_hh_l0
    bih0 = u(keys[2], (4 * hidden,))
    bhh0 = u(keys[3], (4 * hidden,))
    wih1 = u(keys[4], (4 * hidden, hidden))       # weight_ih_l1
    whh1 = u(keys[5], (4 * hidden, hidden))
    bih1 = u(keys[6], (4 * hidden,))
    bhh1 = u(keys[7], (4 * hidden,))
    fcw = u(keys[8], (input_size, hidden))        # fc.weight
    fcb = u(keys[9], (input_size,))               # fc.bias

    return dict(
        wih0_t=wih0.T, whh0_t=whh0.T, b0=(bih0 + bhh0).reshape(1, -1),
        wih1_t=wih1.T, whh1_t=whh1.T, b1=(bih1 + bhh1).reshape(1, -1),
        fcw_t=fcw.T, fcb=fcb.reshape(1, -1),
    )


def prepare_kernel_params(p, hidden=HIDDEN, hp=HIDDEN_PAD, fp=OUT_PAD):
    """Pad H->Hp per gate (zero padding); weights to bf16, biases stay f32."""
    def pad_gate_cols(w):                       # (rows, 4H) -> (rows, 4Hp)
        rows = w.shape[0]
        w4 = w.reshape(rows, 4, hidden)
        w4 = jnp.pad(w4, ((0, 0), (0, 0), (0, hp - hidden)))
        return w4.reshape(rows, 4 * hp)

    def pad_rows(w):                            # (H, cols) -> (Hp, cols)
        return jnp.pad(w, ((0, hp - hidden), (0, 0)))

    bf = lambda w: w.astype(jnp.bfloat16)

    wih0_p = bf(pad_gate_cols(p['wih0_t']))                    # (In, 4Hp) bf16
    b0_p = pad_gate_cols(p['b0'])                              # (1, 4Hp)  f32
    whh0_p = bf(pad_gate_cols(pad_rows(p['whh0_t'])))          # (Hp, 4Hp) bf16
    whh1_p = bf(pad_gate_cols(pad_rows(p['whh1_t'])))          # (Hp, 4Hp) bf16
    wih1_p = bf(pad_gate_cols(pad_rows(p['wih1_t'])))          # (Hp, 4Hp) bf16
    b1_p = pad_gate_cols(p['b1'])                              # (1, 4Hp)  f32

    fcw_p = bf(jnp.pad(pad_rows(p['fcw_t']),
                       ((0, 0), (0, fp - p['fcw_t'].shape[1]))))  # (Hp, Fp) bf16
    fcb_p = jnp.pad(p['fcb'], ((0, 0), (0, fp - p['fcb'].shape[1])))

    return dict(wih0=wih0_p, b0=b0_p, whh0=whh0_p, whh1=whh1_p,
                wih1=wih1_p, b1=b1_p, fcw=fcw_p, fcb=fcb_p)


def lstm_forward(x, lengths, kparams, t_max):
    """x: (B, T, In) float32 batch-first; lengths: (B,) int; t_max: python int."""
    B, T, In = x.shape
    Bp = max(8, ((B + 7) // 8) * 8)             # pad batch to sublane multiple

    x_p = jnp.zeros((Bp, T, In), jnp.float32).at[:B].set(x.astype(jnp.float32))
    lens_p = jnp.zeros((Bp, 1), jnp.int32).at[:B, 0].set(lengths.astype(jnp.int32))
    x_tm = jnp.transpose(x_p, (1, 0, 2))        # (T, Bp, In) time-major

    args = (x_tm, lens_p,
            kparams['wih0'], kparams['b0'],
            kparams['whh0'], kparams['whh1'],
            kparams['wih1'], kparams['b1'],
            kparams['fcw'], kparams['fcb'])

    vmem = pl.BlockSpec(memory_space=pltpu.MemorySpace.VMEM)
    out_tm = pl.pallas_call(
        lstm_kernel,
        out_shape=jax.ShapeDtypeStruct((T, Bp, OUT_PAD), jnp.float32),
        in_specs=[vmem] * len(args),
        out_specs=vmem,
        scratch_shapes=[
            pltpu.VMEM((T, Bp, 4 * HIDDEN_PAD), jnp.float32),  # x projection
            pltpu.VMEM((T, Bp, HIDDEN_PAD), jnp.float32),      # masked h1 seq
        ],
    )(*args)

    out = jnp.transpose(out_tm, (1, 0, 2))[:B, :, :In]   # (B, T, In)
    # pad_packed_sequence truncates to max(lengths); t_max is a host int
    return out[:, :t_max, :]


def lstm_reference(x, lengths, params, t_max):
    """Pure-JAX reference with identical packed-sequence semantics."""
    B, T, In = x.shape
    H = HIDDEN

    def run_layer(inp, wih_t, whh_t, b):
        def scan_fn(carry, xt_t):
            h, c = carry
            xt, t = xt_t
            gates = xt @ wih_t + h @ whh_t + b
            i = jax.nn.sigmoid(gates[:, :H])
            f = jax.nn.sigmoid(gates[:, H:2 * H])
            g = jnp.tanh(gates[:, 2 * H:3 * H])
            o = jax.nn.sigmoid(gates[:, 3 * H:])
            cn = f * c + i * g
            hn = o * jnp.tanh(cn)
            valid = (t < lengths)[:, None]
            h = jnp.where(valid, hn, h)
            c = jnp.where(valid, cn, c)
            return (h, c), h

        init = (jnp.zeros((B, H), jnp.float32), jnp.zeros((B, H), jnp.float32))
        _, hs = lax.scan(scan_fn, init,
                         (jnp.transpose(inp, (1, 0, 2)), jnp.arange(T)))
        return jnp.transpose(hs, (1, 0, 2))

    h1 = run_layer(x, params['wih0_t'], params['whh0_t'], params['b0'])
    h2 = run_layer(h1, params['wih1_t'], params['whh1_t'], params['b1'])
    mask = jnp.arange(T)[None, :, None] < lengths[:, None, None]
    h2 = jnp.where(mask, h2, 0.0)
    out = h2 @ params['fcw_t'] + params['fcb']
    return out[:, :t_max, :]


if __name__ == "__main__":
    key = jax.random.PRNGKey(0)
    k_param, k_x = jax.random.split(key)

    B, T = 4, 8
    params = init_params(k_param)
    kparams = prepare_kernel_params(params)

    x = jax.random.normal(k_x, (B, T, INPUT_SIZE), jnp.float32)
    lengths_list = [8, 5, 3, 6]                     # variable lengths
    lengths = jnp.array(lengths_list, dtype=jnp.int32)
    t_max = max(lengths_list)                       # host-side, jit-safe

    out = lstm_forward(x, lengths, kparams, t_max)
    out = jax.block_until_ready(out)

    # Reference uses the same bf16-rounded weights (f32 activations) so the
    # only divergence is the kernel's bf16 activation casts at the matmuls.
    rb = lambda w: w.astype(jnp.bfloat16).astype(jnp.float32)
    ref_params = {k: (rb(v) if k in ('wih0_t', 'whh0_t', 'wih1_t',
                                     'whh1_t', 'fcw_t') else v)
                  for k, v in params.items()}
    ref = lstm_reference(x, lengths, ref_params, t_max)

    assert out.shape == ref.shape, (out.shape, ref.shape)
    err = float(jnp.max(jnp.abs(out - ref)))
    assert err < 3e-2, f"mismatch vs reference, max abs err = {err}"

    print("KERNEL_OK")
</pallas_src>

<mosaic_0001>
module attributes {stable_mosaic.version = 11 : i64} {
  func.func @lstm_kernel(%arg0: memref<8x8x6xf32, #tpu.memory_space<vmem>>, %arg1: memref<8x1xi32, #tpu.memory_space<vmem>>, %arg2: memref<6x512xbf16, #tpu.memory_space<vmem>>, %arg3: memref<1x512xf32, #tpu.memory_space<vmem>>, %arg4: memref<128x512xbf16, #tpu.memory_space<vmem>>, %arg5: memref<128x512xbf16, #tpu.memory_space<vmem>>, %arg6: memref<128x512xbf16, #tpu.memory_space<vmem>>, %arg7: memref<1x512xf32, #tpu.memory_space<vmem>>, %arg8: memref<128x128xbf16, #tpu.memory_space<vmem>>, %arg9: memref<1x128xf32, #tpu.memory_space<vmem>>, %arg10: memref<8x8x128xf32, #tpu.memory_space<vmem>>, %arg11: memref<8x8x512xf32, #tpu.memory_space<vmem>>, %arg12: memref<8x8x128xf32, #tpu.memory_space<vmem>>) attributes {dimension_semantics = [], scalar_prefetch = 0 : i64, scratch_operands = 2 : i64, tpu.core_type = #tpu.core_type<tc>} {
    %c0 = arith.constant 0 : index
    %c0_0 = arith.constant 0 : index
    %c0_1 = arith.constant 0 : index
    %0 = vector.load %arg0[%c0, %c0_0, %c0_1] : memref<8x8x6xf32, #tpu.memory_space<vmem>>, vector<8x8x6xf32>
    %1 = vector.shape_cast %0 : vector<8x8x6xf32> to vector<64x6xf32>
    %2 = arith.truncf %1 : vector<64x6xf32> to vector<64x6xbf16>
    %c0_2 = arith.constant 0 : index
    %c0_3 = arith.constant 0 : index
    %3 = vector.load %arg2[%c0_2, %c0_3] : memref<6x512xbf16, #tpu.memory_space<vmem>>, vector<6x512xbf16>
    %cst = arith.constant dense<0.000000e+00> : vector<64x512xf32>
    %4 = tpu.matmul %2, %3, %cst {dimension_numbers = #tpu.dot_dimension_numbers<[1], [0], [0], [1], [0, 0, 1, 1], [], []>} : vector<64x6xbf16>, vector<6x512xbf16>, vector<64x512xf32> -> vector<64x512xf32>
    %c0_4 = arith.constant 0 : index
    %c0_5 = arith.constant 0 : index
    %5 = vector.load %arg3[%c0_4, %c0_5] : memref<1x512xf32, #tpu.memory_space<vmem>>, vector<1x512xf32>
    %6 = vector.broadcast %5 : vector<1x512xf32> to vector<64x512xf32>
    %7 = arith.addf %4, %6 : vector<64x512xf32>
    %8 = vector.shape_cast %7 : vector<64x512xf32> to vector<8x8x512xf32>
    %c0_6 = arith.constant 0 : index
    %c0_7 = arith.constant 0 : index
    %c0_8 = arith.constant 0 : index
    %9 = vector.load %arg11[%c0_6, %c0_7, %c0_8] : memref<8x8x512xf32, #tpu.memory_space<vmem>>, vector<8x8x512xf32>
    tpu.vector_store %arg11[%c0_6, %c0_7, %c0_8], %8 {strides = array<i32>} : memref<8x8x512xf32, #tpu.memory_space<vmem>>, vector<8x8x512xf32>,
    %c0_9 = arith.constant 0 : index
    %c0_10 = arith.constant 0 : index
    %10 = vector.load %arg1[%c0_9, %c0_10] : memref<8x1xi32, #tpu.memory_space<vmem>>, vector<8x1xi32>
    %c0_11 = arith.constant 0 : index
    %c0_12 = arith.constant 0 : index
    %11 = vector.load %arg4[%c0_11, %c0_12] : memref<128x512xbf16, #tpu.memory_space<vmem>>, vector<128x512xbf16>
    %c0_13 = arith.constant 0 : index
    %c0_14 = arith.constant 0 : index
    %12 = vector.load %arg5[%c0_13, %c0_14] : memref<128x512xbf16, #tpu.memory_space<vmem>>, vector<128x512xbf16>
    %c0_15 = arith.constant 0 : index
    %c0_16 = arith.constant 0 : index
    %13 = vector.load %arg6[%c0_15, %c0_16] : memref<128x512xbf16, #tpu.memory_space<vmem>>, vector<128x512xbf16>
    %c0_17 = arith.constant 0 : index
    %c0_18 = arith.constant 0 : index
    %14 = vector.load %arg7[%c0_17, %c0_18] : memref<1x512xf32, #tpu.memory_space<vmem>>, vector<1x512xf32>
    %cst_19 = arith.constant 0.000000e+00 : f32
    %15 = vector.broadcast %cst_19 : f32 to vector<8x128xf32>
    %c0_i32 = arith.constant 0 : i32
    %16 = vector.broadcast %c0_i32 : i32 to vector<8x1xi32>
    %17 = arith.cmpi slt, %16, %10 : vector<8x1xi32>
    %18 = arith.truncf %15 : vector<8x128xf32> to vector<8x128xbf16>
    %cst_20 = arith.constant dense<0.000000e+00> : vector<8x512xf32>
    %19 = tpu.matmul %18, %11, %cst_20 {dimension_numbers = #tpu.dot_dimension_numbers<[1], [0], [0], [1], [0, 0, 1, 1], [], []>} : vector<8x128xbf16>, vector<128x512xbf16>, vector<8x512xf32> -> vector<8x512xf32>
    %20 = arith.truncf %15 : vector<8x128xf32> to vector<8x128xbf16>
    %cst_21 = arith.constant dense<0.000000e+00> : vector<8x512xf32>
    %21 = tpu.matmul %20, %12, %cst_21 {dimension_numbers = #tpu.dot_dimension_numbers<[1], [0], [0], [1], [0, 0, 1, 1], [], []>} : vector<8x128xbf16>, vector<128x512xbf16>, vector<8x512xf32> -> vector<8x512xf32>
    %22 = arith.index_cast %c0_i32 : i32 to index
    %c0_22 = arith.constant 0 : index
    %c0_23 = arith.constant 0 : index
    %23 = vector.load %arg11[%22, %c0_22, %c0_23] : memref<8x8x512xf32, #tpu.memory_space<vmem>>, vector<1x8x512xf32>
    %24 = vector.shape_cast %23 : vector<1x8x512xf32> to vector<8x512xf32>
    %25 = arith.addf %24, %19 : vector<8x512xf32>
    %26 = vector.extract_strided_slice %25 {offsets = [0, 0], sizes = [8, 128], strides = [1, 1]} : vector<8x512xf32> to vector<8x128xf32>
    %27 = arith.negf %26 : vector<8x128xf32>
    %28 = math.exp %27 : vector<8x128xf32>
    %cst_24 = arith.constant 1.000000e+00 : f32
    %29 = vector.broadcast %cst_24 : f32 to vector<8x128xf32>
    %30 = arith.addf %29, %28 : vector<8x128xf32>
    %31 = arith.divf %29, %30 : vector<8x128xf32>
    %32 = vector.extract_strided_slice %25 {offsets = [0, 128], sizes = [8, 128], strides = [1, 1]} : vector<8x512xf32> to vector<8x128xf32>
    %33 = arith.negf %32 : vector<8x128xf32>
    %34 = math.exp %33 : vector<8x128xf32>
    %cst_25 = arith.constant 1.000000e+00 : f32
    %35 = vector.broadcast %cst_25 : f32 to vector<8x128xf32>
    %36 = arith.addf %35, %34 : vector<8x128xf32>
    %37 = arith.divf %35, %36 : vector<8x128xf32>
    %38 = vector.extract_strided_slice %25 {offsets = [0, 256], sizes = [8, 128], strides = [1, 1]} : vector<8x512xf32> to vector<8x128xf32>
    %39 = math.tanh %38 : vector<8x128xf32>
    %40 = vector.extract_strided_slice %25 {offsets = [0, 384], sizes = [8, 128], strides = [1, 1]} : vector<8x512xf32> to vector<8x128xf32>
    %41 = arith.negf %40 : vector<8x128xf32>
    %42 = math.exp %41 : vector<8x128xf32>
    %cst_26 = arith.constant 1.000000e+00 : f32
    %43 = vector.broadcast %cst_26 : f32 to vector<8x128xf32>
    %44 = arith.addf %43, %42 : vector<8x128xf32>
    %45 = arith.divf %43, %44 : vector<8x128xf32>
    %46 = arith.mulf %37, %15 : vector<8x128xf32>
    %47 = arith.mulf %31, %39 : vector<8x128xf32>
    %48 = arith.addf %46, %47 : vector<8x128xf32>
    %49 = math.tanh %48 : vector<8x128xf32>
    %50 = arith.mulf %45, %49 : vector<8x128xf32>
    %51 = vector.shape_cast %17 : vector<8x1xi1> to vector<8x1xi1>
    %52 = vector.broadcast %51 : vector<8x1xi1> to vector<8x128xi1>
    %53 = arith.select %52, %50, %15 : vector<8x128xi1>, vector<8x128xf32>
    %54 = vector.shape_cast %17 : vector<8x1xi1> to vector<8x1xi1>
    %55 = vector.broadcast %54 : vector<8x1xi1> to vector<8x128xi1>
    %56 = arith.select %55, %48, %15 : vector<8x128xi1>, vector<8x128xf32>
    %57 = arith.truncf %53 : vector<8x128xf32> to vector<8x128xbf16>
    %cst_27 = arith.constant dense<0.000000e+00> : vector<8x512xf32>
    %58 = tpu.matmul %57, %13, %cst_27 {dimension_numbers = #tpu.dot_dimension_numbers<[1], [0], [0], [1], [0, 0, 1, 1], [], []>} : vector<8x128xbf16>, vector<128x512xbf16>, vector<8x512xf32> -> vector<8x512xf32>
    %59 = arith.addf %58, %21 : vector<8x512xf32>
    %60 = vector.broadcast %14 : vector<1x512xf32> to vector<8x512xf32>
    %61 = arith.addf %59, %60 : vector<8x512xf32>
    %62 = vector.extract_strided_slice %61 {offsets = [0, 0], sizes = [8, 128], strides = [1, 1]} : vector<8x512xf32> to vector<8x128xf32>
    %63 = arith.negf %62 : vector<8x128xf32>
    %64 = math.exp %63 : vector<8x128xf32>
    %cst_28 = arith.constant 1.000000e+00 : f32
    %65 = vector.broadcast %cst_28 : f32 to vector<8x128xf32>
    %66 = arith.addf %65, %64 : vector<8x128xf32>
    %67 = arith.divf %65, %66 : vector<8x128xf32>
    %68 = vector.extract_strided_slice %61 {offsets = [0, 128], sizes = [8, 128], strides = [1, 1]} : vector<8x512xf32> to vector<8x128xf32>
    %69 = arith.negf %68 : vector<8x128xf32>
    %70 = math.exp %69 : vector<8x128xf32>
    %cst_29 = arith.constant 1.000000e+00 : f32
    %71 = vector.broadcast %cst_29 : f32 to vector<8x128xf32>
    %72 = arith.addf %71, %70 : vector<8x128xf32>
    %73 = arith.divf %71, %72 : vector<8x128xf32>
    %74 = vector.extract_strided_slice %61 {offsets = [0, 256], sizes = [8, 128], strides = [1, 1]} : vector<8x512xf32> to vector<8x128xf32>
    %75 = math.tanh %74 : vector<8x128xf32>
    %76 = vector.extract_strided_slice %61 {offsets = [0, 384], sizes = [8, 128], strides = [1, 1]} : vector<8x512xf32> to vector<8x128xf32>
    %77 = arith.negf %76 : vector<8x128xf32>
    %78 = math.exp %77 : vector<8x128xf32>
    %cst_30 = arith.constant 1.000000e+00 : f32
    %79 = vector.broadcast %cst_30 : f32 to vector<8x128xf32>
    %80 = arith.addf %79, %78 : vector<8x128xf32>
    %81 = arith.divf %79, %80 : vector<8x128xf32>
    %82 = arith.mulf %73, %15 : vector<8x128xf32>
    %83 = arith.mulf %67, %75 : vector<8x128xf32>
    %84 = arith.addf %82, %83 : vector<8x128xf32>
    %85 = math.tanh %84 : vector<8x128xf32>
    %86 = arith.mulf %81, %85 : vector<8x128xf32>
    %87 = vector.shape_cast %17 : vector<8x1xi1> to vector<8x1xi1>
    %88 = vector.broadcast %87 : vector<8x1xi1> to vector<8x128xi1>
    %89 = arith.select %88, %86, %15 : vector<8x128xi1>, vector<8x128xf32>
    %90 = vector.shape_cast %17 : vector<8x1xi1> to vector<8x1xi1>
    %91 = vector.broadcast %90 : vector<8x1xi1> to vector<8x128xi1>
    %92 = arith.select %91, %84, %15 : vector<8x128xi1>, vector<8x128xf32>
    %cst_31 = arith.constant 0.000000e+00 : f32
    %93 = vector.shape_cast %17 : vector<8x1xi1> to vector<8x1xi1>
    %94 = vector.broadcast %93 : vector<8x1xi1> to vector<8x128xi1>
    %95 = vector.broadcast %cst_31 : f32 to vector<8x128xf32>
    %96 = arith.select %94, %89, %95 : vector<8x128xi1>, vector<8x128xf32>
    %97 = arith.index_cast %c0_i32 : i32 to index
    %c0_32 = arith.constant 0 : index
    %c0_33 = arith.constant 0 : index
    %98 = vector.load %arg12[%97, %c0_32, %c0_33] : memref<8x8x128xf32, #tpu.memory_space<vmem>>, vector<1x8x128xf32>
    %99 = vector.shape_cast %98 : vector<1x8x128xf32> to vector<8x128xf32>
    %100 = vector.shape_cast %96 : vector<8x128xf32> to vector<1x8x128xf32>
    tpu.vector_store %arg12[%97, %c0_32, %c0_33], %100 {strides = array<i32>} : memref<8x8x128xf32, #tpu.memory_space<vmem>>, vector<1x8x128xf32>,
    %c1_i32 = arith.constant 1 : i32
    %101 = vector.broadcast %c1_i32 : i32 to vector<8x1xi32>
    %102 = arith.cmpi slt, %101, %10 : vector<8x1xi32>
    %103 = arith.truncf %53 : vector<8x128xf32> to vector<8x128xbf16>
    %cst_34 = arith.constant dense<0.000000e+00> : vector<8x512xf32>
    %104 = tpu.matmul %103, %11, %cst_34 {dimension_numbers = #tpu.dot_dimension_numbers<[1], [0], [0], [1], [0, 0, 1, 1], [], []>} : vector<8x128xbf16>, vector<128x512xbf16>, vector<8x512xf32> -> vector<8x512xf32>
    %105 = arith.truncf %89 : vector<8x128xf32> to vector<8x128xbf16>
    %cst_35 = arith.constant dense<0.000000e+00> : vector<8x512xf32>
    %106 = tpu.matmul %105, %12, %cst_35 {dimension_numbers = #tpu.dot_dimension_numbers<[1], [0], [0], [1], [0, 0, 1, 1], [], []>} : vector<8x128xbf16>, vector<128x512xbf16>, vector<8x512xf32> -> vector<8x512xf32>
    %107 = arith.index_cast %c1_i32 : i32 to index
    %c0_36 = arith.constant 0 : index
    %c0_37 = arith.constant 0 : index
    %108 = vector.load %arg11[%107, %c0_36, %c0_37] : memref<8x8x512xf32, #tpu.memory_space<vmem>>, vector<1x8x512xf32>
    %109 = vector.shape_cast %108 : vector<1x8x512xf32> to vector<8x512xf32>
    %110 = arith.addf %109, %104 : vector<8x512xf32>
    %111 = vector.extract_strided_slice %110 {offsets = [0, 0], sizes = [8, 128], strides = [1, 1]} : vector<8x512xf32> to vector<8x128xf32>
    %112 = arith.negf %111 : vector<8x128xf32>
    %113 = math.exp %112 : vector<8x128xf32>
    %cst_38 = arith.constant 1.000000e+00 : f32
    %114 = vector.broadcast %cst_38 : f32 to vector<8x128xf32>
    %115 = arith.addf %114, %113 : vector<8x128xf32>
    %116 = arith.divf %114, %115 : vector<8x128xf32>
    %117 = vector.extract_strided_slice %110 {offsets = [0, 128], sizes = [8, 128], strides = [1, 1]} : vector<8x512xf32> to vector<8x128xf32>
    %118 = arith.negf %117 : vector<8x128xf32>
    %119 = math.exp %118 : vector<8x128xf32>
    %cst_39 = arith.constant 1.000000e+00 : f32
    %120 = vector.broadcast %cst_39 : f32 to vector<8x128xf32>
    %121 = arith.addf %120, %119 : vector<8x128xf32>
    %122 = arith.divf %120, %121 : vector<8x128xf32>
    %123 = vector.extract_strided_slice %110 {offsets = [0, 256], sizes = [8, 128], strides = [1, 1]} : vector<8x512xf32> to vector<8x128xf32>
    %124 = math.tanh %123 : vector<8x128xf32>
    %125 = vector.extract_strided_slice %110 {offsets = [0, 384], sizes = [8, 128], strides = [1, 1]} : vector<8x512xf32> to vector<8x128xf32>
    %126 = arith.negf %125 : vector<8x128xf32>
    %127 = math.exp %126 : vector<8x128xf32>
    %cst_40 = arith.constant 1.000000e+00 : f32
    %128 = vector.broadcast %cst_40 : f32 to vector<8x128xf32>
    %129 = arith.addf %128, %127 : vector<8x128xf32>
    %130 = arith.divf %128, %129 : vector<8x128xf32>
    %131 = arith.mulf %122, %56 : vector<8x128xf32>
    %132 = arith.mulf %116, %124 : vector<8x128xf32>
    %133 = arith.addf %131, %132 : vector<8x128xf32>
    %134 = math.tanh %133 : vector<8x128xf32>
    %135 = arith.mulf %130, %134 : vector<8x128xf32>
    %136 = vector.shape_cast %102 : vector<8x1xi1> to vector<8x1xi1>
    %137 = vector.broadcast %136 : vector<8x1xi1> to vector<8x128xi1>
    %138 = arith.select %137, %135, %53 : vector<8x128xi1>, vector<8x128xf32>
    %139 = vector.shape_cast %102 : vector<8x1xi1> to vector<8x1xi1>
    %140 = vector.broadcast %139 : vector<8x1xi1> to vector<8x128xi1>
    %141 = arith.select %140, %133, %56 : vector<8x128xi1>, vector<8x128xf32>
    %142 = arith.truncf %138 : vector<8x128xf32> to vector<8x128xbf16>
    %cst_41 = arith.constant dense<0.000000e+00> : vector<8x512xf32>
    %143 = tpu.matmul %142, %13, %cst_41 {dimension_numbers = #tpu.dot_dimension_numbers<[1], [0], [0], [1], [0, 0, 1, 1], [], []>} : vector<8x128xbf16>, vector<128x512xbf16>, vector<8x512xf32> -> vector<8x512xf32>
    %144 = arith.addf %143, %106 : vector<8x512xf32>
    %145 = vector.broadcast %14 : vector<1x512xf32> to vector<8x512xf32>
    %146 = arith.addf %144, %145 : vector<8x512xf32>
    %147 = vector.extract_strided_slice %146 {offsets = [0, 0], sizes = [8, 128], strides = [1, 1]} : vector<8x512xf32> to vector<8x128xf32>
    %148 = arith.negf %147 : vector<8x128xf32>
    %149 = math.exp %148 : vector<8x128xf32>
    %cst_42 = arith.constant 1.000000e+00 : f32
    %150 = vector.broadcast %cst_42 : f32 to vector<8x128xf32>
    %151 = arith.addf %150, %149 : vector<8x128xf32>
    %152 = arith.divf %150, %151 : vector<8x128xf32>
    %153 = vector.extract_strided_slice %146 {offsets = [0, 128], sizes = [8, 128], strides = [1, 1]} : vector<8x512xf32> to vector<8x128xf32>
    %154 = arith.negf %153 : vector<8x128xf32>
    %155 = math.exp %154 : vector<8x128xf32>
    %cst_43 = arith.constant 1.000000e+00 : f32
    %156 = vector.broadcast %cst_43 : f32 to vector<8x128xf32>
    %157 = arith.addf %156, %155 : vector<8x128xf32>
    %158 = arith.divf %156, %157 : vector<8x128xf32>
    %159 = vector.extract_strided_slice %146 {offsets = [0, 256], sizes = [8, 128], strides = [1, 1]} : vector<8x512xf32> to vector<8x128xf32>
    %160 = math.tanh %159 : vector<8x128xf32>
    %161 = vector.extract_strided_slice %146 {offsets = [0, 384], sizes = [8, 128], strides = [1, 1]} : vector<8x512xf32> to vector<8x128xf32>
    %162 = arith.negf %161 : vector<8x128xf32>
    %163 = math.exp %162 : vector<8x128xf32>
    %cst_44 = arith.constant 1.000000e+00 : f32
    %164 = vector.broadcast %cst_44 : f32 to vector<8x128xf32>
    %165 = arith.addf %164, %163 : vector<8x128xf32>
    %166 = arith.divf %164, %165 : vector<8x128xf32>
    %167 = arith.mulf %158, %92 : vector<8x128xf32>
    %168 = arith.mulf %152, %160 : vector<8x128xf32>
    %169 = arith.addf %167, %168 : vector<8x128xf32>
    %170 = math.tanh %169 : vector<8x128xf32>
    %171 = arith.mulf %166, %170 : vector<8x128xf32>
    %172 = vector.shape_cast %102 : vector<8x1xi1> to vector<8x1xi1>
    %173 = vector.broadcast %172 : vector<8x1xi1> to vector<8x128xi1>
    %174 = arith.select %173, %171, %89 : vector<8x128xi1>, vector<8x128xf32>
    %175 = vector.shape_cast %102 : vector<8x1xi1> to vector<8x1xi1>
    %176 = vector.broadcast %175 : vector<8x1xi1> to vector<8x128xi1>
    %177 = arith.select %176, %169, %92 : vector<8x128xi1>, vector<8x128xf32>
    %cst_45 = arith.constant 0.000000e+00 : f32
    %178 = vector.shape_cast %102 : vector<8x1xi1> to vector<8x1xi1>
    %179 = vector.broadcast %178 : vector<8x1xi1> to vector<8x128xi1>
    %180 = vector.broadcast %cst_45 : f32 to vector<8x128xf32>
    %181 = arith.select %179, %174, %180 : vector<8x128xi1>, vector<8x128xf32>
    %182 = arith.index_cast %c1_i32 : i32 to index
    %c0_46 = arith.constant 0 : index
    %c0_47 = arith.constant 0 : index
    %183 = vector.load %arg12[%182, %c0_46, %c0_47] : memref<8x8x128xf32, #tpu.memory_space<vmem>>, vector<1x8x128xf32>
    %184 = vector.shape_cast %183 : vector<1x8x128xf32> to vector<8x128xf32>
    %185 = vector.shape_cast %181 : vector<8x128xf32> to vector<1x8x128xf32>
    tpu.vector_store %arg12[%182, %c0_46, %c0_47], %185 {strides = array<i32>} : memref<8x8x128xf32, #tpu.memory_space<vmem>>, vector<1x8x128xf32>,
    %c2_i32 = arith.constant 2 : i32
    %186 = vector.broadcast %c2_i32 : i32 to vector<8x1xi32>
    %187 = arith.cmpi slt, %186, %10 : vector<8x1xi32>
    %188 = arith.truncf %138 : vector<8x128xf32> to vector<8x128xbf16>
    %cst_48 = arith.constant dense<0.000000e+00> : vector<8x512xf32>
    %189 = tpu.matmul %188, %11, %cst_48 {dimension_numbers = #tpu.dot_dimension_numbers<[1], [0], [0], [1], [0, 0, 1, 1], [], []>} : vector<8x128xbf16>, vector<128x512xbf16>, vector<8x512xf32> -> vector<8x512xf32>
    %190 = arith.truncf %174 : vector<8x128xf32> to vector<8x128xbf16>
    %cst_49 = arith.constant dense<0.000000e+00> : vector<8x512xf32>
    %191 = tpu.matmul %190, %12, %cst_49 {dimension_numbers = #tpu.dot_dimension_numbers<[1], [0], [0], [1], [0, 0, 1, 1], [], []>} : vector<8x128xbf16>, vector<128x512xbf16>, vector<8x512xf32> -> vector<8x512xf32>
    %192 = arith.index_cast %c2_i32 : i32 to index
    %c0_50 = arith.constant 0 : index
    %c0_51 = arith.constant 0 : index
    %193 = vector.load %arg11[%192, %c0_50, %c0_51] : memref<8x8x512xf32, #tpu.memory_space<vmem>>, vector<1x8x512xf32>
    %194 = vector.shape_cast %193 : vector<1x8x512xf32> to vector<8x512xf32>
    %195 = arith.addf %194, %189 : vector<8x512xf32>
    %196 = vector.extract_strided_slice %195 {offsets = [0, 0], sizes = [8, 128], strides = [1, 1]} : vector<8x512xf32> to vector<8x128xf32>
    %197 = arith.negf %196 : vector<8x128xf32>
    %198 = math.exp %197 : vector<8x128xf32>
    %cst_52 = arith.constant 1.000000e+00 : f32
    %199 = vector.broadcast %cst_52 : f32 to vector<8x128xf32>
    %200 = arith.addf %199, %198 : vector<8x128xf32>
    %201 = arith.divf %199, %200 : vector<8x128xf32>
    %202 = vector.extract_strided_slice %195 {offsets = [0, 128], sizes = [8, 128], strides = [1, 1]} : vector<8x512xf32> to vector<8x128xf32>
    %203 = arith.negf %202 : vector<8x128xf32>
    %204 = math.exp %203 : vector<8x128xf32>
    %cst_53 = arith.constant 1.000000e+00 : f32
    %205 = vector.broadcast %cst_53 : f32 to vector<8x128xf32>
    %206 = arith.addf %205, %204 : vector<8x128xf32>
    %207 = arith.divf %205, %206 : vector<8x128xf32>
    %208 = vector.extract_strided_slice %195 {offsets = [0, 256], sizes = [8, 128], strides = [1, 1]} : vector<8x512xf32> to vector<8x128xf32>
    %209 = math.tanh %208 : vector<8x128xf32>
    %210 = vector.extract_strided_slice %195 {offsets = [0, 384], sizes = [8, 128], strides = [1, 1]} : vector<8x512xf32> to vector<8x128xf32>
    %211 = arith.negf %210 : vector<8x128xf32>
    %212 = math.exp %211 : vector<8x128xf32>
    %cst_54 = arith.constant 1.000000e+00 : f32
    %213 = vector.broadcast %cst_54 : f32 to vector<8x128xf32>
    %214 = arith.addf %213, %212 : vector<8x128xf32>
    %215 = arith.divf %213, %214 : vector<8x128xf32>
    %216 = arith.mulf %207, %141 : vector<8x128xf32>
    %217 = arith.mulf %201, %209 : vector<8x128xf32>
    %218 = arith.addf %216, %217 : vector<8x128xf32>
    %219 = math.tanh %218 : vector<8x128xf32>
    %220 = arith.mulf %215, %219 : vector<8x128xf32>
    %221 = vector.shape_cast %187 : vector<8x1xi1> to vector<8x1xi1>
    %222 = vector.broadcast %221 : vector<8x1xi1> to vector<8x128xi1>
    %223 = arith.select %222, %220, %138 : vector<8x128xi1>, vector<8x128xf32>
    %224 = vector.shape_cast %187 : vector<8x1xi1> to vector<8x1xi1>
    %225 = vector.broadcast %224 : vector<8x1xi1> to vector<8x128xi1>
    %226 = arith.select %225, %218, %141 : vector<8x128xi1>, vector<8x128xf32>
    %227 = arith.truncf %223 : vector<8x128xf32> to vector<8x128xbf16>
    %cst_55 = arith.constant dense<0.000000e+00> : vector<8x512xf32>
    %228 = tpu.matmul %227, %13, %cst_55 {dimension_numbers = #tpu.dot_dimension_numbers<[1], [0], [0], [1], [0, 0, 1, 1], [], []>} : vector<8x128xbf16>, vector<128x512xbf16>, vector<8x512xf32> -> vector<8x512xf32>
    %229 = arith.addf %228, %191 : vector<8x512xf32>
    %230 = vector.broadcast %14 : vector<1x512xf32> to vector<8x512xf32>
    %231 = arith.addf %229, %230 : vector<8x512xf32>
    %232 = vector.extract_strided_slice %231 {offsets = [0, 0], sizes = [8, 128], strides = [1, 1]} : vector<8x512xf32> to vector<8x128xf32>
    %233 = arith.negf %232 : vector<8x128xf32>
    %234 = math.exp %233 : vector<8x128xf32>
    %cst_56 = arith.constant 1.000000e+00 : f32
    %235 = vector.broadcast %cst_56 : f32 to vector<8x128xf32>
    %236 = arith.addf %235, %234 : vector<8x128xf32>
    %237 = arith.divf %235, %236 : vector<8x128xf32>
    %238 = vector.extract_strided_slice %231 {offsets = [0, 128], sizes = [8, 128], strides = [1, 1]} : vector<8x512xf32> to vector<8x128xf32>
    %239 = arith.negf %238 : vector<8x128xf32>
    %240 = math.exp %239 : vector<8x128xf32>
    %cst_57 = arith.constant 1.000000e+00 : f32
    %241 = vector.broadcast %cst_57 : f32 to vector<8x128xf32>
    %242 = arith.addf %241, %240 : vector<8x128xf32>
    %243 = arith.divf %241, %242 : vector<8x128xf32>
    %244 = vector.extract_strided_slice %231 {offsets = [0, 256], sizes = [8, 128], strides = [1, 1]} : vector<8x512xf32> to vector<8x128xf32>
    %245 = math.tanh %244 : vector<8x128xf32>
    %246 = vector.extract_strided_slice %231 {offsets = [0, 384], sizes = [8, 128], strides = [1, 1]} : vector<8x512xf32> to vector<8x128xf32>
    %247 = arith.negf %246 : vector<8x128xf32>
    %248 = math.exp %247 : vector<8x128xf32>
    %cst_58 = arith.constant 1.000000e+00 : f32
    %249 = vector.broadcast %cst_58 : f32 to vector<8x128xf32>
    %250 = arith.addf %249, %248 : vector<8x128xf32>
    %251 = arith.divf %249, %250 : vector<8x128xf32>
    %252 = arith.mulf %243, %177 : vector<8x128xf32>
    %253 = arith.mulf %237, %245 : vector<8x128xf32>
    %254 = arith.addf %252, %253 : vector<8x128xf32>
    %255 = math.tanh %254 : vector<8x128xf32>
    %256 = arith.mulf %251, %255 : vector<8x128xf32>
    %257 = vector.shape_cast %187 : vector<8x1xi1> to vector<8x1xi1>
    %258 = vector.broadcast %257 : vector<8x1xi1> to vector<8x128xi1>
    %259 = arith.select %258, %256, %174 : vector<8x128xi1>, vector<8x128xf32>
    %260 = vector.shape_cast %187 : vector<8x1xi1> to vector<8x1xi1>
    %261 = vector.broadcast %260 : vector<8x1xi1> to vector<8x128xi1>
    %262 = arith.select %261, %254, %177 : vector<8x128xi1>, vector<8x128xf32>
    %cst_59 = arith.constant 0.000000e+00 : f32
    %263 = vector.shape_cast %187 : vector<8x1xi1> to vector<8x1xi1>
    %264 = vector.broadcast %263 : vector<8x1xi1> to vector<8x128xi1>
    %265 = vector.broadcast %cst_59 : f32 to vector<8x128xf32>
    %266 = arith.select %264, %259, %265 : vector<8x128xi1>, vector<8x128xf32>
    %267 = arith.index_cast %c2_i32 : i32 to index
    %c0_60 = arith.constant 0 : index
    %c0_61 = arith.constant 0 : index
    %268 = vector.load %arg12[%267, %c0_60, %c0_61] : memref<8x8x128xf32, #tpu.memory_space<vmem>>, vector<1x8x128xf32>
    %269 = vector.shape_cast %268 : vector<1x8x128xf32> to vector<8x128xf32>
    %270 = vector.shape_cast %266 : vector<8x128xf32> to vector<1x8x128xf32>
    tpu.vector_store %arg12[%267, %c0_60, %c0_61], %270 {strides = array<i32>} : memref<8x8x128xf32, #tpu.memory_space<vmem>>, vector<1x8x128xf32>,
    %c3_i32 = arith.constant 3 : i32
    %271 = vector.broadcast %c3_i32 : i32 to vector<8x1xi32>
    %272 = arith.cmpi slt, %271, %10 : vector<8x1xi32>
    %273 = arith.truncf %223 : vector<8x128xf32> to vector<8x128xbf16>
    %cst_62 = arith.constant dense<0.000000e+00> : vector<8x512xf32>
    %274 = tpu.matmul %273, %11, %cst_62 {dimension_numbers = #tpu.dot_dimension_numbers<[1], [0], [0], [1], [0, 0, 1, 1], [], []>} : vector<8x128xbf16>, vector<128x512xbf16>, vector<8x512xf32> -> vector<8x512xf32>
    %275 = arith.truncf %259 : vector<8x128xf32> to vector<8x128xbf16>
    %cst_63 = arith.constant dense<0.000000e+00> : vector<8x512xf32>
    %276 = tpu.matmul %275, %12, %cst_63 {dimension_numbers = #tpu.dot_dimension_numbers<[1], [0], [0], [1], [0, 0, 1, 1], [], []>} : vector<8x128xbf16>, vector<128x512xbf16>, vector<8x512xf32> -> vector<8x512xf32>
    %277 = arith.index_cast %c3_i32 : i32 to index
    %c0_64 = arith.constant 0 : index
    %c0_65 = arith.constant 0 : index
    %278 = vector.load %arg11[%277, %c0_64, %c0_65] : memref<8x8x512xf32, #tpu.memory_space<vmem>>, vector<1x8x512xf32>
    %279 = vector.shape_cast %278 : vector<1x8x512xf32> to vector<8x512xf32>
    %280 = arith.addf %279, %274 : vector<8x512xf32>
    %281 = vector.extract_strided_slice %280 {offsets = [0, 0], sizes = [8, 128], strides = [1, 1]} : vector<8x512xf32> to vector<8x128xf32>
    %282 = arith.negf %281 : vector<8x128xf32>
    %283 = math.exp %282 : vector<8x128xf32>
    %cst_66 = arith.constant 1.000000e+00 : f32
    %284 = vector.broadcast %cst_66 : f32 to vector<8x128xf32>
    %285 = arith.addf %284, %283 : vector<8x128xf32>
    %286 = arith.divf %284, %285 : vector<8x128xf32>
    %287 = vector.extract_strided_slice %280 {offsets = [0, 128], sizes = [8, 128], strides = [1, 1]} : vector<8x512xf32> to vector<8x128xf32>
    %288 = arith.negf %287 : vector<8x128xf32>
    %289 = math.exp %288 : vector<8x128xf32>
    %cst_67 = arith.constant 1.000000e+00 : f32
    %290 = vector.broadcast %cst_67 : f32 to vector<8x128xf32>
    %291 = arith.addf %290, %289 : vector<8x128xf32>
    %292 = arith.divf %290, %291 : vector<8x128xf32>
    %293 = vector.extract_strided_slice %280 {offsets = [0, 256], sizes = [8, 128], strides = [1, 1]} : vector<8x512xf32> to vector<8x128xf32>
    %294 = math.tanh %293 : vector<8x128xf32>
    %295 = vector.extract_strided_slice %280 {offsets = [0, 384], sizes = [8, 128], strides = [1, 1]} : vector<8x512xf32> to vector<8x128xf32>
    %296 = arith.negf %295 : vector<8x128xf32>
    %297 = math.exp %296 : vector<8x128xf32>
    %cst_68 = arith.constant 1.000000e+00 : f32
    %298 = vector.broadcast %cst_68 : f32 to vector<8x128xf32>
    %299 = arith.addf %298, %297 : vector<8x128xf32>
    %300 = arith.divf %298, %299 : vector<8x128xf32>
    %301 = arith.mulf %292, %226 : vector<8x128xf32>
    %302 = arith.mulf %286, %294 : vector<8x128xf32>
    %303 = arith.addf %301, %302 : vector<8x128xf32>
    %304 = math.tanh %303 : vector<8x128xf32>
    %305 = arith.mulf %300, %304 : vector<8x128xf32>
    %306 = vector.shape_cast %272 : vector<8x1xi1> to vector<8x1xi1>
    %307 = vector.broadcast %306 : vector<8x1xi1> to vector<8x128xi1>
    %308 = arith.select %307, %305, %223 : vector<8x128xi1>, vector<8x128xf32>
    %309 = vector.shape_cast %272 : vector<8x1xi1> to vector<8x1xi1>
    %310 = vector.broadcast %309 : vector<8x1xi1> to vector<8x128xi1>
    %311 = arith.select %310, %303, %226 : vector<8x128xi1>, vector<8x128xf32>
    %312 = arith.truncf %308 : vector<8x128xf32> to vector<8x128xbf16>
    %cst_69 = arith.constant dense<0.000000e+00> : vector<8x512xf32>
    %313 = tpu.matmul %312, %13, %cst_69 {dimension_numbers = #tpu.dot_dimension_numbers<[1], [0], [0], [1], [0, 0, 1, 1], [], []>} : vector<8x128xbf16>, vector<128x512xbf16>, vector<8x512xf32> -> vector<8x512xf32>
    %314 = arith.addf %313, %276 : vector<8x512xf32>
    %315 = vector.broadcast %14 : vector<1x512xf32> to vector<8x512xf32>
    %316 = arith.addf %314, %315 : vector<8x512xf32>
    %317 = vector.extract_strided_slice %316 {offsets = [0, 0], sizes = [8, 128], strides = [1, 1]} : vector<8x512xf32> to vector<8x128xf32>
    %318 = arith.negf %317 : vector<8x128xf32>
    %319 = math.exp %318 : vector<8x128xf32>
    %cst_70 = arith.constant 1.000000e+00 : f32
    %320 = vector.broadcast %cst_70 : f32 to vector<8x128xf32>
    %321 = arith.addf %320, %319 : vector<8x128xf32>
    %322 = arith.divf %320, %321 : vector<8x128xf32>
    %323 = vector.extract_strided_slice %316 {offsets = [0, 128], sizes = [8, 128], strides = [1, 1]} : vector<8x512xf32> to vector<8x128xf32>
    %324 = arith.negf %323 : vector<8x128xf32>
    %325 = math.exp %324 : vector<8x128xf32>
    %cst_71 = arith.constant 1.000000e+00 : f32
    %326 = vector.broadcast %cst_71 : f32 to vector<8x128xf32>
    %327 = arith.addf %326, %325 : vector<8x128xf32>
    %328 = arith.divf %326, %327 : vector<8x128xf32>
    %329 = vector.extract_strided_slice %316 {offsets = [0, 256], sizes = [8, 128], strides = [1, 1]} : vector<8x512xf32> to vector<8x128xf32>
    %330 = math.tanh %329 : vector<8x128xf32>
    %331 = vector.extract_strided_slice %316 {offsets = [0, 384], sizes = [8, 128], strides = [1, 1]} : vector<8x512xf32> to vector<8x128xf32>
    %332 = arith.negf %331 : vector<8x128xf32>
    %333 = math.exp %332 : vector<8x128xf32>
    %cst_72 = arith.constant 1.000000e+00 : f32
    %334 = vector.broadcast %cst_72 : f32 to vector<8x128xf32>
    %335 = arith.addf %334, %333 : vector<8x128xf32>
    %336 = arith.divf %334, %335 : vector<8x128xf32>
    %337 = arith.mulf %328, %262 : vector<8x128xf32>
    %338 = arith.mulf %322, %330 : vector<8x128xf32>
    %339 = arith.addf %337, %338 : vector<8x128xf32>
    %340 = math.tanh %339 : vector<8x128xf32>
    %341 = arith.mulf %336, %340 : vector<8x128xf32>
    %342 = vector.shape_cast %272 : vector<8x1xi1> to vector<8x1xi1>
    %343 = vector.broadcast %342 : vector<8x1xi1> to vector<8x128xi1>
    %344 = arith.select %343, %341, %259 : vector<8x128xi1>, vector<8x128xf32>
    %345 = vector.shape_cast %272 : vector<8x1xi1> to vector<8x1xi1>
    %346 = vector.broadcast %345 : vector<8x1xi1> to vector<8x128xi1>
    %347 = arith.select %346, %339, %262 : vector<8x128xi1>, vector<8x128xf32>
    %cst_73 = arith.constant 0.000000e+00 : f32
    %348 = vector.shape_cast %272 : vector<8x1xi1> to vector<8x1xi1>
    %349 = vector.broadcast %348 : vector<8x1xi1> to vector<8x128xi1>
    %350 = vector.broadcast %cst_73 : f32 to vector<8x128xf32>
    %351 = arith.select %349, %344, %350 : vector<8x128xi1>, vector<8x128xf32>
    %352 = arith.index_cast %c3_i32 : i32 to index
    %c0_74 = arith.constant 0 : index
    %c0_75 = arith.constant 0 : index
    %353 = vector.load %arg12[%352, %c0_74, %c0_75] : memref<8x8x128xf32, #tpu.memory_space<vmem>>, vector<1x8x128xf32>
    %354 = vector.shape_cast %353 : vector<1x8x128xf32> to vector<8x128xf32>
    %355 = vector.shape_cast %351 : vector<8x128xf32> to vector<1x8x128xf32>
    tpu.vector_store %arg12[%352, %c0_74, %c0_75], %355 {strides = array<i32>} : memref<8x8x128xf32, #tpu.memory_space<vmem>>, vector<1x8x128xf32>,
    %c4_i32 = arith.constant 4 : i32
    %356 = vector.broadcast %c4_i32 : i32 to vector<8x1xi32>
    %357 = arith.cmpi slt, %356, %10 : vector<8x1xi32>
    %358 = arith.truncf %308 : vector<8x128xf32> to vector<8x128xbf16>
    %cst_76 = arith.constant dense<0.000000e+00> : vector<8x512xf32>
    %359 = tpu.matmul %358, %11, %cst_76 {dimension_numbers = #tpu.dot_dimension_numbers<[1], [0], [0], [1], [0, 0, 1, 1], [], []>} : vector<8x128xbf16>, vector<128x512xbf16>, vector<8x512xf32> -> vector<8x512xf32>
    %360 = arith.truncf %344 : vector<8x128xf32> to vector<8x128xbf16>
    %cst_77 = arith.constant dense<0.000000e+00> : vector<8x512xf32>
    %361 = tpu.matmul %360, %12, %cst_77 {dimension_numbers = #tpu.dot_dimension_numbers<[1], [0], [0], [1], [0, 0, 1, 1], [], []>} : vector<8x128xbf16>, vector<128x512xbf16>, vector<8x512xf32> -> vector<8x512xf32>
    %362 = arith.index_cast %c4_i32 : i32 to index
    %c0_78 = arith.constant 0 : index
    %c0_79 = arith.constant 0 : index
    %363 = vector.load %arg11[%362, %c0_78, %c0_79] : memref<8x8x512xf32, #tpu.memory_space<vmem>>, vector<1x8x512xf32>
    %364 = vector.shape_cast %363 : vector<1x8x512xf32> to vector<8x512xf32>
    %365 = arith.addf %364, %359 : vector<8x512xf32>
    %366 = vector.extract_strided_slice %365 {offsets = [0, 0], sizes = [8, 128], strides = [1, 1]} : vector<8x512xf32> to vector<8x128xf32>
    %367 = arith.negf %366 : vector<8x128xf32>
    %368 = math.exp %367 : vector<8x128xf32>
    %cst_80 = arith.constant 1.000000e+00 : f32
    %369 = vector.broadcast %cst_80 : f32 to vector<8x128xf32>
    %370 = arith.addf %369, %368 : vector<8x128xf32>
    %371 = arith.divf %369, %370 : vector<8x128xf32>
    %372 = vector.extract_strided_slice %365 {offsets = [0, 128], sizes = [8, 128], strides = [1, 1]} : vector<8x512xf32> to vector<8x128xf32>
    %373 = arith.negf %372 : vector<8x128xf32>
    %374 = math.exp %373 : vector<8x128xf32>
    %cst_81 = arith.constant 1.000000e+00 : f32
    %375 = vector.broadcast %cst_81 : f32 to vector<8x128xf32>
    %376 = arith.addf %375, %374 : vector<8x128xf32>
    %377 = arith.divf %375, %376 : vector<8x128xf32>
    %378 = vector.extract_strided_slice %365 {offsets = [0, 256], sizes = [8, 128], strides = [1, 1]} : vector<8x512xf32> to vector<8x128xf32>
    %379 = math.tanh %378 : vector<8x128xf32>
    %380 = vector.extract_strided_slice %365 {offsets = [0, 384], sizes = [8, 128], strides = [1, 1]} : vector<8x512xf32> to vector<8x128xf32>
    %381 = arith.negf %380 : vector<8x128xf32>
    %382 = math.exp %381 : vector<8x128xf32>
    %cst_82 = arith.constant 1.000000e+00 : f32
    %383 = vector.broadcast %cst_82 : f32 to vector<8x128xf32>
    %384 = arith.addf %383, %382 : vector<8x128xf32>
    %385 = arith.divf %383, %384 : vector<8x128xf32>
    %386 = arith.mulf %377, %311 : vector<8x128xf32>
    %387 = arith.mulf %371, %379 : vector<8x128xf32>
    %388 = arith.addf %386, %387 : vector<8x128xf32>
    %389 = math.tanh %388 : vector<8x128xf32>
    %390 = arith.mulf %385, %389 : vector<8x128xf32>
    %391 = vector.shape_cast %357 : vector<8x1xi1> to vector<8x1xi1>
    %392 = vector.broadcast %391 : vector<8x1xi1> to vector<8x128xi1>
    %393 = arith.select %392, %390, %308 : vector<8x128xi1>, vector<8x128xf32>
    %394 = vector.shape_cast %357 : vector<8x1xi1> to vector<8x1xi1>
    %395 = vector.broadcast %394 : vector<8x1xi1> to vector<8x128xi1>
    %396 = arith.select %395, %388, %311 : vector<8x128xi1>, vector<8x128xf32>
    %397 = arith.truncf %393 : vector<8x128xf32> to vector<8x128xbf16>
    %cst_83 = arith.constant dense<0.000000e+00> : vector<8x512xf32>
    %398 = tpu.matmul %397, %13, %cst_83 {dimension_numbers = #tpu.dot_dimension_numbers<[1], [0], [0], [1], [0, 0, 1, 1], [], []>} : vector<8x128xbf16>, vector<128x512xbf16>, vector<8x512xf32> -> vector<8x512xf32>
    %399 = arith.addf %398, %361 : vector<8x512xf32>
    %400 = vector.broadcast %14 : vector<1x512xf32> to vector<8x512xf32>
    %401 = arith.addf %399, %400 : vector<8x512xf32>
    %402 = vector.extract_strided_slice %401 {offsets = [0, 0], sizes = [8, 128], strides = [1, 1]} : vector<8x512xf32> to vector<8x128xf32>
    %403 = arith.negf %402 : vector<8x128xf32>
    %404 = math.exp %403 : vector<8x128xf32>
    %cst_84 = arith.constant 1.000000e+00 : f32
    %405 = vector.broadcast %cst_84 : f32 to vector<8x128xf32>
    %406 = arith.addf %405, %404 : vector<8x128xf32>
    %407 = arith.divf %405, %406 : vector<8x128xf32>
    %408 = vector.extract_strided_slice %401 {offsets = [0, 128], sizes = [8, 128], strides = [1, 1]} : vector<8x512xf32> to vector<8x128xf32>
    %409 = arith.negf %408 : vector<8x128xf32>
    %410 = math.exp %409 : vector<8x128xf32>
    %cst_85 = arith.constant 1.000000e+00 : f32
    %411 = vector.broadcast %cst_85 : f32 to vector<8x128xf32>
    %412 = arith.addf %411, %410 : vector<8x128xf32>
    %413 = arith.divf %411, %412 : vector<8x128xf32>
    %414 = vector.extract_strided_slice %401 {offsets = [0, 256], sizes = [8, 128], strides = [1, 1]} : vector<8x512xf32> to vector<8x128xf32>
    %415 = math.tanh %414 : vector<8x128xf32>
    %416 = vector.extract_strided_slice %401 {offsets = [0, 384], sizes = [8, 128], strides = [1, 1]} : vector<8x512xf32> to vector<8x128xf32>
    %417 = arith.negf %416 : vector<8x128xf32>
    %418 = math.exp %417 : vector<8x128xf32>
    %cst_86 = arith.constant 1.000000e+00 : f32
    %419 = vector.broadcast %cst_86 : f32 to vector<8x128xf32>
    %420 = arith.addf %419, %418 : vector<8x128xf32>
    %421 = arith.divf %419, %420 : vector<8x128xf32>
    %422 = arith.mulf %413, %347 : vector<8x128xf32>
    %423 = arith.mulf %407, %415 : vector<8x128xf32>
    %424 = arith.addf %422, %423 : vector<8x128xf32>
    %425 = math.tanh %424 : vector<8x128xf32>
    %426 = arith.mulf %421, %425 : vector<8x128xf32>
    %427 = vector.shape_cast %357 : vector<8x1xi1> to vector<8x1xi1>
    %428 = vector.broadcast %427 : vector<8x1xi1> to vector<8x128xi1>
    %429 = arith.select %428, %426, %344 : vector<8x128xi1>, vector<8x128xf32>
    %430 = vector.shape_cast %357 : vector<8x1xi1> to vector<8x1xi1>
    %431 = vector.broadcast %430 : vector<8x1xi1> to vector<8x128xi1>
    %432 = arith.select %431, %424, %347 : vector<8x128xi1>, vector<8x128xf32>
    %cst_87 = arith.constant 0.000000e+00 : f32
    %433 = vector.shape_cast %357 : vector<8x1xi1> to vector<8x1xi1>
    %434 = vector.broadcast %433 : vector<8x1xi1> to vector<8x128xi1>
    %435 = vector.broadcast %cst_87 : f32 to vector<8x128xf32>
    %436 = arith.select %434, %429, %435 : vector<8x128xi1>, vector<8x128xf32>
    %437 = arith.index_cast %c4_i32 : i32 to index
    %c0_88 = arith.constant 0 : index
    %c0_89 = arith.constant 0 : index
    %438 = vector.load %arg12[%437, %c0_88, %c0_89] : memref<8x8x128xf32, #tpu.memory_space<vmem>>, vector<1x8x128xf32>
    %439 = vector.shape_cast %438 : vector<1x8x128xf32> to vector<8x128xf32>
    %440 = vector.shape_cast %436 : vector<8x128xf32> to vector<1x8x128xf32>
    tpu.vector_store %arg12[%437, %c0_88, %c0_89], %440 {strides = array<i32>} : memref<8x8x128xf32, #tpu.memory_space<vmem>>, vector<1x8x128xf32>,
    %c5_i32 = arith.constant 5 : i32
    %441 = vector.broadcast %c5_i32 : i32 to vector<8x1xi32>
    %442 = arith.cmpi slt, %441, %10 : vector<8x1xi32>
    %443 = arith.truncf %393 : vector<8x128xf32> to vector<8x128xbf16>
    %cst_90 = arith.constant dense<0.000000e+00> : vector<8x512xf32>
    %444 = tpu.matmul %443, %11, %cst_90 {dimension_numbers = #tpu.dot_dimension_numbers<[1], [0], [0], [1], [0, 0, 1, 1], [], []>} : vector<8x128xbf16>, vector<128x512xbf16>, vector<8x512xf32> -> vector<8x512xf32>
    %445 = arith.truncf %429 : vector<8x128xf32> to vector<8x128xbf16>
    %cst_91 = arith.constant dense<0.000000e+00> : vector<8x512xf32>
    %446 = tpu.matmul %445, %12, %cst_91 {dimension_numbers = #tpu.dot_dimension_numbers<[1], [0], [0], [1], [0, 0, 1, 1], [], []>} : vector<8x128xbf16>, vector<128x512xbf16>, vector<8x512xf32> -> vector<8x512xf32>
    %447 = arith.index_cast %c5_i32 : i32 to index
    %c0_92 = arith.constant 0 : index
    %c0_93 = arith.constant 0 : index
    %448 = vector.load %arg11[%447, %c0_92, %c0_93] : memref<8x8x512xf32, #tpu.memory_space<vmem>>, vector<1x8x512xf32>
    %449 = vector.shape_cast %448 : vector<1x8x512xf32> to vector<8x512xf32>
    %450 = arith.addf %449, %444 : vector<8x512xf32>
    %451 = vector.extract_strided_slice %450 {offsets = [0, 0], sizes = [8, 128], strides = [1, 1]} : vector<8x512xf32> to vector<8x128xf32>
    %452 = arith.negf %451 : vector<8x128xf32>
    %453 = math.exp %452 : vector<8x128xf32>
    %cst_94 = arith.constant 1.000000e+00 : f32
    %454 = vector.broadcast %cst_94 : f32 to vector<8x128xf32>
    %455 = arith.addf %454, %453 : vector<8x128xf32>
    %456 = arith.divf %454, %455 : vector<8x128xf32>
    %457 = vector.extract_strided_slice %450 {offsets = [0, 128], sizes = [8, 128], strides = [1, 1]} : vector<8x512xf32> to vector<8x128xf32>
    %458 = arith.negf %457 : vector<8x128xf32>
    %459 = math.exp %458 : vector<8x128xf32>
    %cst_95 = arith.constant 1.000000e+00 : f32
    %460 = vector.broadcast %cst_95 : f32 to vector<8x128xf32>
    %461 = arith.addf %460, %459 : vector<8x128xf32>
    %462 = arith.divf %460, %461 : vector<8x128xf32>
    %463 = vector.extract_strided_slice %450 {offsets = [0, 256], sizes = [8, 128], strides = [1, 1]} : vector<8x512xf32> to vector<8x128xf32>
    %464 = math.tanh %463 : vector<8x128xf32>
    %465 = vector.extract_strided_slice %450 {offsets = [0, 384], sizes = [8, 128], strides = [1, 1]} : vector<8x512xf32> to vector<8x128xf32>
    %466 = arith.negf %465 : vector<8x128xf32>
    %467 = math.exp %466 : vector<8x128xf32>
    %cst_96 = arith.constant 1.000000e+00 : f32
    %468 = vector.broadcast %cst_96 : f32 to vector<8x128xf32>
    %469 = arith.addf %468, %467 : vector<8x128xf32>
    %470 = arith.divf %468, %469 : vector<8x128xf32>
    %471 = arith.mulf %462, %396 : vector<8x128xf32>
    %472 = arith.mulf %456, %464 : vector<8x128xf32>
    %473 = arith.addf %471, %472 : vector<8x128xf32>
    %474 = math.tanh %473 : vector<8x128xf32>
    %475 = arith.mulf %470, %474 : vector<8x128xf32>
    %476 = vector.shape_cast %442 : vector<8x1xi1> to vector<8x1xi1>
    %477 = vector.broadcast %476 : vector<8x1xi1> to vector<8x128xi1>
    %478 = arith.select %477, %475, %393 : vector<8x128xi1>, vector<8x128xf32>
    %479 = vector.shape_cast %442 : vector<8x1xi1> to vector<8x1xi1>
    %480 = vector.broadcast %479 : vector<8x1xi1> to vector<8x128xi1>
    %481 = arith.select %480, %473, %396 : vector<8x128xi1>, vector<8x128xf32>
    %482 = arith.truncf %478 : vector<8x128xf32> to vector<8x128xbf16>
    %cst_97 = arith.constant dense<0.000000e+00> : vector<8x512xf32>
    %483 = tpu.matmul %482, %13, %cst_97 {dimension_numbers = #tpu.dot_dimension_numbers<[1], [0], [0], [1], [0, 0, 1, 1], [], []>} : vector<8x128xbf16>, vector<128x512xbf16>, vector<8x512xf32> -> vector<8x512xf32>
    %484 = arith.addf %483, %446 : vector<8x512xf32>
    %485 = vector.broadcast %14 : vector<1x512xf32> to vector<8x512xf32>
    %486 = arith.addf %484, %485 : vector<8x512xf32>
    %487 = vector.extract_strided_slice %486 {offsets = [0, 0], sizes = [8, 128], strides = [1, 1]} : vector<8x512xf32> to vector<8x128xf32>
    %488 = arith.negf %487 : vector<8x128xf32>
    %489 = math.exp %488 : vector<8x128xf32>
    %cst_98 = arith.constant 1.000000e+00 : f32
    %490 = vector.broadcast %cst_98 : f32 to vector<8x128xf32>
    %491 = arith.addf %490, %489 : vector<8x128xf32>
    %492 = arith.divf %490, %491 : vector<8x128xf32>
    %493 = vector.extract_strided_slice %486 {offsets = [0, 128], sizes = [8, 128], strides = [1, 1]} : vector<8x512xf32> to vector<8x128xf32>
    %494 = arith.negf %493 : vector<8x128xf32>
    %495 = math.exp %494 : vector<8x128xf32>
    %cst_99 = arith.constant 1.000000e+00 : f32
    %496 = vector.broadcast %cst_99 : f32 to vector<8x128xf32>
    %497 = arith.addf %496, %495 : vector<8x128xf32>
    %498 = arith.divf %496, %497 : vector<8x128xf32>
    %499 = vector.extract_strided_slice %486 {offsets = [0, 256], sizes = [8, 128], strides = [1, 1]} : vector<8x512xf32> to vector<8x128xf32>
    %500 = math.tanh %499 : vector<8x128xf32>
    %501 = vector.extract_strided_slice %486 {offsets = [0, 384], sizes = [8, 128], strides = [1, 1]} : vector<8x512xf32> to vector<8x128xf32>
    %502 = arith.negf %501 : vector<8x128xf32>
    %503 = math.exp %502 : vector<8x128xf32>
    %cst_100 = arith.constant 1.000000e+00 : f32
    %504 = vector.broadcast %cst_100 : f32 to vector<8x128xf32>
    %505 = arith.addf %504, %503 : vector<8x128xf32>
    %506 = arith.divf %504, %505 : vector<8x128xf32>
    %507 = arith.mulf %498, %432 : vector<8x128xf32>
    %508 = arith.mulf %492, %500 : vector<8x128xf32>
    %509 = arith.addf %507, %508 : vector<8x128xf32>
    %510 = math.tanh %509 : vector<8x128xf32>
    %511 = arith.mulf %506, %510 : vector<8x128xf32>
    %512 = vector.shape_cast %442 : vector<8x1xi1> to vector<8x1xi1>
    %513 = vector.broadcast %512 : vector<8x1xi1> to vector<8x128xi1>
    %514 = arith.select %513, %511, %429 : vector<8x128xi1>, vector<8x128xf32>
    %515 = vector.shape_cast %442 : vector<8x1xi1> to vector<8x1xi1>
    %516 = vector.broadcast %515 : vector<8x1xi1> to vector<8x128xi1>
    %517 = arith.select %516, %509, %432 : vector<8x128xi1>, vector<8x128xf32>
    %cst_101 = arith.constant 0.000000e+00 : f32
    %518 = vector.shape_cast %442 : vector<8x1xi1> to vector<8x1xi1>
    %519 = vector.broadcast %518 : vector<8x1xi1> to vector<8x128xi1>
    %520 = vector.broadcast %cst_101 : f32 to vector<8x128xf32>
    %521 = arith.select %519, %514, %520 : vector<8x128xi1>, vector<8x128xf32>
    %522 = arith.index_cast %c5_i32 : i32 to index
    %c0_102 = arith.constant 0 : index
    %c0_103 = arith.constant 0 : index
    %523 = vector.load %arg12[%522, %c0_102, %c0_103] : memref<8x8x128xf32, #tpu.memory_space<vmem>>, vector<1x8x128xf32>
    %524 = vector.shape_cast %523 : vector<1x8x128xf32> to vector<8x128xf32>
    %525 = vector.shape_cast %521 : vector<8x128xf32> to vector<1x8x128xf32>
    tpu.vector_store %arg12[%522, %c0_102, %c0_103], %525 {strides = array<i32>} : memref<8x8x128xf32, #tpu.memory_space<vmem>>, vector<1x8x128xf32>,
    %c6_i32 = arith.constant 6 : i32
    %526 = vector.broadcast %c6_i32 : i32 to vector<8x1xi32>
    %527 = arith.cmpi slt, %526, %10 : vector<8x1xi32>
    %528 = arith.truncf %478 : vector<8x128xf32> to vector<8x128xbf16>
    %cst_104 = arith.constant dense<0.000000e+00> : vector<8x512xf32>
    %529 = tpu.matmul %528, %11, %cst_104 {dimension_numbers = #tpu.dot_dimension_numbers<[1], [0], [0], [1], [0, 0, 1, 1], [], []>} : vector<8x128xbf16>, vector<128x512xbf16>, vector<8x512xf32> -> vector<8x512xf32>
    %530 = arith.truncf %514 : vector<8x128xf32> to vector<8x128xbf16>
    %cst_105 = arith.constant dense<0.000000e+00> : vector<8x512xf32>
    %531 = tpu.matmul %530, %12, %cst_105 {dimension_numbers = #tpu.dot_dimension_numbers<[1], [0], [0], [1], [0, 0, 1, 1], [], []>} : vector<8x128xbf16>, vector<128x512xbf16>, vector<8x512xf32> -> vector<8x512xf32>
    %532 = arith.index_cast %c6_i32 : i32 to index
    %c0_106 = arith.constant 0 : index
    %c0_107 = arith.constant 0 : index
    %533 = vector.load %arg11[%532, %c0_106, %c0_107] : memref<8x8x512xf32, #tpu.memory_space<vmem>>, vector<1x8x512xf32>
    %534 = vector.shape_cast %533 : vector<1x8x512xf32> to vector<8x512xf32>
    %535 = arith.addf %534, %529 : vector<8x512xf32>
    %536 = vector.extract_strided_slice %535 {offsets = [0, 0], sizes = [8, 128], strides = [1, 1]} : vector<8x512xf32> to vector<8x128xf32>
    %537 = arith.negf %536 : vector<8x128xf32>
    %538 = math.exp %537 : vector<8x128xf32>
    %cst_108 = arith.constant 1.000000e+00 : f32
    %539 = vector.broadcast %cst_108 : f32 to vector<8x128xf32>
    %540 = arith.addf %539, %538 : vector<8x128xf32>
    %541 = arith.divf %539, %540 : vector<8x128xf32>
    %542 = vector.extract_strided_slice %535 {offsets = [0, 128], sizes = [8, 128], strides = [1, 1]} : vector<8x512xf32> to vector<8x128xf32>
    %543 = arith.negf %542 : vector<8x128xf32>
    %544 = math.exp %543 : vector<8x128xf32>
    %cst_109 = arith.constant 1.000000e+00 : f32
    %545 = vector.broadcast %cst_109 : f32 to vector<8x128xf32>
    %546 = arith.addf %545, %544 : vector<8x128xf32>
    %547 = arith.divf %545, %546 : vector<8x128xf32>
    %548 = vector.extract_strided_slice %535 {offsets = [0, 256], sizes = [8, 128], strides = [1, 1]} : vector<8x512xf32> to vector<8x128xf32>
    %549 = math.tanh %548 : vector<8x128xf32>
    %550 = vector.extract_strided_slice %535 {offsets = [0, 384], sizes = [8, 128], strides = [1, 1]} : vector<8x512xf32> to vector<8x128xf32>
    %551 = arith.negf %550 : vector<8x128xf32>
    %552 = math.exp %551 : vector<8x128xf32>
    %cst_110 = arith.constant 1.000000e+00 : f32
    %553 = vector.broadcast %cst_110 : f32 to vector<8x128xf32>
    %554 = arith.addf %553, %552 : vector<8x128xf32>
    %555 = arith.divf %553, %554 : vector<8x128xf32>
    %556 = arith.mulf %547, %481 : vector<8x128xf32>
    %557 = arith.mulf %541, %549 : vector<8x128xf32>
    %558 = arith.addf %556, %557 : vector<8x128xf32>
    %559 = math.tanh %558 : vector<8x128xf32>
    %560 = arith.mulf %555, %559 : vector<8x128xf32>
    %561 = vector.shape_cast %527 : vector<8x1xi1> to vector<8x1xi1>
    %562 = vector.broadcast %561 : vector<8x1xi1> to vector<8x128xi1>
    %563 = arith.select %562, %560, %478 : vector<8x128xi1>, vector<8x128xf32>
    %564 = vector.shape_cast %527 : vector<8x1xi1> to vector<8x1xi1>
    %565 = vector.broadcast %564 : vector<8x1xi1> to vector<8x128xi1>
    %566 = arith.select %565, %558, %481 : vector<8x128xi1>, vector<8x128xf32>
    %567 = arith.truncf %563 : vector<8x128xf32> to vector<8x128xbf16>
    %cst_111 = arith.constant dense<0.000000e+00> : vector<8x512xf32>
    %568 = tpu.matmul %567, %13, %cst_111 {dimension_numbers = #tpu.dot_dimension_numbers<[1], [0], [0], [1], [0, 0, 1, 1], [], []>} : vector<8x128xbf16>, vector<128x512xbf16>, vector<8x512xf32> -> vector<8x512xf32>
    %569 = arith.addf %568, %531 : vector<8x512xf32>
    %570 = vector.broadcast %14 : vector<1x512xf32> to vector<8x512xf32>
    %571 = arith.addf %569, %570 : vector<8x512xf32>
    %572 = vector.extract_strided_slice %571 {offsets = [0, 0], sizes = [8, 128], strides = [1, 1]} : vector<8x512xf32> to vector<8x128xf32>
    %573 = arith.negf %572 : vector<8x128xf32>
    %574 = math.exp %573 : vector<8x128xf32>
    %cst_112 = arith.constant 1.000000e+00 : f32
    %575 = vector.broadcast %cst_112 : f32 to vector<8x128xf32>
    %576 = arith.addf %575, %574 : vector<8x128xf32>
    %577 = arith.divf %575, %576 : vector<8x128xf32>
    %578 = vector.extract_strided_slice %571 {offsets = [0, 128], sizes = [8, 128], strides = [1, 1]} : vector<8x512xf32> to vector<8x128xf32>
    %579 = arith.negf %578 : vector<8x128xf32>
    %580 = math.exp %579 : vector<8x128xf32>
    %cst_113 = arith.constant 1.000000e+00 : f32
    %581 = vector.broadcast %cst_113 : f32 to vector<8x128xf32>
    %582 = arith.addf %581, %580 : vector<8x128xf32>
    %583 = arith.divf %581, %582 : vector<8x128xf32>
    %584 = vector.extract_strided_slice %571 {offsets = [0, 256], sizes = [8, 128], strides = [1, 1]} : vector<8x512xf32> to vector<8x128xf32>
    %585 = math.tanh %584 : vector<8x128xf32>
    %586 = vector.extract_strided_slice %571 {offsets = [0, 384], sizes = [8, 128], strides = [1, 1]} : vector<8x512xf32> to vector<8x128xf32>
    %587 = arith.negf %586 : vector<8x128xf32>
    %588 = math.exp %587 : vector<8x128xf32>
    %cst_114 = arith.constant 1.000000e+00 : f32
    %589 = vector.broadcast %cst_114 : f32 to vector<8x128xf32>
    %590 = arith.addf %589, %588 : vector<8x128xf32>
    %591 = arith.divf %589, %590 : vector<8x128xf32>
    %592 = arith.mulf %583, %517 : vector<8x128xf32>
    %593 = arith.mulf %577, %585 : vector<8x128xf32>
    %594 = arith.addf %592, %593 : vector<8x128xf32>
    %595 = math.tanh %594 : vector<8x128xf32>
    %596 = arith.mulf %591, %595 : vector<8x128xf32>
    %597 = vector.shape_cast %527 : vector<8x1xi1> to vector<8x1xi1>
    %598 = vector.broadcast %597 : vector<8x1xi1> to vector<8x128xi1>
    %599 = arith.select %598, %596, %514 : vector<8x128xi1>, vector<8x128xf32>
    %600 = vector.shape_cast %527 : vector<8x1xi1> to vector<8x1xi1>
    %601 = vector.broadcast %600 : vector<8x1xi1> to vector<8x128xi1>
    %602 = arith.select %601, %594, %517 : vector<8x128xi1>, vector<8x128xf32>
    %cst_115 = arith.constant 0.000000e+00 : f32
    %603 = vector.shape_cast %527 : vector<8x1xi1> to vector<8x1xi1>
    %604 = vector.broadcast %603 : vector<8x1xi1> to vector<8x128xi1>
    %605 = vector.broadcast %cst_115 : f32 to vector<8x128xf32>
    %606 = arith.select %604, %599, %605 : vector<8x128xi1>, vector<8x128xf32>
    %607 = arith.index_cast %c6_i32 : i32 to index
    %c0_116 = arith.constant 0 : index
    %c0_117 = arith.constant 0 : index
    %608 = vector.load %arg12[%607, %c0_116, %c0_117] : memref<8x8x128xf32, #tpu.memory_space<vmem>>, vector<1x8x128xf32>
    %609 = vector.shape_cast %608 : vector<1x8x128xf32> to vector<8x128xf32>
    %610 = vector.shape_cast %606 : vector<8x128xf32> to vector<1x8x128xf32>
    tpu.vector_store %arg12[%607, %c0_116, %c0_117], %610 {strides = array<i32>} : memref<8x8x128xf32, #tpu.memory_space<vmem>>, vector<1x8x128xf32>,
    %c7_i32 = arith.constant 7 : i32
    %611 = vector.broadcast %c7_i32 : i32 to vector<8x1xi32>
    %612 = arith.cmpi slt, %611, %10 : vector<8x1xi32>
    %613 = arith.truncf %563 : vector<8x128xf32> to vector<8x128xbf16>
    %cst_118 = arith.constant dense<0.000000e+00> : vector<8x512xf32>
    %614 = tpu.matmul %613, %11, %cst_118 {dimension_numbers = #tpu.dot_dimension_numbers<[1], [0], [0], [1], [0, 0, 1, 1], [], []>} : vector<8x128xbf16>, vector<128x512xbf16>, vector<8x512xf32> -> vector<8x512xf32>
    %615 = arith.truncf %599 : vector<8x128xf32> to vector<8x128xbf16>
    %cst_119 = arith.constant dense<0.000000e+00> : vector<8x512xf32>
    %616 = tpu.matmul %615, %12, %cst_119 {dimension_numbers = #tpu.dot_dimension_numbers<[1], [0], [0], [1], [0, 0, 1, 1], [], []>} : vector<8x128xbf16>, vector<128x512xbf16>, vector<8x512xf32> -> vector<8x512xf32>
    %617 = arith.index_cast %c7_i32 : i32 to index
    %c0_120 = arith.constant 0 : index
    %c0_121 = arith.constant 0 : index
    %618 = vector.load %arg11[%617, %c0_120, %c0_121] : memref<8x8x512xf32, #tpu.memory_space<vmem>>, vector<1x8x512xf32>
    %619 = vector.shape_cast %618 : vector<1x8x512xf32> to vector<8x512xf32>
    %620 = arith.addf %619, %614 : vector<8x512xf32>
    %621 = vector.extract_strided_slice %620 {offsets = [0, 0], sizes = [8, 128], strides = [1, 1]} : vector<8x512xf32> to vector<8x128xf32>
    %622 = arith.negf %621 : vector<8x128xf32>
    %623 = math.exp %622 : vector<8x128xf32>
    %cst_122 = arith.constant 1.000000e+00 : f32
    %624 = vector.broadcast %cst_122 : f32 to vector<8x128xf32>
    %625 = arith.addf %624, %623 : vector<8x128xf32>
    %626 = arith.divf %624, %625 : vector<8x128xf32>
    %627 = vector.extract_strided_slice %620 {offsets = [0, 128], sizes = [8, 128], strides = [1, 1]} : vector<8x512xf32> to vector<8x128xf32>
    %628 = arith.negf %627 : vector<8x128xf32>
    %629 = math.exp %628 : vector<8x128xf32>
    %cst_123 = arith.constant 1.000000e+00 : f32
    %630 = vector.broadcast %cst_123 : f32 to vector<8x128xf32>
    %631 = arith.addf %630, %629 : vector<8x128xf32>
    %632 = arith.divf %630, %631 : vector<8x128xf32>
    %633 = vector.extract_strided_slice %620 {offsets = [0, 256], sizes = [8, 128], strides = [1, 1]} : vector<8x512xf32> to vector<8x128xf32>
    %634 = math.tanh %633 : vector<8x128xf32>
    %635 = vector.extract_strided_slice %620 {offsets = [0, 384], sizes = [8, 128], strides = [1, 1]} : vector<8x512xf32> to vector<8x128xf32>
    %636 = arith.negf %635 : vector<8x128xf32>
    %637 = math.exp %636 : vector<8x128xf32>
    %cst_124 = arith.constant 1.000000e+00 : f32
    %638 = vector.broadcast %cst_124 : f32 to vector<8x128xf32>
    %639 = arith.addf %638, %637 : vector<8x128xf32>
    %640 = arith.divf %638, %639 : vector<8x128xf32>
    %641 = arith.mulf %632, %566 : vector<8x128xf32>
    %642 = arith.mulf %626, %634 : vector<8x128xf32>
    %643 = arith.addf %641, %642 : vector<8x128xf32>
    %644 = math.tanh %643 : vector<8x128xf32>
    %645 = arith.mulf %640, %644 : vector<8x128xf32>
    %646 = vector.shape_cast %612 : vector<8x1xi1> to vector<8x1xi1>
    %647 = vector.broadcast %646 : vector<8x1xi1> to vector<8x128xi1>
    %648 = arith.select %647, %645, %563 : vector<8x128xi1>, vector<8x128xf32>
    %649 = vector.shape_cast %612 : vector<8x1xi1> to vector<8x1xi1>
    %650 = vector.broadcast %649 : vector<8x1xi1> to vector<8x128xi1>
    %651 = arith.select %650, %643, %566 : vector<8x128xi1>, vector<8x128xf32>
    %652 = arith.truncf %648 : vector<8x128xf32> to vector<8x128xbf16>
    %cst_125 = arith.constant dense<0.000000e+00> : vector<8x512xf32>
    %653 = tpu.matmul %652, %13, %cst_125 {dimension_numbers = #tpu.dot_dimension_numbers<[1], [0], [0], [1], [0, 0, 1, 1], [], []>} : vector<8x128xbf16>, vector<128x512xbf16>, vector<8x512xf32> -> vector<8x512xf32>
    %654 = arith.addf %653, %616 : vector<8x512xf32>
    %655 = vector.broadcast %14 : vector<1x512xf32> to vector<8x512xf32>
    %656 = arith.addf %654, %655 : vector<8x512xf32>
    %657 = vector.extract_strided_slice %656 {offsets = [0, 0], sizes = [8, 128], strides = [1, 1]} : vector<8x512xf32> to vector<8x128xf32>
    %658 = arith.negf %657 : vector<8x128xf32>
    %659 = math.exp %658 : vector<8x128xf32>
    %cst_126 = arith.constant 1.000000e+00 : f32
    %660 = vector.broadcast %cst_126 : f32 to vector<8x128xf32>
    %661 = arith.addf %660, %659 : vector<8x128xf32>
    %662 = arith.divf %660, %661 : vector<8x128xf32>
    %663 = vector.extract_strided_slice %656 {offsets = [0, 128], sizes = [8, 128], strides = [1, 1]} : vector<8x512xf32> to vector<8x128xf32>
    %664 = arith.negf %663 : vector<8x128xf32>
    %665 = math.exp %664 : vector<8x128xf32>
    %cst_127 = arith.constant 1.000000e+00 : f32
    %666 = vector.broadcast %cst_127 : f32 to vector<8x128xf32>
    %667 = arith.addf %666, %665 : vector<8x128xf32>
    %668 = arith.divf %666, %667 : vector<8x128xf32>
    %669 = vector.extract_strided_slice %656 {offsets = [0, 256], sizes = [8, 128], strides = [1, 1]} : vector<8x512xf32> to vector<8x128xf32>
    %670 = math.tanh %669 : vector<8x128xf32>
    %671 = vector.extract_strided_slice %656 {offsets = [0, 384], sizes = [8, 128], strides = [1, 1]} : vector<8x512xf32> to vector<8x128xf32>
    %672 = arith.negf %671 : vector<8x128xf32>
    %673 = math.exp %672 : vector<8x128xf32>
    %cst_128 = arith.constant 1.000000e+00 : f32
    %674 = vector.broadcast %cst_128 : f32 to vector<8x128xf32>
    %675 = arith.addf %674, %673 : vector<8x128xf32>
    %676 = arith.divf %674, %675 : vector<8x128xf32>
    %677 = arith.mulf %668, %602 : vector<8x128xf32>
    %678 = arith.mulf %662, %670 : vector<8x128xf32>
    %679 = arith.addf %677, %678 : vector<8x128xf32>
    %680 = math.tanh %679 : vector<8x128xf32>
    %681 = arith.mulf %676, %680 : vector<8x128xf32>
    %682 = vector.shape_cast %612 : vector<8x1xi1> to vector<8x1xi1>
    %683 = vector.broadcast %682 : vector<8x1xi1> to vector<8x128xi1>
    %684 = arith.select %683, %681, %599 : vector<8x128xi1>, vector<8x128xf32>
    %685 = vector.shape_cast %612 : vector<8x1xi1> to vector<8x1xi1>
    %686 = vector.broadcast %685 : vector<8x1xi1> to vector<8x128xi1>
    %687 = arith.select %686, %679, %602 : vector<8x128xi1>, vector<8x128xf32>
    %cst_129 = arith.constant 0.000000e+00 : f32
    %688 = vector.shape_cast %612 : vector<8x1xi1> to vector<8x1xi1>
    %689 = vector.broadcast %688 : vector<8x1xi1> to vector<8x128xi1>
    %690 = vector.broadcast %cst_129 : f32 to vector<8x128xf32>
    %691 = arith.select %689, %684, %690 : vector<8x128xi1>, vector<8x128xf32>
    %692 = arith.index_cast %c7_i32 : i32 to index
    %c0_130 = arith.constant 0 : index
    %c0_131 = arith.constant 0 : index
    %693 = vector.load %arg12[%692, %c0_130, %c0_131] : memref<8x8x128xf32, #tpu.memory_space<vmem>>, vector<1x8x128xf32>
    %694 = vector.shape_cast %693 : vector<1x8x128xf32> to vector<8x128xf32>
    %695 = vector.shape_cast %691 : vector<8x128xf32> to vector<1x8x128xf32>
    tpu.vector_store %arg12[%692, %c0_130, %c0_131], %695 {strides = array<i32>} : memref<8x8x128xf32, #tpu.memory_space<vmem>>, vector<1x8x128xf32>,
    %c8_i32 = arith.constant 8 : i32
    %c0_132 = arith.constant 0 : index
    %c0_133 = arith.constant 0 : index
    %c0_134 = arith.constant 0 : index
    %696 = vector.load %arg12[%c0_132, %c0_133, %c0_134] : memref<8x8x128xf32, #tpu.memory_space<vmem>>, vector<8x8x128xf32>
    %697 = vector.shape_cast %696 : vector<8x8x128xf32> to vector<64x128xf32>
    %698 = arith.truncf %697 : vector<64x128xf32> to vector<64x128xbf16>
    %c0_135 = arith.constant 0 : index
    %c0_136 = arith.constant 0 : index
    %699 = vector.load %arg8[%c0_135, %c0_136] : memref<128x128xbf16, #tpu.memory_space<vmem>>, vector<128x128xbf16>
    %cst_137 = arith.constant dense<0.000000e+00> : vector<64x128xf32>
    %700 = tpu.matmul %698, %699, %cst_137 {dimension_numbers = #tpu.dot_dimension_numbers<[1], [0], [0], [1], [0, 0, 1, 1], [], []>} : vector<64x128xbf16>, vector<128x128xbf16>, vector<64x128xf32> -> vector<64x128xf32>
    %c0_138 = arith.constant 0 : index
    %c0_139 = arith.constant 0 : index
    %701 = vector.load %arg9[%c0_138, %c0_139] : memref<1x128xf32, #tpu.memory_space<vmem>>, vector<1x128xf32>
    %702 = vector.broadcast %701 : vector<1x128xf32> to vector<64x128xf32>
    %703 = arith.addf %700, %702 : vector<64x128xf32>
    %704 = vector.shape_cast %703 : vector<64x128xf32> to vector<8x8x128xf32>
    %c0_140 = arith.constant 0 : index
    %c0_141 = arith.constant 0 : index
    %c0_142 = arith.constant 0 : index
    %705 = vector.load %arg10[%c0_140, %c0_141, %c0_142] : memref<8x8x128xf32, #tpu.memory_space<vmem>>, vector<8x8x128xf32>
    tpu.vector_store %arg10[%c0_140, %c0_141, %c0_142], %704 {strides = array<i32>} : memref<8x8x128xf32, #tpu.memory_space<vmem>>, vector<8x8x128xf32>,
    return
  }
}

</mosaic_0001>

<llo_original>
// kernel: tpu_custom_call.1
$region0: #{tpu_custom_call.1}
  #allocation0 [shape = 'u32[]', space=smem, size = 0x4, offset = 0x4, fixed_abs, tag = 'smem constant byte address 0x4 - core index']
  #allocation1 [shape = 'u32[144,128]{1,0:T(1,128)}', space=vmem, size = 0x12000, scoped, tag = 'internal scratch']
  #allocation2 [shape = 'f32[8,8,512]{2,1,0:T(8,128)}', space=vmem, size = 0x20000, scoped, tag = 'scratch operand']
  #allocation3 [shape = 'f32[8,8,128]{2,1,0:T(8,128)}', space=vmem, size = 0x8000, scoped, tag = 'scratch operand']
  %s0 = inlined_call_operand.vmem [shape: f32[8,8,6], index: 0, kind: input, shape index: {}]
  %s1 = inlined_call_operand.vmem [shape: s32[8,1], index: 1, kind: input, shape index: {}]
  %s2 = inlined_call_operand.vmem [shape: bf16[6,512], index: 2, kind: input, shape index: {}]
  %s3 = inlined_call_operand.vmem [shape: f32[1,512], index: 3, kind: input, shape index: {}]
  %s4 = inlined_call_operand.hbm [shape: bf16[128,512], index: 4, kind: input, shape index: {}]
  %s5 = inlined_call_operand.hbm [shape: bf16[128,512], index: 5, kind: input, shape index: {}]
  %s6 = inlined_call_operand.hbm [shape: bf16[128,512], index: 6, kind: input, shape index: {}]
  %s7 = inlined_call_operand.vmem [shape: f32[1,512], index: 7, kind: input, shape index: {}]
  %s8 = inlined_call_operand.vmem [shape: bf16[128,128], index: 8, kind: input, shape index: {}]
  %s9 = inlined_call_operand.vmem [shape: f32[1,128], index: 9, kind: input, shape index: {}]
  %s10 = inlined_call_operand.hbm [shape: f32[8,8,128], index: 10, kind: output, shape index: {}]
  %s11 = sld [smem:[#allocation0]]
  $region62: #{tpu_custom_call.1} parent=0
    _
  %s13 = ssub.s32 1, %s11
  %s14 = scalar_select 0, %s13, %s11
  $region1: #{tpu_custom_call.1} parent=0
    #allocation4 [shape = 'u8[131072]{0}', space=vmem, size = 0x20000, scoped, tag = 'input window, operand 4, single buffered']
    #allocation5 [shape = 's32[1]{0}', space=sflag, size = 0x4, scoped, tag = 'scoped memory for tpu_custom_call.1']
    #allocation6 [shape = 's32[1]{0}', space=sflag, size = 0x4, scoped, tag = 'scoped memory for tpu_custom_call.1']
    #allocation7 [shape = 'u8[131072]{0}', space=vmem, size = 0x20000, scoped, tag = 'input window, operand 5, single buffered']
    #allocation8 [shape = 's32[1]{0}', space=sflag, size = 0x4, scoped, tag = 'scoped memory for tpu_custom_call.1']
    #allocation9 [shape = 'u8[131072]{0}', space=vmem, size = 0x20000, scoped, tag = 'input window, operand 6, single buffered']
    #allocation10 [shape = 'u8[32768]{0}', space=vmem, size = 0x8000, scoped, tag = 'output window, operand 0, single buffered']
    %15 = vsyncpa [#allocation5], 0
    %16 = vsyncpa [#allocation8], 0
    %17 = vsyncpa [#allocation6], 0
    // Predicated region
    $region2: #{tpu_custom_call.1} parent=1 // pred_check
      _
    $region3: #{tpu_custom_call.1} parent=1 // pred_check_branch
      %19 = sbr.rel (0) target = $region5
    $region4: #{tpu_custom_call.1} parent=1 // pred_region
      _
    $region5: #{tpu_custom_call.1} parent=1 // pred_fallthru
      _
    // Predicated region
    $region6: #{tpu_custom_call.1} parent=1 // pred_check
      _
    $region7: #{tpu_custom_call.1} parent=1 // pred_check_branch
      %21 = sbr.rel (0) target = $region9
    $region8: #{tpu_custom_call.1} parent=1 // pred_region
      _
    $region9: #{tpu_custom_call.1} parent=1 // pred_fallthru
      _
    // Predicated region
    $region10: #{tpu_custom_call.1} parent=1 // pred_check
      _
    $region11: #{tpu_custom_call.1} parent=1 // pred_check_branch
      %23 = sbr.rel (0) target = $region13
    $region12: #{tpu_custom_call.1} parent=1 // pred_region
      _
    $region13: #{tpu_custom_call.1} parent=1 // pred_fallthru
      _
    // Predicated region
    $region14: #{tpu_custom_call.1} parent=1 // pred_check
      _
    $region15: #{tpu_custom_call.1} parent=1 // pred_check_branch
      %25 = sbr.rel (0) target = $region17
    $region16: #{tpu_custom_call.1} parent=1 // pred_region
      _
    $region17: #{tpu_custom_call.1} parent=1 // pred_fallthru
      _
    // Predicated region
    $region18: #{tpu_custom_call.1} parent=1 // pred_check
      _
    $region19: #{tpu_custom_call.1} parent=1 // pred_check_branch
      %27 = sbr.rel (0) target = $region21
    $region20: #{tpu_custom_call.1} parent=1 // pred_region
      %s29 = ssub.s32 4096, 4096
      %30 = vsyncadd [#allocation5], %s29
      %s31 = sshll.u32 [#allocation4], 4
      %s32 = int_to_ptr.vmem [resolvable:$true] %s31
      %37 = dma.hbm_to_vmem [thread:$0]  %s4, 4096, %s32, [#allocation5], 256, 256, 16
    $region21: #{tpu_custom_call.1} parent=1 // pred_fallthru
      _
    // Predicated region
    $region22: #{tpu_custom_call.1} parent=1 // pred_check
      _
    $region23: #{tpu_custom_call.1} parent=1 // pred_check_branch
      %39 = sbr.rel (0) target = $region25
    $region24: #{tpu_custom_call.1} parent=1 // pred_region
      %s41 = ssub.s32 4096, 4096
      %42 = vsyncadd [#allocation8], %s41
      %s43 = sshll.u32 [#allocation7], 4
      %s44 = int_to_ptr.vmem [resolvable:$true] %s43
      %49 = dma.hbm_to_vmem [thread:$0]  %s5, 4096, %s44, [#allocation8], 256, 256, 16
    $region25: #{tpu_custom_call.1} parent=1 // pred_fallthru
      _
    // Predicated region
    $region26: #{tpu_custom_call.1} parent=1 // pred_check
      _
    $region27: #{tpu_custom_call.1} parent=1 // pred_check_branch
      %51 = sbr.rel (0) target = $region29
    $region28: #{tpu_custom_call.1} parent=1 // pred_region
      %s53 = ssub.s32 4096, 4096
      %54 = vsyncadd [#allocation8], %s53
      %s55 = sshll.u32 [#allocation9], 4
      %s56 = int_to_ptr.vmem [resolvable:$true] %s55
      %61 = dma.hbm_to_vmem [thread:$0]  %s6, 4096, %s56, [#allocation8], 256, 256, 16
    $region29: #{tpu_custom_call.1} parent=1 // pred_fallthru
      _
    // Predicated region
    $region30: #{tpu_custom_call.1} parent=1 // pred_check
      _
    $region31: #{tpu_custom_call.1} parent=1 // pred_check_branch
      %63 = sbr.rel (0) target = $region33
    $region32: #{tpu_custom_call.1} parent=1 // pred_region
      _
    $region33: #{tpu_custom_call.1} parent=1 // pred_fallthru
      _
    // Predicated region
    $region34: #{tpu_custom_call.1} parent=1 // pred_check
      _
    $region35: #{tpu_custom_call.1} parent=1 // pred_check_branch
      %65 = sbr.rel (0) target = $region37
    $region36: #{tpu_custom_call.1} parent=1 // pred_region
      _
    $region37: #{tpu_custom_call.1} parent=1 // pred_fallthru
      _
    // Predicated region
    $region38: #{tpu_custom_call.1} parent=1 // pred_check
      _
    $region39: #{tpu_custom_call.1} parent=1 // pred_check_branch
      %67 = sbr.rel (0) target = $region41
    $region40: #{tpu_custom_call.1} parent=1 // pred_region
      _
    $region41: #{tpu_custom_call.1} parent=1 // pred_fallthru
      _
    // Predicated region
    $region42: #{tpu_custom_call.1} parent=1 // pred_check
      _
    $region43: #{tpu_custom_call.1} parent=1 // pred_check_branch
      %69 = sbr.rel (0) target = $region45
    $region44: #{tpu_custom_call.1} parent=1 // pred_region
      %70 = dma.done [#allocation5], 4096
    $region45: #{tpu_custom_call.1} parent=1 // pred_fallthru
      _
    // Predicated region
    $region46: #{tpu_custom_call.1} parent=1 // pred_check
      _
    $region47: #{tpu_custom_call.1} parent=1 // pred_check_branch
      %72 = sbr.rel (0) target = $region49
    $region48: #{tpu_custom_call.1} parent=1 // pred_region
      %73 = dma.done [#allocation8], 4096
    $region49: #{tpu_custom_call.1} parent=1 // pred_fallthru
      _
    // Predicated region
    $region50: #{tpu_custom_call.1} parent=1 // pred_check
      _
    $region51: #{tpu_custom_call.1} parent=1 // pred_check_branch
      %75 = sbr.rel (0) target = $region53
    $region52: #{tpu_custom_call.1} parent=1 // pred_region
      %76 = dma.done [#allocation8], 4096
    $region53: #{tpu_custom_call.1} parent=1 // pred_fallthru
      _
    %v78 = vld [vmem:[%s0] sm:$0xff]
    %v79 = vld [vmem:[%s0 + $0x8] sm:$0xff]
    %v80 = vld [vmem:[%s0 + $0x10] sm:$0xff]
    %v81 = vld [vmem:[%s0 + $0x18] sm:$0xff]
    %v82 = vld [vmem:[%s0 + $0x20] sm:$0xff]
    %v83 = vld [vmem:[%s0 + $0x28] sm:$0xff]
    %v84 = vld [vmem:[%s0 + $0x30] sm:$0xff]
    %v85 = vld [vmem:[%s0 + $0x38] sm:$0xff]
    %v86 = vpack.c.bf16 %v79, %v78
    %v87 = vpack.c.bf16 %v81, %v80
    %v88 = vpack.c.bf16 %v83, %v82
    %v89 = vpack.c.bf16 %v85, %v84
    %v90 = vld [vmem:[%s2] sm:$0x77]
    %v91 = vld [vmem:[%s2 + $0x8] sm:$0x77]
    %v92 = vld [vmem:[%s3] sm:$0xf]
    %v94 = vlaneseq
    %v95 = vshrl.u32 %v94, 7
    %v96 = vsub.s32 0, %v95
    %v97 = vrot.slane %v92, %v96
    %v98 = vlaneseq
    %v99 = vshrl.u32 %v98, 7
    %v100 = vsub.s32 1, %v99
    %v101 = vrot.slane %v92, %v100
    %v102 = vlaneseq
    %v103 = vshrl.u32 %v102, 7
    %v104 = vsub.s32 2, %v103
    %v105 = vrot.slane %v92, %v104
    %v106 = vlaneseq
    %v107 = vshrl.u32 %v106, 7
    %v108 = vsub.s32 3, %v107
    %v109 = vrot.slane %v92, %v108
    %v116 = vunpack.c.l.b16 %v90
    %v117 = vunpack.c.h.b16 %v90
    %v118 = vunpack.c.l.b16 %v91
    %v119 = vunpack.c.h.b16 %v91
    %v120 = vpack.c.b16 %v116, %v116
    %v121 = vpack.c.b16 %v117, %v117
    %v122 = vpack.c.b16 %v118, %v118
    %v123 = vpack.c.b16 %v119, %v119
    %vm124 = vcmask 48128
    %v126 = vsel %vm124, %v86, 0
    %v129 = vsel %vm124, %v87, 0
    %v132 = vsel %vm124, %v88, 0
    %v135 = vsel %vm124, %v89, 0
    %vm137 = vcmask 1042432
    %v139 = vsel %vm137, %v120, 0
    %v142 = vsel %vm137, %v121, 0
    %v145 = vsel %vm137, %v122, 0
    %v148 = vsel %vm137, %v123, 0
    %150 = vmatprep.subr.bf16.mxu0 %v142
    %151 = vmatpush1.bf16.msra.mxu0 %v139
    %152 = vmatprep.subr.bf16.mxu0 0
    %153 = vmatpush1.bf16.msra.mxu0 0
    %154 = vmatprep.subr.bf16.mxu0 0
    %155 = vmatpush1.bf16.msra.mxu0 0
    %156 = vmatprep.subr.bf16.mxu0 0
    %157 = vmatpush1.bf16.msra.mxu0 0
    %158 = vmatprep.subr.bf16.mxu0 0
    %159 = vmatpush1.bf16.msra.mxu0 0
    %160 = vmatprep.subr.bf16.mxu0 0
    %161 = vmatpush1.bf16.msra.mxu0 0
    %162 = vmatprep.subr.bf16.mxu0 0
    %163 = vmatpush1.bf16.msra.mxu0 0
    %164 = vmatprep.subr.bf16.mxu0 0
    %165 = vmatpush1.bf16.msra.mxu0 0
    %166 = vmatprep.subr.bf16.mxu0 0
    %167 = vmatpush1.bf16.msra.mxu0 0
    %168 = vmatprep.subr.bf16.mxu0 0
    %169 = vmatpush1.bf16.msra.mxu0 0
    %170 = vmatprep.subr.bf16.mxu0 0
    %171 = vmatpush1.bf16.msra.mxu0 0
    %172 = vmatprep.subr.bf16.mxu0 0
    %173 = vmatpush1.bf16.msra.mxu0 0
    %174 = vmatprep.subr.bf16.mxu0 0
    %175 = vmatpush1.bf16.msra.mxu0 0
    %176 = vmatprep.subr.bf16.mxu0 0
    %177 = vmatpush1.bf16.msra.mxu0 0
    %178 = vmatprep.subr.bf16.mxu0 0
    %179 = vmatpush1.bf16.msra.mxu0 0
    %180 = vmatprep.subr.bf16.mxu0 0
    %181 = vmatpush1.bf16.msra.mxu0 0
    %182 = vmatprep.mubr.bf16.mxu0 0
    %183 = vmatmul.mubr.bf16.gmra.mrb[0].mxu0 %v126
    %v184 = vpop.f32.mrb[0].mxu0
    %v185 = vadd.f32 %v97, %v184
    %v186 = vpop.f32.mrb[0].mxu0
    %v187 = vadd.f32 %v101, %v186
    %v188 = vpop.f32.mrb[0].mxu0
    %v189 = vadd.f32 %v97, %v188
    %v190 = vpop.f32.mrb[0].mxu0
    %v191 = vadd.f32 %v101, %v190
    %192 = vmatprep.mubr.bf16.mxu0 0
    %193 = vmatmul.mubr.bf16.gmra.mrb[0].mxu0 %v129
    %v194 = vpop.f32.mrb[0].mxu0
    %v195 = vadd.f32 %v97, %v194
    %v196 = vpop.f32.mrb[0].mxu0
    %v197 = vadd.f32 %v101, %v196
    %v198 = vpop.f32.mrb[0].mxu0
    %v199 = vadd.f32 %v97, %v198
    %v200 = vpop.f32.mrb[0].mxu0
    %v201 = vadd.f32 %v101, %v200
    %202 = vmatprep.mubr.bf16.mxu0 0
    %203 = vmatmul.mubr.bf16.gmra.mrb[0].mxu0 %v132
    %v204 = vpop.f32.mrb[0].mxu0
    %v205 = vadd.f32 %v97, %v204
    %v206 = vpop.f32.mrb[0].mxu0
    %v207 = vadd.f32 %v101, %v206
    %v208 = vpop.f32.mrb[0].mxu0
    %v209 = vadd.f32 %v97, %v208
    %v210 = vpop.f32.mrb[0].mxu0
    %v211 = vadd.f32 %v101, %v210
    %212 = vmatprep.mubr.bf16.mxu0 0
    %213 = vmatmul.mubr.bf16.gmra.mrb[0].mxu0 %v135
    %v214 = vpop.f32.mrb[0].mxu0
    %v215 = vadd.f32 %v97, %v214
    %v216 = vpop.f32.mrb[0].mxu0
    %v217 = vadd.f32 %v101, %v216
    %v218 = vpop.f32.mrb[0].mxu0
    %v219 = vadd.f32 %v97, %v218
    %v220 = vpop.f32.mrb[0].mxu0
    %v221 = vadd.f32 %v101, %v220
    %222 = vdwg.mxu0
    %223 = vmatprep.subr.bf16.mxu0 %v148
    %224 = vmatpush1.bf16.msra.mxu0 %v145
    %225 = vmatprep.subr.bf16.mxu0 0
    %226 = vmatpush1.bf16.msra.mxu0 0
    %227 = vmatprep.subr.bf16.mxu0 0
    %228 = vmatpush1.bf16.msra.mxu0 0
    %229 = vmatprep.subr.bf16.mxu0 0
    %230 = vmatpush1.bf16.msra.mxu0 0
    %231 = vmatprep.subr.bf16.mxu0 0
    %232 = vmatpush1.bf16.msra.mxu0 0
    %233 = vmatprep.subr.bf16.mxu0 0
    %234 = vmatpush1.bf16.msra.mxu0 0
    %235 = vmatprep.subr.bf16.mxu0 0
    %236 = vmatpush1.bf16.msra.mxu0 0
    %237 = vmatprep.subr.bf16.mxu0 0
    %238 = vmatpush1.bf16.msra.mxu0 0
    %239 = vmatprep.subr.bf16.mxu0 0
    %240 = vmatpush1.bf16.msra.mxu0 0
    %241 = vmatprep.subr.bf16.mxu0 0
    %242 = vmatpush1.bf16.msra.mxu0 0
    %243 = vmatprep.subr.bf16.mxu0 0
    %244 = vmatpush1.bf16.msra.mxu0 0
    %245 = vmatprep.subr.bf16.mxu0 0
    %246 = vmatpush1.bf16.msra.mxu0 0
    %247 = vmatprep.subr.bf16.mxu0 0
    %248 = vmatpush1.bf16.msra.mxu0 0
    %249 = vmatprep.subr.bf16.mxu0 0
    %250 = vmatpush1.bf16.msra.mxu0 0
    %251 = vmatprep.subr.bf16.mxu0 0
    %252 = vmatpush1.bf16.msra.mxu0 0
    %253 = vmatprep.subr.bf16.mxu0 0
    %254 = vmatpush1.bf16.msra.mxu0 0
    %255 = vmatprep.mubr.bf16.mxu0 0
    %256 = vmatmul.mubr.bf16.gmra.mrb[0].mxu0 %v126
    %v257 = vpop.f32.mrb[0].mxu0
    %v258 = vadd.f32 %v105, %v257
    %v259 = vpop.f32.mrb[0].mxu0
    %v260 = vadd.f32 %v109, %v259
    %v261 = vpop.f32.mrb[0].mxu0
    %v262 = vadd.f32 %v105, %v261
    %v263 = vpop.f32.mrb[0].mxu0
    %v264 = vadd.f32 %v109, %v263
    %265 = vmatprep.mubr.bf16.mxu0 0
    %266 = vmatmul.mubr.bf16.gmra.mrb[0].mxu0 %v129
    %v267 = vpop.f32.mrb[0].mxu0
    %v268 = vadd.f32 %v105, %v267
    %v269 = vpop.f32.mrb[0].mxu0
    %v270 = vadd.f32 %v109, %v269
    %v271 = vpop.f32.mrb[0].mxu0
    %v272 = vadd.f32 %v105, %v271
    %v273 = vpop.f32.mrb[0].mxu0
    %v274 = vadd.f32 %v109, %v273
    %275 = vmatprep.mubr.bf16.mxu0 0
    %276 = vmatmul.mubr.bf16.gmra.mrb[0].mxu0 %v132
    %v277 = vpop.f32.mrb[0].mxu0
    %v278 = vadd.f32 %v105, %v277
    %v279 = vpop.f32.mrb[0].mxu0
    %v280 = vadd.f32 %v109, %v279
    %v281 = vpop.f32.mrb[0].mxu0
    %v282 = vadd.f32 %v105, %v281
    %v283 = vpop.f32.mrb[0].mxu0
    %v284 = vadd.f32 %v109, %v283
    %285 = vmatprep.mubr.bf16.mxu0 0
    %286 = vmatmul.mubr.bf16.gmra.mrb[0].mxu0 %v135
    %v287 = vpop.f32.mrb[0].mxu0
    %v288 = vadd.f32 %v105, %v287
    %v289 = vpop.f32.mrb[0].mxu0
    %v290 = vadd.f32 %v109, %v289
    %v291 = vpop.f32.mrb[0].mxu0
    %v292 = vadd.f32 %v105, %v291
    %v293 = vpop.f32.mrb[0].mxu0
    %v294 = vadd.f32 %v109, %v293
    %295 = vdwg.mxu0
    %296 = vst [vmem:[#allocation2] sm:$0xff] %v185
    %297 = vst [vmem:[#allocation2 + $0x8] sm:$0xff] %v187
    %298 = vst [vmem:[#allocation2 + $0x10] sm:$0xff] %v258
    %299 = vst [vmem:[#allocation2 + $0x18] sm:$0xff] %v260
    %300 = vst [vmem:[#allocation2 + $0x20] sm:$0xff] %v189
    %301 = vst [vmem:[#allocation2 + $0x28] sm:$0xff] %v191
    %302 = vst [vmem:[#allocation2 + $0x30] sm:$0xff] %v262
    %303 = vst [vmem:[#allocation2 + $0x38] sm:$0xff] %v264
    %304 = vst [vmem:[#allocation2 + $0x40] sm:$0xff] %v195
    %305 = vst [vmem:[#allocation2 + $0x48] sm:$0xff] %v197
    %306 = vst [vmem:[#allocation2 + $0x50] sm:$0xff] %v268
    %307 = vst [vmem:[#allocation2 + $0x58] sm:$0xff] %v270
    %308 = vst [vmem:[#allocation2 + $0x60] sm:$0xff] %v199
    %309 = vst [vmem:[#allocation2 + $0x68] sm:$0xff] %v201
    %310 = vst [vmem:[#allocation2 + $0x70] sm:$0xff] %v272
    %311 = vst [vmem:[#allocation2 + $0x78] sm:$0xff] %v274
    %312 = vst [vmem:[#allocation2 + $0x80] sm:$0xff] %v205
    %313 = vst [vmem:[#allocation2 + $0x88] sm:$0xff] %v207
    %314 = vst [vmem:[#allocation2 + $0x90] sm:$0xff] %v278
    %315 = vst [vmem:[#allocation2 + $0x98] sm:$0xff] %v280
    %316 = vst [vmem:[#allocation2 + $0xa0] sm:$0xff] %v209
    %317 = vst [vmem:[#allocation2 + $0xa8] sm:$0xff] %v211
    %318 = vst [vmem:[#allocation2 + $0xb0] sm:$0xff] %v282
    %319 = vst [vmem:[#allocation2 + $0xb8] sm:$0xff] %v284
    %320 = vst [vmem:[#allocation2 + $0xc0] sm:$0xff] %v215
    %321 = vst [vmem:[#allocation2 + $0xc8] sm:$0xff] %v217
    %322 = vst [vmem:[#allocation2 + $0xd0] sm:$0xff] %v288
    %323 = vst [vmem:[#allocation2 + $0xd8] sm:$0xff] %v290
    %324 = vst [vmem:[#allocation2 + $0xe0] sm:$0xff] %v219
    %325 = vst [vmem:[#allocation2 + $0xe8] sm:$0xff] %v221
    %326 = vst [vmem:[#allocation2 + $0xf0] sm:$0xff] %v292
    %327 = vst [vmem:[#allocation2 + $0xf8] sm:$0xff] %v294
    %v328 = vld [vmem:[%s1] sm:$0xff]
    %v329 = vld [vmem:[#allocation4] sm:$0xff]
    %v330 = vld [vmem:[#allocation4 + $0x8] sm:$0xff]
    %v331 = vld [vmem:[#allocation4 + $0x10] sm:$0xff]
    %v332 = vld [vmem:[#allocation4 + $0x18] sm:$0xff]
    %v333 = vld [vmem:[#allocation4 + $0x20] sm:$0xff]
    %v334 = vld [vmem:[#allocation4 + $0x28] sm:$0xff]
    %v335 = vld [vmem:[#allocation4 + $0x30] sm:$0xff]
    %v336 = vld [vmem:[#allocation4 + $0x38] sm:$0xff]
    %v337 = vld [vmem:[#allocation4 + $0x40] sm:$0xff]
    %v338 = vld [vmem:[#allocation4 + $0x48] sm:$0xff]
    %v339 = vld [vmem:[#allocation4 + $0x50] sm:$0xff]
    %v340 = vld [vmem:[#allocation4 + $0x58] sm:$0xff]
    %v341 = vld [vmem:[#allocation4 + $0x60] sm:$0xff]
    %v342 = vld [vmem:[#allocation4 + $0x68] sm:$0xff]
    %v343 = vld [vmem:[#allocation4 + $0x70] sm:$0xff]
    %v344 = vld [vmem:[#allocation4 + $0x78] sm:$0xff]
    %v345 = vld [vmem:[#allocation4 + $0x80] sm:$0xff]
    %v346 = vld [vmem:[#allocation4 + $0x88] sm:$0xff]
    %v347 = vld [vmem:[#allocation4 + $0x90] sm:$0xff]
    %v348 = vld [vmem:[#allocation4 + $0x98] sm:$0xff]
    %v349 = vld [vmem:[#allocation4 + $0xa0] sm:$0xff]
    %v350 = vld [vmem:[#allocation4 + $0xa8] sm:$0xff]
    %v351 = vld [vmem:[#allocation4 + $0xb0] sm:$0xff]
    %v352 = vld [vmem:[#allocation4 + $0xb8] sm:$0xff]
    %v353 = vld [vmem:[#allocation4 + $0xc0] sm:$0xff]
    %v354 = vld [vmem:[#allocation4 + $0xc8] sm:$0xff]
    %v355 = vld [vmem:[#allocation4 + $0xd0] sm:$0xff]
    %v356 = vld [vmem:[#allocation4 + $0xd8] sm:$0xff]
    %v357 = vld [vmem:[#allocation4 + $0xe0] sm:$0xff]
    %v358 = vld [vmem:[#allocation4 + $0xe8] sm:$0xff]
    %v359 = vld [vmem:[#allocation4 + $0xf0] sm:$0xff]
    %v360 = vld [vmem:[#allocation4 + $0xf8] sm:$0xff]
    %v361 = vld [vmem:[#allocation7] sm:$0xff]
    %v362 = vld [vmem:[#allocation7 + $0x8] sm:$0xff]
    %v363 = vld [vmem:[#allocation7 + $0x10] sm:$0xff]
    %v364 = vld [vmem:[#allocation7 + $0x18] sm:$0xff]
    %v365 = vld [vmem:[#allocation7 + $0x20] sm:$0xff]
    %v366 = vld [vmem:[#allocation7 + $0x28] sm:$0xff]
    %v367 = vld [vmem:[#allocation7 + $0x30] sm:$0xff]
    %v368 = vld [vmem:[#allocation7 + $0x38] sm:$0xff]
    %v369 = vld [vmem:[#allocation7 + $0x40] sm:$0xff]
    %v370 = vld [vmem:[#allocation7 + $0x48] sm:$0xff]
    %v371 = vld [vmem:[#allocation7 + $0x50] sm:$0xff]
    %v372 = vld [vmem:[#allocation7 + $0x58] sm:$0xff]
    %v373 = vld [vmem:[#allocation7 + $0x60] sm:$0xff]
    %v374 = vld [vmem:[#allocation7 + $0x68] sm:$0xff]
    %v375 = vld [vmem:[#allocation7 + $0x70] sm:$0xff]
    %v376 = vld [vmem:[#allocation7 + $0x78] sm:$0xff]
    %v377 = vld [vmem:[#allocation7 + $0x80] sm:$0xff]
    %v378 = vld [vmem:[#allocation7 + $0x88] sm:$0xff]
    %v379 = vld [vmem:[#allocation7 + $0x90] sm:$0xff]
    %v380 = vld [vmem:[#allocation7 + $0x98] sm:$0xff]
    %v381 = vld [vmem:[#allocation7 + $0xa0] sm:$0xff]
    %v382 = vld [vmem:[#allocation7 + $0xa8] sm:$0xff]
    %v383 = vld [vmem:[#allocation7 + $0xb0] sm:$0xff]
    %v384 = vld [vmem:[#allocation7 + $0xb8] sm:$0xff]
    %v385 = vld [vmem:[#allocation7 + $0xc0] sm:$0xff]
    %v386 = vld [vmem:[#allocation7 + $0xc8] sm:$0xff]
    %v387 = vld [vmem:[#allocation7 + $0xd0] sm:$0xff]
    %v388 = vld [vmem:[#allocation7 + $0xd8] sm:$0xff]
    %v389 = vld [vmem:[#allocation7 + $0xe0] sm:$0xff]
    %v390 = vld [vmem:[#allocation7 + $0xe8] sm:$0xff]
    %v391 = vld [vmem:[#allocation7 + $0xf0] sm:$0xff]
    %v392 = vld [vmem:[#allocation7 + $0xf8] sm:$0xff]
    %v393 = vld [vmem:[#allocation9] sm:$0xff]
    %v394 = vld [vmem:[#allocation9 + $0x8] sm:$0xff]
    %v395 = vld [vmem:[#allocation9 + $0x10] sm:$0xff]
    %v396 = vld [vmem:[#allocation9 + $0x18] sm:$0xff]
    %v397 = vld [vmem:[#allocation9 + $0x20] sm:$0xff]
    %v398 = vld [vmem:[#allocation9 + $0x28] sm:$0xff]
    %v399 = vld [vmem:[#allocation9 + $0x30] sm:$0xff]
    %v400 = vld [vmem:[#allocation9 + $0x38] sm:$0xff]
    %v401 = vld [vmem:[#allocation9 + $0x40] sm:$0xff]
    %v402 = vld [vmem:[#allocation9 + $0x48] sm:$0xff]
    %v403 = vld [vmem:[#allocation9 + $0x50] sm:$0xff]
    %v404 = vld [vmem:[#allocation9 + $0x58] sm:$0xff]
    %v405 = vld [vmem:[#allocation9 + $0x60] sm:$0xff]
    %v406 = vld [vmem:[#allocation9 + $0x68] sm:$0xff]
    %v407 = vld [vmem:[#allocation9 + $0x70] sm:$0xff]
    %v408 = vld [vmem:[#allocation9 + $0x78] sm:$0xff]
    %v409 = vld [vmem:[#allocation9 + $0x80] sm:$0xff]
    %v410 = vld [vmem:[#allocation9 + $0x88] sm:$0xff]
    %v411 = vld [vmem:[#allocation9 + $0x90] sm:$0xff]
    %v412 = vld [vmem:[#allocation9 + $0x98] sm:$0xff]
    %v413 = vld [vmem:[#allocation9 + $0xa0] sm:$0xff]
    %v414 = vld [vmem:[#allocation9 + $0xa8] sm:$0xff]
    %v415 = vld [vmem:[#allocation9 + $0xb0] sm:$0xff]
    %v416 = vld [vmem:[#allocation9 + $0xb8] sm:$0xff]
    %v417 = vld [vmem:[#allocation9 + $0xc0] sm:$0xff]
    %v418 = vld [vmem:[#allocation9 + $0xc8] sm:$0xff]
    %v419 = vld [vmem:[#allocation9 + $0xd0] sm:$0xff]
    %v420 = vld [vmem:[#allocation9 + $0xd8] sm:$0xff]
    %v421 = vld [vmem:[#allocation9 + $0xe0] sm:$0xff]
    %v422 = vld [vmem:[#allocation9 + $0xe8] sm:$0xff]
    %v423 = vld [vmem:[#allocation9 + $0xf0] sm:$0xff]
    %v424 = vld [vmem:[#allocation9 + $0xf8] sm:$0xff]
    %v425 = vld [vmem:[%s7] sm:$0xf]
    %vm426 = vcmp.gt.s32.totalorder %v328, 0
    %v459 = vunpack.c.l.b16 %v329
    %v460 = vunpack.c.h.b16 %v329
    %v461 = vunpack.c.l.b16 %v330
    %v462 = vunpack.c.h.b16 %v330
    %v463 = vunpack.c.l.b16 %v331
    %v464 = vunpack.c.h.b16 %v331
    %v465 = vunpack.c.l.b16 %v332
    %v466 = vunpack.c.h.b16 %v332
    %v467 = vunpack.c.l.b16 %v333
    %v468 = vunpack.c.h.b16 %v333
    %v469 = vunpack.c.l.b16 %v334
    %v470 = vunpack.c.h.b16 %v334
    %v471 = vunpack.c.l.b16 %v335
    %v472 = vunpack.c.h.b16 %v335
    %v473 = vunpack.c.l.b16 %v336
    %v474 = vunpack.c.h.b16 %v336
    %v475 = vunpack.c.l.b16 %v337
    %v476 = vunpack.c.h.b16 %v337
    %v477 = vunpack.c.l.b16 %v338
    %v478 = vunpack.c.h.b16 %v338
    %v479 = vunpack.c.l.b16 %v339
    %v480 = vunpack.c.h.b16 %v339
    %v481 = vunpack.c.l.b16 %v340
    %v482 = vunpack.c.h.b16 %v340
    %v483 = vunpack.c.l.b16 %v341
    %v484 = vunpack.c.h.b16 %v341
    %v485 = vunpack.c.l.b16 %v342
    %v486 = vunpack.c.h.b16 %v342
    %v487 = vunpack.c.l.b16 %v343
    %v488 = vunpack.c.h.b16 %v343
    %v489 = vunpack.c.l.b16 %v344
    %v490 = vunpack.c.h.b16 %v344
    %v491 = vunpack.c.l.b16 %v345
    %v492 = vunpack.c.h.b16 %v345
    %v493 = vunpack.c.l.b16 %v346
    %v494 = vunpack.c.h.b16 %v346
    %v495 = vunpack.c.l.b16 %v347
    %v496 = vunpack.c.h.b16 %v347
    %v497 = vunpack.c.l.b16 %v348
    %v498 = vunpack.c.h.b16 %v348
    %v499 = vunpack.c.l.b16 %v349
    %v500 = vunpack.c.h.b16 %v349
    %v501 = vunpack.c.l.b16 %v350
    %v502 = vunpack.c.h.b16 %v350
    %v503 = vunpack.c.l.b16 %v351
    %v504 = vunpack.c.h.b16 %v351
    %v505 = vunpack.c.l.b16 %v352
    %v506 = vunpack.c.h.b16 %v352
    %v507 = vunpack.c.l.b16 %v353
    %v508 = vunpack.c.h.b16 %v353
    %v509 = vunpack.c.l.b16 %v354
    %v510 = vunpack.c.h.b16 %v354
    %v511 = vunpack.c.l.b16 %v355
    %v512 = vunpack.c.h.b16 %v355
    %v513 = vunpack.c.l.b16 %v356
    %v514 = vunpack.c.h.b16 %v356
    %v515 = vunpack.c.l.b16 %v357
    %v516 = vunpack.c.h.b16 %v357
    %v517 = vunpack.c.l.b16 %v358
    %v518 = vunpack.c.h.b16 %v358
    %v519 = vunpack.c.l.b16 %v359
    %v520 = vunpack.c.h.b16 %v359
    %v521 = vunpack.c.l.b16 %v360
    %v522 = vunpack.c.h.b16 %v360
    %v523 = vpack.c.b16 %v463, %v459
    %v524 = vpack.c.b16 %v464, %v460
    %v525 = vpack.c.b16 %v465, %v461
    %v526 = vpack.c.b16 %v466, %v462
    %v527 = vpack.c.b16 %v471, %v467
    %v528 = vpack.c.b16 %v472, %v468
    %v529 = vpack.c.b16 %v473, %v469
    %v530 = vpack.c.b16 %v474, %v470
    %v531 = vpack.c.b16 %v479, %v475
    %v532 = vpack.c.b16 %v480, %v476
    %v533 = vpack.c.b16 %v481, %v477
    %v534 = vpack.c.b16 %v482, %v478
    %v535 = vpack.c.b16 %v487, %v483
    %v536 = vpack.c.b16 %v488, %v484
    %v537 = vpack.c.b16 %v489, %v485
    %v538 = vpack.c.b16 %v490, %v486
    %v539 = vpack.c.b16 %v495, %v491
    %v540 = vpack.c.b16 %v496, %v492
    %v541 = vpack.c.b16 %v497, %v493
    %v542 = vpack.c.b16 %v498, %v494
    %v543 = vpack.c.b16 %v503, %v499
    %v544 = vpack.c.b16 %v504, %v500
    %v545 = vpack.c.b16 %v505, %v501
    %v546 = vpack.c.b16 %v506, %v502
    %v547 = vpack.c.b16 %v511, %v507
    %v548 = vpack.c.b16 %v512, %v508
    %v549 = vpack.c.b16 %v513, %v509
    %v550 = vpack.c.b16 %v514, %v510
    %v551 = vpack.c.b16 %v519, %v515
    %v552 = vpack.c.b16 %v520, %v516
    %v553 = vpack.c.b16 %v521, %v517
    %v554 = vpack.c.b16 %v522, %v518
    %587 = vmatprep.subr.bf16.mxu0 %v524
    %588 = vmatpush1.bf16.msra.mxu0 %v523
    %589 = vmatprep.subr.bf16.mxu0 %v528
    %590 = vmatpush1.bf16.msra.mxu0 %v527
    %591 = vmatprep.subr.bf16.mxu0 %v532
    %592 = vmatpush1.bf16.msra.mxu0 %v531
    %593 = vmatprep.subr.bf16.mxu0 %v536
    %594 = vmatpush1.bf16.msra.mxu0 %v535
    %595 = vmatprep.subr.bf16.mxu0 %v540
    %596 = vmatpush1.bf16.msra.mxu0 %v539
    %597 = vmatprep.subr.bf16.mxu0 %v544
    %598 = vmatpush1.bf16.msra.mxu0 %v543
    %599 = vmatprep.subr.bf16.mxu0 %v548
    %600 = vmatpush1.bf16.msra.mxu0 %v547
    %601 = vmatprep.subr.bf16.mxu0 %v552
    %602 = vmatpush1.bf16.msra.mxu0 %v551
    %603 = vmatprep.subr.bf16.mxu0 0
    %604 = vmatpush1.bf16.msra.mxu0 0
    %605 = vmatprep.subr.bf16.mxu0 0
    %606 = vmatpush1.bf16.msra.mxu0 0
    %607 = vmatprep.subr.bf16.mxu0 0
    %608 = vmatpush1.bf16.msra.mxu0 0
    %609 = vmatprep.subr.bf16.mxu0 0
    %610 = vmatpush1.bf16.msra.mxu0 0
    %611 = vmatprep.subr.bf16.mxu0 0
    %612 = vmatpush1.bf16.msra.mxu0 0
    %613 = vmatprep.subr.bf16.mxu0 0
    %614 = vmatpush1.bf16.msra.mxu0 0
    %615 = vmatprep.subr.bf16.mxu0 0
    %616 = vmatpush1.bf16.msra.mxu0 0
    %617 = vmatprep.subr.bf16.mxu0 0
    %618 = vmatpush1.bf16.msra.mxu0 0
    %619 = vmatprep.mubr.bf16.mxu0 0
    %620 = vmatmul.mubr.bf16.gmra.mrb[0].mxu0 0
    %v621 = vpop.f32.mrb[0].mxu0
    %v622 = vadd.f32 0.0, %v621
    %v623 = vpop.f32.mrb[0].mxu0
    %v624 = vadd.f32 0.0, %v623
    %v625 = vpop.f32.mrb[0].mxu0
    %v626 = vpop.f32.mrb[0].mxu0
    %627 = vdwg.mxu0
    %628 = vmatprep.subr.bf16.mxu0 %v526
    %629 = vmatpush1.bf16.msra.mxu0 %v525
    %630 = vmatprep.subr.bf16.mxu0 %v530
    %631 = vmatpush1.bf16.msra.mxu0 %v529
    %632 = vmatprep.subr.bf16.mxu0 %v534
    %633 = vmatpush1.bf16.msra.mxu0 %v533
    %634 = vmatprep.subr.bf16.mxu0 %v538
    %635 = vmatpush1.bf16.msra.mxu0 %v537
    %636 = vmatprep.subr.bf16.mxu0 %v542
    %637 = vmatpush1.bf16.msra.mxu0 %v541
    %638 = vmatprep.subr.bf16.mxu0 %v546
    %639 = vmatpush1.bf16.msra.mxu0 %v545
    %640 = vmatprep.subr.bf16.mxu0 %v550
    %641 = vmatpush1.bf16.msra.mxu0 %v549
    %642 = vmatprep.subr.bf16.mxu0 %v554
    %643 = vmatpush1.bf16.msra.mxu0 %v553
    %644 = vmatprep.subr.bf16.mxu0 0
    %645 = vmatpush1.bf16.msra.mxu0 0
    %646 = vmatprep.subr.bf16.mxu0 0
    %647 = vmatpush1.bf16.msra.mxu0 0
    %648 = vmatprep.subr.bf16.mxu0 0
    %649 = vmatpush1.bf16.msra.mxu0 0
    %650 = vmatprep.subr.bf16.mxu0 0
    %651 = vmatpush1.bf16.msra.mxu0 0
    %652 = vmatprep.subr.bf16.mxu0 0
    %653 = vmatpush1.bf16.msra.mxu0 0
    %654 = vmatprep.subr.bf16.mxu0 0
    %655 = vmatpush1.bf16.msra.mxu0 0
    %656 = vmatprep.subr.bf16.mxu0 0
    %657 = vmatpush1.bf16.msra.mxu0 0
    %658 = vmatprep.subr.bf16.mxu0 0
    %659 = vmatpush1.bf16.msra.mxu0 0
    %660 = vmatprep.mubr.bf16.mxu0 0
    %661 = vmatmul.mubr.bf16.gmra.mrb[0].mxu0 0
    %v662 = vpop.f32.mrb[0].mxu0
    %v663 = vadd.f32 0.0, %v662
    %v664 = vpop.f32.mrb[0].mxu0
    %v665 = vadd.f32 0.0, %v664
    %v666 = vpop.f32.mrb[0].mxu0
    %v667 = vpop.f32.mrb[0].mxu0
    %668 = vdwg.mxu0
    %v701 = vunpack.c.l.b16 %v361
    %v702 = vunpack.c.h.b16 %v361
    %v703 = vunpack.c.l.b16 %v362
    %v704 = vunpack.c.h.b16 %v362
    %v705 = vunpack.c.l.b16 %v363
    %v706 = vunpack.c.h.b16 %v363
    %v707 = vunpack.c.l.b16 %v364
    %v708 = vunpack.c.h.b16 %v364
    %v709 = vunpack.c.l.b16 %v365
    %v710 = vunpack.c.h.b16 %v365
    %v711 = vunpack.c.l.b16 %v366
    %v712 = vunpack.c.h.b16 %v366
    %v713 = vunpack.c.l.b16 %v367
    %v714 = vunpack.c.h.b16 %v367
    %v715 = vunpack.c.l.b16 %v368
    %v716 = vunpack.c.h.b16 %v368
    %v717 = vunpack.c.l.b16 %v369
    %v718 = vunpack.c.h.b16 %v369
    %v719 = vunpack.c.l.b16 %v370
    %v720 = vunpack.c.h.b16 %v370
    %v721 = vunpack.c.l.b16 %v371
    %v722 = vunpack.c.h.b16 %v371
    %v723 = vunpack.c.l.b16 %v372
    %v724 = vunpack.c.h.b16 %v372
    %v725 = vunpack.c.l.b16 %v373
    %v726 = vunpack.c.h.b16 %v373
    %v727 = vunpack.c.l.b16 %v374
    %v728 = vunpack.c.h.b16 %v374
    %v729 = vunpack.c.l.b16 %v375
    %v730 = vunpack.c.h.b16 %v375
    %v731 = vunpack.c.l.b16 %v376
    %v732 = vunpack.c.h.b16 %v376
    %v733 = vunpack.c.l.b16 %v377
    %v734 = vunpack.c.h.b16 %v377
    %v735 = vunpack.c.l.b16 %v378
    %v736 = vunpack.c.h.b16 %v378
    %v737 = vunpack.c.l.b16 %v379
    %v738 = vunpack.c.h.b16 %v379
    %v739 = vunpack.c.l.b16 %v380
    %v740 = vunpack.c.h.b16 %v380
    %v741 = vunpack.c.l.b16 %v381
    %v742 = vunpack.c.h.b16 %v381
    %v743 = vunpack.c.l.b16 %v382
    %v744 = vunpack.c.h.b16 %v382
    %v745 = vunpack.c.l.b16 %v383
    %v746 = vunpack.c.h.b16 %v383
    %v747 = vunpack.c.l.b16 %v384
    %v748 = vunpack.c.h.b16 %v384
    %v749 = vunpack.c.l.b16 %v385
    %v750 = vunpack.c.h.b16 %v385
    %v751 = vunpack.c.l.b16 %v386
    %v752 = vunpack.c.h.b16 %v386
    %v753 = vunpack.c.l.b16 %v387
    %v754 = vunpack.c.h.b16 %v387
    %v755 = vunpack.c.l.b16 %v388
    %v756 = vunpack.c.h.b16 %v388
    %v757 = vunpack.c.l.b16 %v389
    %v758 = vunpack.c.h.b16 %v389
    %v759 = vunpack.c.l.b16 %v390
    %v760 = vunpack.c.h.b16 %v390
    %v761 = vunpack.c.l.b16 %v391
    %v762 = vunpack.c.h.b16 %v391
    %v763 = vunpack.c.l.b16 %v392
    %v764 = vunpack.c.h.b16 %v392
    %v765 = vpack.c.b16 %v705, %v701
    %v766 = vpack.c.b16 %v706, %v702
    %v767 = vpack.c.b16 %v707, %v703
    %v768 = vpack.c.b16 %v708, %v704
    %v769 = vpack.c.b16 %v713, %v709
    %v770 = vpack.c.b16 %v714, %v710
    %v771 = vpack.c.b16 %v715, %v711
    %v772 = vpack.c.b16 %v716, %v712
    %v773 = vpack.c.b16 %v721, %v717
    %v774 = vpack.c.b16 %v722, %v718
    %v775 = vpack.c.b16 %v723, %v719
    %v776 = vpack.c.b16 %v724, %v720
    %v777 = vpack.c.b16 %v729, %v725
    %v778 = vpack.c.b16 %v730, %v726
    %v779 = vpack.c.b16 %v731, %v727
    %v780 = vpack.c.b16 %v732, %v728
    %v781 = vpack.c.b16 %v737, %v733
    %v782 = vpack.c.b16 %v738, %v734
    %v783 = vpack.c.b16 %v739, %v735
    %v784 = vpack.c.b16 %v740, %v736
    %v785 = vpack.c.b16 %v745, %v741
    %v786 = vpack.c.b16 %v746, %v742
    %v787 = vpack.c.b16 %v747, %v743
    %v788 = vpack.c.b16 %v748, %v744
    %v789 = vpack.c.b16 %v753, %v749
    %v790 = vpack.c.b16 %v754, %v750
    %v791 = vpack.c.b16 %v755, %v751
    %v792 = vpack.c.b16 %v756, %v752
    %v793 = vpack.c.b16 %v761, %v757
    %v794 = vpack.c.b16 %v762, %v758
    %v795 = vpack.c.b16 %v763, %v759
    %v796 = vpack.c.b16 %v764, %v760
    %829 = vmatprep.subr.bf16.mxu0 %v766
    %830 = vmatpush1.bf16.msra.mxu0 %v765
    %831 = vmatprep.subr.bf16.mxu0 %v770
    %832 = vmatpush1.bf16.msra.mxu0 %v769
    %833 = vmatprep.subr.bf16.mxu0 %v774
    %834 = vmatpush1.bf16.msra.mxu0 %v773
    %835 = vmatprep.subr.bf16.mxu0 %v778
    %836 = vmatpush1.bf16.msra.mxu0 %v777
    %837 = vmatprep.subr.bf16.mxu0 %v782
    %838 = vmatpush1.bf16.msra.mxu0 %v781
    %839 = vmatprep.subr.bf16.mxu0 %v786
    %840 = vmatpush1.bf16.msra.mxu0 %v785
    %841 = vmatprep.subr.bf16.mxu0 %v790
    %842 = vmatpush1.bf16.msra.mxu0 %v789
    %843 = vmatprep.subr.bf16.mxu0 %v794
    %844 = vmatpush1.bf16.msra.mxu0 %v793
    %845 = vmatprep.subr.bf16.mxu0 0
    %846 = vmatpush1.bf16.msra.mxu0 0
    %847 = vmatprep.subr.bf16.mxu0 0
    %848 = vmatpush1.bf16.msra.mxu0 0
    %849 = vmatprep.subr.bf16.mxu0 0
    %850 = vmatpush1.bf16.msra.mxu0 0
    %851 = vmatprep.subr.bf16.mxu0 0
    %852 = vmatpush1.bf16.msra.mxu0 0
    %853 = vmatprep.subr.bf16.mxu0 0
    %854 = vmatpush1.bf16.msra.mxu0 0
    %855 = vmatprep.subr.bf16.mxu0 0
    %856 = vmatpush1.bf16.msra.mxu0 0
    %857 = vmatprep.subr.bf16.mxu0 0
    %858 = vmatpush1.bf16.msra.mxu0 0
    %859 = vmatprep.subr.bf16.mxu0 0
    %860 = vmatpush1.bf16.msra.mxu0 0
    %861 = vmatprep.mubr.bf16.mxu0 0
    %862 = vmatmul.mubr.bf16.gmra.mrb[0].mxu0 0
    %v863 = vpop.f32.mrb[0].mxu0
    %v864 = vadd.f32 0.0, %v863
    %v865 = vpop.f32.mrb[0].mxu0
    %v866 = vadd.f32 0.0, %v865
    %v867 = vpop.f32.mrb[0].mxu0
    %v868 = vpop.f32.mrb[0].mxu0
    %869 = vdwg.mxu0
    %870 = vmatprep.subr.bf16.mxu0 %v768
    %871 = vmatpush1.bf16.msra.mxu0 %v767
    %872 = vmatprep.subr.bf16.mxu0 %v772
    %873 = vmatpush1.bf16.msra.mxu0 %v771
    %874 = vmatprep.subr.bf16.mxu0 %v776
    %875 = vmatpush1.bf16.msra.mxu0 %v775
    %876 = vmatprep.subr.bf16.mxu0 %v780
    %877 = vmatpush1.bf16.msra.mxu0 %v779
    %878 = vmatprep.subr.bf16.mxu0 %v784
    %879 = vmatpush1.bf16.msra.mxu0 %v783
    %880 = vmatprep.subr.bf16.mxu0 %v788
    %881 = vmatpush1.bf16.msra.mxu0 %v787
    %882 = vmatprep.subr.bf16.mxu0 %v792
    %883 = vmatpush1.bf16.msra.mxu0 %v791
    %884 = vmatprep.subr.bf16.mxu0 %v796
    %885 = vmatpush1.bf16.msra.mxu0 %v795
    %886 = vmatprep.subr.bf16.mxu0 0
    %887 = vmatpush1.bf16.msra.mxu0 0
    %888 = vmatprep.subr.bf16.mxu0 0
    %889 = vmatpush1.bf16.msra.mxu0 0
    %890 = vmatprep.subr.bf16.mxu0 0
    %891 = vmatpush1.bf16.msra.mxu0 0
    %892 = vmatprep.subr.bf16.mxu0 0
    %893 = vmatpush1.bf16.msra.mxu0 0
    %894 = vmatprep.subr.bf16.mxu0 0
    %895 = vmatpush1.bf16.msra.mxu0 0
    %896 = vmatprep.subr.bf16.mxu0 0
    %897 = vmatpush1.bf16.msra.mxu0 0
    %898 = vmatprep.subr.bf16.mxu0 0
    %899 = vmatpush1.bf16.msra.mxu0 0
    %900 = vmatprep.subr.bf16.mxu0 0
    %901 = vmatpush1.bf16.msra.mxu0 0
    %902 = vmatprep.mubr.bf16.mxu0 0
    %903 = vmatmul.mubr.bf16.gmra.mrb[0].mxu0 0
    %v904 = vpop.f32.mrb[0].mxu0
    %v905 = vadd.f32 0.0, %v904
    %v906 = vpop.f32.mrb[0].mxu0
    %v907 = vadd.f32 0.0, %v906
    %v908 = vpop.f32.mrb[0].mxu0
    %v909 = vpop.f32.mrb[0].mxu0
    %910 = vdwg.mxu0
    %v911 = vld [vmem:[#allocation2] sm:$0xff]
    %v912 = vld [vmem:[#allocation2 + $0x8] sm:$0xff]
    %v913 = vld [vmem:[#allocation2 + $0x10] sm:$0xff]
    %v914 = vld [vmem:[#allocation2 + $0x18] sm:$0xff]
    %v915 = vadd.f32 %v911, %v622
    %v916 = vadd.f32 %v912, %v624
    %v917 = vadd.f32 %v913, %v663
    %v918 = vadd.f32 %v914, %v665
    %v919 = vxor.u32 %v915, 2147483648
    %v920 = vmul.f32 %v919, 1.442695
    %v921 = vpow.pop %v920
    %v922 = vadd.f32 %v921, 1.0
    %v923 = vrcp.pop %v922
    %v924 = vmul.f32 1.0, %v923
    %v925 = vxor.u32 %v916, 2147483648
    %v926 = vmul.f32 %v925, 1.442695
    %v927 = vpow.pop %v926
    %v928 = vadd.f32 %v927, 1.0
    %v929 = vrcp.pop %v928
    %v930 = vmul.f32 1.0, %v929
    %v931 = vtanh.pop %v917
    %v932 = vxor.u32 %v918, 2147483648
    %v933 = vmul.f32 %v932, 1.442695
    %v934 = vpow.pop %v933
    %v935 = vadd.f32 %v934, 1.0
    %v936 = vrcp.pop %v935
    %v937 = vmul.f32 1.0, %v936
    %v938 = vmul.f32 %v930, 0.0
    %v939 = vmul.f32 %v924, %v931
    %v940 = vadd.f32 %v938, %v939
    %v941 = vtanh.pop %v940
    %v942 = vmul.f32 %v937, %v941
    %v943 = vsel %vm426, 1, 0
    %944 = vset.pattern.permute.xlu0 0
    %945 = vperm.xlu0 %944, %v943
    %v946 = vpop.permute.xlu0 %945
    %vm947 = vcmp.eq.s32.totalorder %v946, 1
    %v948 = vsel %vm947, %v942, 0.0
    %v949 = vsel %vm947, %v940, 0.0
    %v950 = vpack.c.bf16 %v948, %v948
    %v983 = vunpack.c.l.b16 %v393
    %v984 = vunpack.c.h.b16 %v393
    %v985 = vunpack.c.l.b16 %v394
    %v986 = vunpack.c.h.b16 %v394
    %v987 = vunpack.c.l.b16 %v395
    %v988 = vunpack.c.h.b16 %v395
    %v989 = vunpack.c.l.b16 %v396
    %v990 = vunpack.c.h.b16 %v396
    %v991 = vunpack.c.l.b16 %v397
    %v992 = vunpack.c.h.b16 %v397
    %v993 = vunpack.c.l.b16 %v398
    %v994 = vunpack.c.h.b16 %v398
    %v995 = vunpack.c.l.b16 %v399
    %v996 = vunpack.c.h.b16 %v399
    %v997 = vunpack.c.l.b16 %v400
    %v998 = vunpack.c.h.b16 %v400
    %v999 = vunpack.c.l.b16 %v401
    %v1000 = vunpack.c.h.b16 %v401
    %v1001 = vunpack.c.l.b16 %v402
    %v1002 = vunpack.c.h.b16 %v402
    %v1003 = vunpack.c.l.b16 %v403
    %v1004 = vunpack.c.h.b16 %v403
    %v1005 = vunpack.c.l.b16 %v404
    %v1006 = vunpack.c.h.b16 %v404
    %v1007 = vunpack.c.l.b16 %v405
    %v1008 = vunpack.c.h.b16 %v405
    %v1009 = vunpack.c.l.b16 %v406
    %v1010 = vunpack.c.h.b16 %v406
    %v1011 = vunpack.c.l.b16 %v407
    %v1012 = vunpack.c.h.b16 %v407
    %v1013 = vunpack.c.l.b16 %v408
    %v1014 = vunpack.c.h.b16 %v408
    %v1015 = vunpack.c.l.b16 %v409
    %v1016 = vunpack.c.h.b16 %v409
    %v1017 = vunpack.c.l.b16 %v410
    %v1018 = vunpack.c.h.b16 %v410
    %v1019 = vunpack.c.l.b16 %v411
    %v1020 = vunpack.c.h.b16 %v411
    %v1021 = vunpack.c.l.b16 %v412
    %v1022 = vunpack.c.h.b16 %v412
    %v1023 = vunpack.c.l.b16 %v413
    %v1024 = vunpack.c.h.b16 %v413
    %v1025 = vunpack.c.l.b16 %v414
    %v1026 = vunpack.c.h.b16 %v414
    %v1027 = vunpack.c.l.b16 %v415
    %v1028 = vunpack.c.h.b16 %v415
    %v1029 = vunpack.c.l.b16 %v416
    %v1030 = vunpack.c.h.b16 %v416
    %v1031 = vunpack.c.l.b16 %v417
    %v1032 = vunpack.c.h.b16 %v417
    %v1033 = vunpack.c.l.b16 %v418
    %v1034 = vunpack.c.h.b16 %v418
    %v1035 = vunpack.c.l.b16 %v419
    %v1036 = vunpack.c.h.b16 %v419
    %v1037 = vunpack.c.l.b16 %v420
    %v1038 = vunpack.c.h.b16 %v420
    %v1039 = vunpack.c.l.b16 %v421
    %v1040 = vunpack.c.h.b16 %v421
    %v1041 = vunpack.c.l.b16 %v422
    %v1042 = vunpack.c.h.b16 %v422
    %v1043 = vunpack.c.l.b16 %v423
    %v1044 = vunpack.c.h.b16 %v423
    %v1045 = vunpack.c.l.b16 %v424
    %v1046 = vunpack.c.h.b16 %v424
    %v1047 = vpack.c.b16 %v987, %v983
    %v1048 = vpack.c.b16 %v988, %v984
    %v1049 = vpack.c.b16 %v989, %v985
    %v1050 = vpack.c.b16 %v990, %v986
    %v1051 = vpack.c.b16 %v995, %v991
    %v1052 = vpack.c.b16 %v996, %v992
    %v1053 = vpack.c.b16 %v997, %v993
    %v1054 = vpack.c.b16 %v998, %v994
    %v1055 = vpack.c.b16 %v1003, %v999
    %v1056 = vpack.c.b16 %v1004, %v1000
    %v1057 = vpack.c.b16 %v1005, %v1001
    %v1058 = vpack.c.b16 %v1006, %v1002
    %v1059 = vpack.c.b16 %v1011, %v1007
    %v1060 = vpack.c.b16 %v1012, %v1008
    %v1061 = vpack.c.b16 %v1013, %v1009
    %v1062 = vpack.c.b16 %v1014, %v1010
    %v1063 = vpack.c.b16 %v1019, %v1015
    %v1064 = vpack.c.b16 %v1020, %v1016
    %v1065 = vpack.c.b16 %v1021, %v1017
    %v1066 = vpack.c.b16 %v1022, %v1018
    %v1067 = vpack.c.b16 %v1027, %v1023
    %v1068 = vpack.c.b16 %v1028, %v1024
    %v1069 = vpack.c.b16 %v1029, %v1025
    %v1070 = vpack.c.b16 %v1030, %v1026
    %v1071 = vpack.c.b16 %v1035, %v1031
    %v1072 = vpack.c.b16 %v1036, %v1032
    %v1073 = vpack.c.b16 %v1037, %v1033
    %v1074 = vpack.c.b16 %v1038, %v1034
    %v1075 = vpack.c.b16 %v1043, %v1039
    %v1076 = vpack.c.b16 %v1044, %v1040
    %v1077 = vpack.c.b16 %v1045, %v1041
    %v1078 = vpack.c.b16 %v1046, %v1042
    %1111 = vmatprep.subr.bf16.mxu0 %v1048
    %1112 = vmatpush1.bf16.msra.mxu0 %v1047
    %1113 = vmatprep.subr.bf16.mxu0 %v1052
    %1114 = vmatpush1.bf16.msra.mxu0 %v1051
    %1115 = vmatprep.subr.bf16.mxu0 %v1056
    %1116 = vmatpush1.bf16.msra.mxu0 %v1055
    %1117 = vmatprep.subr.bf16.mxu0 %v1060
    %1118 = vmatpush1.bf16.msra.mxu0 %v1059
    %1119 = vmatprep.subr.bf16.mxu0 %v1064
    %1120 = vmatpush1.bf16.msra.mxu0 %v1063
    %1121 = vmatprep.subr.bf16.mxu0 %v1068
    %1122 = vmatpush1.bf16.msra.mxu0 %v1067
    %1123 = vmatprep.subr.bf16.mxu0 %v1072
    %1124 = vmatpush1.bf16.msra.mxu0 %v1071
    %1125 = vmatprep.subr.bf16.mxu0 %v1076
    %1126 = vmatpush1.bf16.msra.mxu0 %v1075
    %1127 = vmatprep.subr.bf16.mxu0 0
    %1128 = vmatpush1.bf16.msra.mxu0 0
    %1129 = vmatprep.subr.bf16.mxu0 0
    %1130 = vmatpush1.bf16.msra.mxu0 0
    %1131 = vmatprep.subr.bf16.mxu0 0
    %1132 = vmatpush1.bf16.msra.mxu0 0
    %1133 = vmatprep.subr.bf16.mxu0 0
    %1134 = vmatpush1.bf16.msra.mxu0 0
    %1135 = vmatprep.subr.bf16.mxu0 0
    %1136 = vmatpush1.bf16.msra.mxu0 0
    %1137 = vmatprep.subr.bf16.mxu0 0
    %1138 = vmatpush1.bf16.msra.mxu0 0
    %1139 = vmatprep.subr.bf16.mxu0 0
    %1140 = vmatpush1.bf16.msra.mxu0 0
    %1141 = vmatprep.subr.bf16.mxu0 0
    %1142 = vmatpush1.bf16.msra.mxu0 0
    %1143 = vmatprep.mubr.bf16.mxu0 0
    %1144 = vmatmul.mubr.bf16.gmra.mrb[0].mxu0 %v950
    %v1145 = vpop.f32.mrb[0].mxu0
    %v1146 = vadd.f32 %v864, %v1145
    %v1147 = vpop.f32.mrb[0].mxu0
    %v1148 = vadd.f32 %v866, %v1147
    %v1149 = vpop.f32.mrb[0].mxu0
    %v1150 = vpop.f32.mrb[0].mxu0
    %1151 = vdwg.mxu0
    %1152 = vmatprep.subr.bf16.mxu0 %v1050
    %1153 = vmatpush1.bf16.msra.mxu0 %v1049
    %1154 = vmatprep.subr.bf16.mxu0 %v1054
    %1155 = vmatpush1.bf16.msra.mxu0 %v1053
    %1156 = vmatprep.subr.bf16.mxu0 %v1058
    %1157 = vmatpush1.bf16.msra.mxu0 %v1057
    %1158 = vmatprep.subr.bf16.mxu0 %v1062
    %1159 = vmatpush1.bf16.msra.mxu0 %v1061
    %1160 = vmatprep.subr.bf16.mxu0 %v1066
    %1161 = vmatpush1.bf16.msra.mxu0 %v1065
    %1162 = vmatprep.subr.bf16.mxu0 %v1070
    %1163 = vmatpush1.bf16.msra.mxu0 %v1069
    %1164 = vmatprep.subr.bf16.mxu0 %v1074
    %1165 = vmatpush1.bf16.msra.mxu0 %v1073
    %1166 = vmatprep.subr.bf16.mxu0 %v1078
    %1167 = vmatpush1.bf16.msra.mxu0 %v1077
    %1168 = vmatprep.subr.bf16.mxu0 0
    %1169 = vmatpush1.bf16.msra.mxu0 0
    %1170 = vmatprep.subr.bf16.mxu0 0
    %1171 = vmatpush1.bf16.msra.mxu0 0
    %1172 = vmatprep.subr.bf16.mxu0 0
    %1173 = vmatpush1.bf16.msra.mxu0 0
    %1174 = vmatprep.subr.bf16.mxu0 0
    %1175 = vmatpush1.bf16.msra.mxu0 0
    %1176 = vmatprep.subr.bf16.mxu0 0
    %1177 = vmatpush1.bf16.msra.mxu0 0
    %1178 = vmatprep.subr.bf16.mxu0 0
    %1179 = vmatpush1.bf16.msra.mxu0 0
    %1180 = vmatprep.subr.bf16.mxu0 0
    %1181 = vmatpush1.bf16.msra.mxu0 0
    %1182 = vmatprep.subr.bf16.mxu0 0
    %1183 = vmatpush1.bf16.msra.mxu0 0
    %1184 = vmatprep.mubr.bf16.mxu0 0
    %1185 = vmatmul.mubr.bf16.gmra.mrb[0].mxu0 %v950
    %v1186 = vpop.f32.mrb[0].mxu0
    %v1187 = vadd.f32 %v905, %v1186
    %v1188 = vpop.f32.mrb[0].mxu0
    %v1189 = vadd.f32 %v907, %v1188
    %v1190 = vpop.f32.mrb[0].mxu0
    %v1191 = vpop.f32.mrb[0].mxu0
    %1192 = vdwg.mxu0
    %v1194 = vlaneseq
    %v1195 = vshrl.u32 %v1194, 7
    %v1196 = vsub.s32 0, %v1195
    %v1197 = vrot.slane %v425, %v1196
    %v1198 = vlaneseq
    %v1199 = vshrl.u32 %v1198, 7
    %v1200 = vsub.s32 1, %v1199
    %v1201 = vrot.slane %v425, %v1200
    %v1202 = vlaneseq
    %v1203 = vshrl.u32 %v1202, 7
    %v1204 = vsub.s32 2, %v1203
    %v1205 = vrot.slane %v425, %v1204
    %v1206 = vlaneseq
    %v1207 = vshrl.u32 %v1206, 7
    %v1208 = vsub.s32 3, %v1207
    %v1209 = vrot.slane %v425, %v1208
    %v1214 = vadd.f32 %v1146, %v1197
    %v1215 = vadd.f32 %v1148, %v1201
    %v1216 = vadd.f32 %v1187, %v1205
    %v1217 = vadd.f32 %v1189, %v1209
    %v1218 = vxor.u32 %v1214, 2147483648
    %v1219 = vmul.f32 %v1218, 1.442695
    %v1220 = vpow.pop %v1219
    %v1221 = vadd.f32 %v1220, 1.0
    %v1222 = vrcp.pop %v1221
    %v1223 = vmul.f32 1.0, %v1222
    %v1224 = vxor.u32 %v1215, 2147483648
    %v1225 = vmul.f32 %v1224, 1.442695
    %v1226 = vpow.pop %v1225
    %v1227 = vadd.f32 %v1226, 1.0
    %v1228 = vrcp.pop %v1227
    %v1229 = vmul.f32 1.0, %v1228
    %v1230 = vtanh.pop %v1216
    %v1231 = vxor.u32 %v1217, 2147483648
    %v1232 = vmul.f32 %v1231, 1.442695
    %v1233 = vpow.pop %v1232
    %v1234 = vadd.f32 %v1233, 1.0
    %v1235 = vrcp.pop %v1234
    %v1236 = vmul.f32 1.0, %v1235
    %v1237 = vmul.f32 %v1229, 0.0
    %v1238 = vmul.f32 %v1223, %v1230
    %v1239 = vadd.f32 %v1237, %v1238
    %v1240 = vtanh.pop %v1239
    %v1241 = vmul.f32 %v1236, %v1240
    %v1242 = vsel %vm947, %v1241, 0.0
    %v1243 = vsel %vm947, %v1239, 0.0
    %1244 = vst [vmem:[#allocation3] sm:$0xff] %v1242
    %vm1245 = vcmp.gt.s32.totalorder %v328, 1
    %1246 = vmatprep.subr.bf16.mxu0 %v524
    %1247 = vmatpush1.bf16.msra.mxu0 %v523
    %1248 = vmatprep.subr.bf16.mxu0 %v528
    %1249 = vmatpush1.bf16.msra.mxu0 %v527
    %1250 = vmatprep.subr.bf16.mxu0 %v532
    %1251 = vmatpush1.bf16.msra.mxu0 %v531
    %1252 = vmatprep.subr.bf16.mxu0 %v536
    %1253 = vmatpush1.bf16.msra.mxu0 %v535
    %1254 = vmatprep.subr.bf16.mxu0 %v540
    %1255 = vmatpush1.bf16.msra.mxu0 %v539
    %1256 = vmatprep.subr.bf16.mxu0 %v544
    %1257 = vmatpush1.bf16.msra.mxu0 %v543
    %1258 = vmatprep.subr.bf16.mxu0 %v548
    %1259 = vmatpush1.bf16.msra.mxu0 %v547
    %1260 = vmatprep.subr.bf16.mxu0 %v552
    %1261 = vmatpush1.bf16.msra.mxu0 %v551
    %1262 = vmatprep.subr.bf16.mxu0 0
    %1263 = vmatpush1.bf16.msra.mxu0 0
    %1264 = vmatprep.subr.bf16.mxu0 0
    %1265 = vmatpush1.bf16.msra.mxu0 0
    %1266 = vmatprep.subr.bf16.mxu0 0
    %1267 = vmatpush1.bf16.msra.mxu0 0
    %1268 = vmatprep.subr.bf16.mxu0 0
    %1269 = vmatpush1.bf16.msra.mxu0 0
    %1270 = vmatprep.subr.bf16.mxu0 0
    %1271 = vmatpush1.bf16.msra.mxu0 0
    %1272 = vmatprep.subr.bf16.mxu0 0
    %1273 = vmatpush1.bf16.msra.mxu0 0
    %1274 = vmatprep.subr.bf16.mxu0 0
    %1275 = vmatpush1.bf16.msra.mxu0 0
    %1276 = vmatprep.subr.bf16.mxu0 0
    %1277 = vmatpush1.bf16.msra.mxu0 0
    %1278 = vmatprep.mubr.bf16.mxu0 0
    %1279 = vmatmul.mubr.bf16.gmra.mrb[0].mxu0 %v950
    %v1280 = vpop.f32.mrb[0].mxu0
    %v1281 = vadd.f32 0.0, %v1280
    %v1282 = vpop.f32.mrb[0].mxu0
    %v1283 = vadd.f32 0.0, %v1282
    %v1284 = vpop.f32.mrb[0].mxu0
    %v1285 = vpop.f32.mrb[0].mxu0
    %1286 = vdwg.mxu0
    %1287 = vmatprep.subr.bf16.mxu0 %v526
    %1288 = vmatpush1.bf16.msra.mxu0 %v525
    %1289 = vmatprep.subr.bf16.mxu0 %v530
    %1290 = vmatpush1.bf16.msra.mxu0 %v529
    %1291 = vmatprep.subr.bf16.mxu0 %v534
    %1292 = vmatpush1.bf16.msra.mxu0 %v533
    %1293 = vmatprep.subr.bf16.mxu0 %v538
    %1294 = vmatpush1.bf16.msra.mxu0 %v537
    %1295 = vmatprep.subr.bf16.mxu0 %v542
    %1296 = vmatpush1.bf16.msra.mxu0 %v541
    %1297 = vmatprep.subr.bf16.mxu0 %v546
    %1298 = vmatpush1.bf16.msra.mxu0 %v545
    %1299 = vmatprep.subr.bf16.mxu0 %v550
    %1300 = vmatpush1.bf16.msra.mxu0 %v549
    %1301 = vmatprep.subr.bf16.mxu0 %v554
    %1302 = vmatpush1.bf16.msra.mxu0 %v553
    %1303 = vmatprep.subr.bf16.mxu0 0
    %1304 = vmatpush1.bf16.msra.mxu0 0
    %1305 = vmatprep.subr.bf16.mxu0 0
    %1306 = vmatpush1.bf16.msra.mxu0 0
    %1307 = vmatprep.subr.bf16.mxu0 0
    %1308 = vmatpush1.bf16.msra.mxu0 0
    %1309 = vmatprep.subr.bf16.mxu0 0
    %1310 = vmatpush1.bf16.msra.mxu0 0
    %1311 = vmatprep.subr.bf16.mxu0 0
    %1312 = vmatpush1.bf16.msra.mxu0 0
    %1313 = vmatprep.subr.bf16.mxu0 0
    %1314 = vmatpush1.bf16.msra.mxu0 0
    %1315 = vmatprep.subr.bf16.mxu0 0
    %1316 = vmatpush1.bf16.msra.mxu0 0
    %1317 = vmatprep.subr.bf16.mxu0 0
    %1318 = vmatpush1.bf16.msra.mxu0 0
    %1319 = vmatprep.mubr.bf16.mxu0 0
    %1320 = vmatmul.mubr.bf16.gmra.mrb[0].mxu0 %v950
    %v1321 = vpop.f32.mrb[0].mxu0
    %v1322 = vadd.f32 0.0, %v1321
    %v1323 = vpop.f32.mrb[0].mxu0
    %v1324 = vadd.f32 0.0, %v1323
    %v1325 = vpop.f32.mrb[0].mxu0
    %v1326 = vpop.f32.mrb[0].mxu0
    %1327 = vdwg.mxu0
    %v1328 = vpack.c.bf16 %v1242, %v1242
    %1329 = vmatprep.subr.bf16.mxu0 %v766
    %1330 = vmatpush1.bf16.msra.mxu0 %v765
    %1331 = vmatprep.subr.bf16.mxu0 %v770
    %1332 = vmatpush1.bf16.msra.mxu0 %v769
    %1333 = vmatprep.subr.bf16.mxu0 %v774
    %1334 = vmatpush1.bf16.msra.mxu0 %v773
    %1335 = vmatprep.subr.bf16.mxu0 %v778
    %1336 = vmatpush1.bf16.msra.mxu0 %v777
    %1337 = vmatprep.subr.bf16.mxu0 %v782
    %1338 = vmatpush1.bf16.msra.mxu0 %v781
    %1339 = vmatprep.subr.bf16.mxu0 %v786
    %1340 = vmatpush1.bf16.msra.mxu0 %v785
    %1341 = vmatprep.subr.bf16.mxu0 %v790
    %1342 = vmatpush1.bf16.msra.mxu0 %v789
    %1343 = vmatprep.subr.bf16.mxu0 %v794
    %1344 = vmatpush1.bf16.msra.mxu0 %v793
    %1345 = vmatprep.subr.bf16.mxu0 0
    %1346 = vmatpush1.bf16.msra.mxu0 0
    %1347 = vmatprep.subr.bf16.mxu0 0
    %1348 = vmatpush1.bf16.msra.mxu0 0
    %1349 = vmatprep.subr.bf16.mxu0 0
    %1350 = vmatpush1.bf16.msra.mxu0 0
    %1351 = vmatprep.subr.bf16.mxu0 0
    %1352 = vmatpush1.bf16.msra.mxu0 0
    %1353 = vmatprep.subr.bf16.mxu0 0
    %1354 = vmatpush1.bf16.msra.mxu0 0
    %1355 = vmatprep.subr.bf16.mxu0 0
    %1356 = vmatpush1.bf16.msra.mxu0 0
    %1357 = vmatprep.subr.bf16.mxu0 0
    %1358 = vmatpush1.bf16.msra.mxu0 0
    %1359 = vmatprep.subr.bf16.mxu0 0
    %1360 = vmatpush1.bf16.msra.mxu0 0
    %1361 = vmatprep.mubr.bf16.mxu0 0
    %1362 = vmatmul.mubr.bf16.gmra.mrb[0].mxu0 %v1328
    %v1363 = vpop.f32.mrb[0].mxu0
    %v1364 = vadd.f32 0.0, %v1363
    %v1365 = vpop.f32.mrb[0].mxu0
    %v1366 = vadd.f32 0.0, %v1365
    %v1367 = vpop.f32.mrb[0].mxu0
    %v1368 = vpop.f32.mrb[0].mxu0
    %1369 = vdwg.mxu0
    %1370 = vmatprep.subr.bf16.mxu0 %v768
    %1371 = vmatpush1.bf16.msra.mxu0 %v767
    %1372 = vmatprep.subr.bf16.mxu0 %v772
    %1373 = vmatpush1.bf16.msra.mxu0 %v771
    %1374 = vmatprep.subr.bf16.mxu0 %v776
    %1375 = vmatpush1.bf16.msra.mxu0 %v775
    %1376 = vmatprep.subr.bf16.mxu0 %v780
    %1377 = vmatpush1.bf16.msra.mxu0 %v779
    %1378 = vmatprep.subr.bf16.mxu0 %v784
    %1379 = vmatpush1.bf16.msra.mxu0 %v783
    %1380 = vmatprep.subr.bf16.mxu0 %v788
    %1381 = vmatpush1.bf16.msra.mxu0 %v787
    %1382 = vmatprep.subr.bf16.mxu0 %v792
    %1383 = vmatpush1.bf16.msra.mxu0 %v791
    %1384 = vmatprep.subr.bf16.mxu0 %v796
    %1385 = vmatpush1.bf16.msra.mxu0 %v795
    %1386 = vmatprep.subr.bf16.mxu0 0
    %1387 = vmatpush1.bf16.msra.mxu0 0
    %1388 = vmatprep.subr.bf16.mxu0 0
    %1389 = vmatpush1.bf16.msra.mxu0 0
    %1390 = vmatprep.subr.bf16.mxu0 0
    %1391 = vmatpush1.bf16.msra.mxu0 0
    %1392 = vmatprep.subr.bf16.mxu0 0
    %1393 = vmatpush1.bf16.msra.mxu0 0
    %1394 = vmatprep.subr.bf16.mxu0 0
    %1395 = vmatpush1.bf16.msra.mxu0 0
    %1396 = vmatprep.subr.bf16.mxu0 0
    %1397 = vmatpush1.bf16.msra.mxu0 0
    %1398 = vmatprep.subr.bf16.mxu0 0
    %1399 = vmatpush1.bf16.msra.mxu0 0
    %1400 = vmatprep.subr.bf16.mxu0 0
    %1401 = vmatpush1.bf16.msra.mxu0 0
    %1402 = vmatprep.mubr.bf16.mxu0 0
    %1403 = vmatmul.mubr.bf16.gmra.mrb[0].mxu0 %v1328
    %v1404 = vpop.f32.mrb[0].mxu0
    %v1405 = vadd.f32 0.0, %v1404
    %v1406 = vpop.f32.mrb[0].mxu0
    %v1407 = vadd.f32 0.0, %v1406
    %v1408 = vpop.f32.mrb[0].mxu0
    %v1409 = vpop.f32.mrb[0].mxu0
    %1410 = vdwg.mxu0
    %s1411 = scalar_lea.vmem [#allocation2], 32
    %v1412 = vld [vmem:[%s1411] sm:$0xff]
    %v1413 = vld [vmem:[%s1411 + $0x8] sm:$0xff]
    %v1414 = vld [vmem:[%s1411 + $0x10] sm:$0xff]
    %v1415 = vld [vmem:[%s1411 + $0x18] sm:$0xff]
    %v1416 = vadd.f32 %v1412, %v1281
    %v1417 = vadd.f32 %v1413, %v1283
    %v1418 = vadd.f32 %v1414, %v1322
    %v1419 = vadd.f32 %v1415, %v1324
    %v1420 = vxor.u32 %v1416, 2147483648
    %v1421 = vmul.f32 %v1420, 1.442695
    %v1422 = vpow.pop %v1421
    %v1423 = vadd.f32 %v1422, 1.0
    %v1424 = vrcp.pop %v1423
    %v1425 = vmul.f32 1.0, %v1424
    %v1426 = vxor.u32 %v1417, 2147483648
    %v1427 = vmul.f32 %v1426, 1.442695
    %v1428 = vpow.pop %v1427
    %v1429 = vadd.f32 %v1428, 1.0
    %v1430 = vrcp.pop %v1429
    %v1431 = vmul.f32 1.0, %v1430
    %v1432 = vtanh.pop %v1418
    %v1433 = vxor.u32 %v1419, 2147483648
    %v1434 = vmul.f32 %v1433, 1.442695
    %v1435 = vpow.pop %v1434
    %v1436 = vadd.f32 %v1435, 1.0
    %v1437 = vrcp.pop %v1436
    %v1438 = vmul.f32 1.0, %v1437
    %v1439 = vmul.f32 %v1431, %v949
    %v1440 = vmul.f32 %v1425, %v1432
    %v1441 = vadd.f32 %v1439, %v1440
    %v1442 = vtanh.pop %v1441
    %v1443 = vmul.f32 %v1438, %v1442
    %v1444 = vsel %vm1245, 1, 0
    %1445 = vset.pattern.permute.xlu0 0
    %1446 = vperm.xlu0 %1445, %v1444
    %v1447 = vpop.permute.xlu0 %1446
    %vm1448 = vcmp.eq.s32.totalorder %v1447, 1
    %v1449 = vsel %vm1448, %v1443, %v948
    %v1450 = vsel %vm1448, %v1441, %v949
    %v1451 = vpack.c.bf16 %v1449, %v1449
    %1452 = vmatprep.subr.bf16.mxu0 %v1048
    %1453 = vmatpush1.bf16.msra.mxu0 %v1047
    %1454 = vmatprep.subr.bf16.mxu0 %v1052
    %1455 = vmatpush1.bf16.msra.mxu0 %v1051
    %1456 = vmatprep.subr.bf16.mxu0 %v1056
    %1457 = vmatpush1.bf16.msra.mxu0 %v1055
    %1458 = vmatprep.subr.bf16.mxu0 %v1060
    %1459 = vmatpush1.bf16.msra.mxu0 %v1059
    %1460 = vmatprep.subr.bf16.mxu0 %v1064
    %1461 = vmatpush1.bf16.msra.mxu0 %v1063
    %1462 = vmatprep.subr.bf16.mxu0 %v1068
    %1463 = vmatpush1.bf16.msra.mxu0 %v1067
    %1464 = vmatprep.subr.bf16.mxu0 %v1072
    %1465 = vmatpush1.bf16.msra.mxu0 %v1071
    %1466 = vmatprep.subr.bf16.mxu0 %v1076
    %1467 = vmatpush1.bf16.msra.mxu0 %v1075
    %1468 = vmatprep.subr.bf16.mxu0 0
    %1469 = vmatpush1.bf16.msra.mxu0 0
    %1470 = vmatprep.subr.bf16.mxu0 0
    %1471 = vmatpush1.bf16.msra.mxu0 0
    %1472 = vmatprep.subr.bf16.mxu0 0
    %1473 = vmatpush1.bf16.msra.mxu0 0
    %1474 = vmatprep.subr.bf16.mxu0 0
    %1475 = vmatpush1.bf16.msra.mxu0 0
    %1476 = vmatprep.subr.bf16.mxu0 0
    %1477 = vmatpush1.bf16.msra.mxu0 0
    %1478 = vmatprep.subr.bf16.mxu0 0
    %1479 = vmatpush1.bf16.msra.mxu0 0
    %1480 = vmatprep.subr.bf16.mxu0 0
    %1481 = vmatpush1.bf16.msra.mxu0 0
    %1482 = vmatprep.subr.bf16.mxu0 0
    %1483 = vmatpush1.bf16.msra.mxu0 0
    %1484 = vmatprep.mubr.bf16.mxu0 0
    %1485 = vmatmul.mubr.bf16.gmra.mrb[0].mxu0 %v1451
    %v1486 = vpop.f32.mrb[0].mxu0
    %v1487 = vadd.f32 %v1364, %v1486
    %v1488 = vpop.f32.mrb[0].mxu0
    %v1489 = vadd.f32 %v1366, %v1488
    %v1490 = vpop.f32.mrb[0].mxu0
    %v1491 = vpop.f32.mrb[0].mxu0
    %1492 = vdwg.mxu0
    %1493 = vmatprep.subr.bf16.mxu0 %v1050
    %1494 = vmatpush1.bf16.msra.mxu0 %v1049
    %1495 = vmatprep.subr.bf16.mxu0 %v1054
    %1496 = vmatpush1.bf16.msra.mxu0 %v1053
    %1497 = vmatprep.subr.bf16.mxu0 %v1058
    %1498 = vmatpush1.bf16.msra.mxu0 %v1057
    %1499 = vmatprep.subr.bf16.mxu0 %v1062
    %1500 = vmatpush1.bf16.msra.mxu0 %v1061
    %1501 = vmatprep.subr.bf16.mxu0 %v1066
    %1502 = vmatpush1.bf16.msra.mxu0 %v1065
    %1503 = vmatprep.subr.bf16.mxu0 %v1070
    %1504 = vmatpush1.bf16.msra.mxu0 %v1069
    %1505 = vmatprep.subr.bf16.mxu0 %v1074
    %1506 = vmatpush1.bf16.msra.mxu0 %v1073
    %1507 = vmatprep.subr.bf16.mxu0 %v1078
    %1508 = vmatpush1.bf16.msra.mxu0 %v1077
    %1509 = vmatprep.subr.bf16.mxu0 0
    %1510 = vmatpush1.bf16.msra.mxu0 0
    %1511 = vmatprep.subr.bf16.mxu0 0
    %1512 = vmatpush1.bf16.msra.mxu0 0
    %1513 = vmatprep.subr.bf16.mxu0 0
    %1514 = vmatpush1.bf16.msra.mxu0 0
    %1515 = vmatprep.subr.bf16.mxu0 0
    %1516 = vmatpush1.bf16.msra.mxu0 0
    %1517 = vmatprep.subr.bf16.mxu0 0
    %1518 = vmatpush1.bf16.msra.mxu0 0
    %1519 = vmatprep.subr.bf16.mxu0 0
    %1520 = vmatpush1.bf16.msra.mxu0 0
    %1521 = vmatprep.subr.bf16.mxu0 0
    %1522 = vmatpush1.bf16.msra.mxu0 0
    %1523 = vmatprep.subr.bf16.mxu0 0
    %1524 = vmatpush1.bf16.msra.mxu0 0
    %1525 = vmatprep.mubr.bf16.mxu0 0
    %1526 = vmatmul.mubr.bf16.gmra.mrb[0].mxu0 %v1451
    %v1527 = vpop.f32.mrb[0].mxu0
    %v1528 = vadd.f32 %v1405, %v1527
    %v1529 = vpop.f32.mrb[0].mxu0
    %v1530 = vadd.f32 %v1407, %v1529
    %v1531 = vpop.f32.mrb[0].mxu0
    %v1532 = vpop.f32.mrb[0].mxu0
    %1533 = vdwg.mxu0
    %v1534 = vadd.f32 %v1487, %v1197
    %v1535 = vadd.f32 %v1489, %v1201
    %v1536 = vadd.f32 %v1528, %v1205
    %v1537 = vadd.f32 %v1530, %v1209
    %v1538 = vxor.u32 %v1534, 2147483648
    %v1539 = vmul.f32 %v1538, 1.442695
    %v1540 = vpow.pop %v1539
    %v1541 = vadd.f32 %v1540, 1.0
    %v1542 = vrcp.pop %v1541
    %v1543 = vmul.f32 1.0, %v1542
    %v1544 = vxor.u32 %v1535, 2147483648
    %v1545 = vmul.f32 %v1544, 1.442695
    %v1546 = vpow.pop %v1545
    %v1547 = vadd.f32 %v1546, 1.0
    %v1548 = vrcp.pop %v1547
    %v1549 = vmul.f32 1.0, %v1548
    %v1550 = vtanh.pop %v1536
    %v1551 = vxor.u32 %v1537, 2147483648
    %v1552 = vmul.f32 %v1551, 1.442695
    %v1553 = vpow.pop %v1552
    %v1554 = vadd.f32 %v1553, 1.0
    %v1555 = vrcp.pop %v1554
    %v1556 = vmul.f32 1.0, %v1555
    %v1557 = vmul.f32 %v1549, %v1243
    %v1558 = vmul.f32 %v1543, %v1550
    %v1559 = vadd.f32 %v1557, %v1558
    %v1560 = vtanh.pop %v1559
    %v1561 = vmul.f32 %v1556, %v1560
    %v1562 = vsel %vm1448, %v1561, %v1242
    %v1563 = vsel %vm1448, %v1559, %v1243
    %v1564 = vsel %vm1448, %v1561, 0.0
    %s1565 = scalar_lea.vmem [#allocation3], 8
    %1566 = vst [vmem:[%s1565] sm:$0xff] %v1564
    %vm1567 = vcmp.gt.s32.totalorder %v328, 2
    %1568 = vmatprep.subr.bf16.mxu0 %v524
    %1569 = vmatpush1.bf16.msra.mxu0 %v523
    %1570 = vmatprep.subr.bf16.mxu0 %v528
    %1571 = vmatpush1.bf16.msra.mxu0 %v527
    %1572 = vmatprep.subr.bf16.mxu0 %v532
    %1573 = vmatpush1.bf16.msra.mxu0 %v531
    %1574 = vmatprep.subr.bf16.mxu0 %v536
    %1575 = vmatpush1.bf16.msra.mxu0 %v535
    %1576 = vmatprep.subr.bf16.mxu0 %v540
    %1577 = vmatpush1.bf16.msra.mxu0 %v539
    %1578 = vmatprep.subr.bf16.mxu0 %v544
    %1579 = vmatpush1.bf16.msra.mxu0 %v543
    %1580 = vmatprep.subr.bf16.mxu0 %v548
    %1581 = vmatpush1.bf16.msra.mxu0 %v547
    %1582 = vmatprep.subr.bf16.mxu0 %v552
    %1583 = vmatpush1.bf16.msra.mxu0 %v551
    %1584 = vmatprep.subr.bf16.mxu0 0
    %1585 = vmatpush1.bf16.msra.mxu0 0
    %1586 = vmatprep.subr.bf16.mxu0 0
    %1587 = vmatpush1.bf16.msra.mxu0 0
    %1588 = vmatprep.subr.bf16.mxu0 0
    %1589 = vmatpush1.bf16.msra.mxu0 0
    %1590 = vmatprep.subr.bf16.mxu0 0
    %1591 = vmatpush1.bf16.msra.mxu0 0
    %1592 = vmatprep.subr.bf16.mxu0 0
    %1593 = vmatpush1.bf16.msra.mxu0 0
    %1594 = vmatprep.subr.bf16.mxu0 0
    %1595 = vmatpush1.bf16.msra.mxu0 0
    %1596 = vmatprep.subr.bf16.mxu0 0
    %1597 = vmatpush1.bf16.msra.mxu0 0
    %1598 = vmatprep.subr.bf16.mxu0 0
    %1599 = vmatpush1.bf16.msra.mxu0 0
    %1600 = vmatprep.mubr.bf16.mxu0 0
    %1601 = vmatmul.mubr.bf16.gmra.mrb[0].mxu0 %v1451
    %v1602 = vpop.f32.mrb[0].mxu0
    %v1603 = vadd.f32 0.0, %v1602
    %v1604 = vpop.f32.mrb[0].mxu0
    %v1605 = vadd.f32 0.0, %v1604
    %v1606 = vpop.f32.mrb[0].mxu0
    %v1607 = vpop.f32.mrb[0].mxu0
    %1608 = vdwg.mxu0
    %1609 = vmatprep.subr.bf16.mxu0 %v526
    %1610 = vmatpush1.bf16.msra.mxu0 %v525
    %1611 = vmatprep.subr.bf16.mxu0 %v530
    %1612 = vmatpush1.bf16.msra.mxu0 %v529
    %1613 = vmatprep.subr.bf16.mxu0 %v534
    %1614 = vmatpush1.bf16.msra.mxu0 %v533
    %1615 = vmatprep.subr.bf16.mxu0 %v538
    %1616 = vmatpush1.bf16.msra.mxu0 %v537
    %1617 = vmatprep.subr.bf16.mxu0 %v542
    %1618 = vmatpush1.bf16.msra.mxu0 %v541
    %1619 = vmatprep.subr.bf16.mxu0 %v546
    %1620 = vmatpush1.bf16.msra.mxu0 %v545
    %1621 = vmatprep.subr.bf16.mxu0 %v550
    %1622 = vmatpush1.bf16.msra.mxu0 %v549
    %1623 = vmatprep.subr.bf16.mxu0 %v554
    %1624 = vmatpush1.bf16.msra.mxu0 %v553
    %1625 = vmatprep.subr.bf16.mxu0 0
    %1626 = vmatpush1.bf16.msra.mxu0 0
    %1627 = vmatprep.subr.bf16.mxu0 0
    %1628 = vmatpush1.bf16.msra.mxu0 0
    %1629 = vmatprep.subr.bf16.mxu0 0
    %1630 = vmatpush1.bf16.msra.mxu0 0
    %1631 = vmatprep.subr.bf16.mxu0 0
    %1632 = vmatpush1.bf16.msra.mxu0 0
    %1633 = vmatprep.subr.bf16.mxu0 0
    %1634 = vmatpush1.bf16.msra.mxu0 0
    %1635 = vmatprep.subr.bf16.mxu0 0
    %1636 = vmatpush1.bf16.msra.mxu0 0
    %1637 = vmatprep.subr.bf16.mxu0 0
    %1638 = vmatpush1.bf16.msra.mxu0 0
    %1639 = vmatprep.subr.bf16.mxu0 0
    %1640 = vmatpush1.bf16.msra.mxu0 0
    %1641 = vmatprep.mubr.bf16.mxu0 0
    %1642 = vmatmul.mubr.bf16.gmra.mrb[0].mxu0 %v1451
    %v1643 = vpop.f32.mrb[0].mxu0
    %v1644 = vadd.f32 0.0, %v1643
    %v1645 = vpop.f32.mrb[0].mxu0
    %v1646 = vadd.f32 0.0, %v1645
    %v1647 = vpop.f32.mrb[0].mxu0
    %v1648 = vpop.f32.mrb[0].mxu0
    %1649 = vdwg.mxu0
    %v1650 = vpack.c.bf16 %v1562, %v1562
    %1651 = vmatprep.subr.bf16.mxu0 %v766
    %1652 = vmatpush1.bf16.msra.mxu0 %v765
    %1653 = vmatprep.subr.bf16.mxu0 %v770
    %1654 = vmatpush1.bf16.msra.mxu0 %v769
    %1655 = vmatprep.subr.bf16.mxu0 %v774
    %1656 = vmatpush1.bf16.msra.mxu0 %v773
    %1657 = vmatprep.subr.bf16.mxu0 %v778
    %1658 = vmatpush1.bf16.msra.mxu0 %v777
    %1659 = vmatprep.subr.bf16.mxu0 %v782
    %1660 = vmatpush1.bf16.msra.mxu0 %v781
    %1661 = vmatprep.subr.bf16.mxu0 %v786
    %1662 = vmatpush1.bf16.msra.mxu0 %v785
    %1663 = vmatprep.subr.bf16.mxu0 %v790
    %1664 = vmatpush1.bf16.msra.mxu0 %v789
    %1665 = vmatprep.subr.bf16.mxu0 %v794
    %1666 = vmatpush1.bf16.msra.mxu0 %v793
    %1667 = vmatprep.subr.bf16.mxu0 0
    %1668 = vmatpush1.bf16.msra.mxu0 0
    %1669 = vmatprep.subr.bf16.mxu0 0
    %1670 = vmatpush1.bf16.msra.mxu0 0
    %1671 = vmatprep.subr.bf16.mxu0 0
    %1672 = vmatpush1.bf16.msra.mxu0 0
    %1673 = vmatprep.subr.bf16.mxu0 0
    %1674 = vmatpush1.bf16.msra.mxu0 0
    %1675 = vmatprep.subr.bf16.mxu0 0
    %1676 = vmatpush1.bf16.msra.mxu0 0
    %1677 = vmatprep.subr.bf16.mxu0 0
    %1678 = vmatpush1.bf16.msra.mxu0 0
    %1679 = vmatprep.subr.bf16.mxu0 0
    %1680 = vmatpush1.bf16.msra.mxu0 0
    %1681 = vmatprep.subr.bf16.mxu0 0
    %1682 = vmatpush1.bf16.msra.mxu0 0
    %1683 = vmatprep.mubr.bf16.mxu0 0
    %1684 = vmatmul.mubr.bf16.gmra.mrb[0].mxu0 %v1650
    %v1685 = vpop.f32.mrb[0].mxu0
    %v1686 = vadd.f32 0.0, %v1685
    %v1687 = vpop.f32.mrb[0].mxu0
    %v1688 = vadd.f32 0.0, %v1687
    %v1689 = vpop.f32.mrb[0].mxu0
    %v1690 = vpop.f32.mrb[0].mxu0
    %1691 = vdwg.mxu0
    %1692 = vmatprep.subr.bf16.mxu0 %v768
    %1693 = vmatpush1.bf16.msra.mxu0 %v767
    %1694 = vmatprep.subr.bf16.mxu0 %v772
    %1695 = vmatpush1.bf16.msra.mxu0 %v771
    %1696 = vmatprep.subr.bf16.mxu0 %v776
    %1697 = vmatpush1.bf16.msra.mxu0 %v775
    %1698 = vmatprep.subr.bf16.mxu0 %v780
    %1699 = vmatpush1.bf16.msra.mxu0 %v779
    %1700 = vmatprep.subr.bf16.mxu0 %v784
    %1701 = vmatpush1.bf16.msra.mxu0 %v783
    %1702 = vmatprep.subr.bf16.mxu0 %v788
    %1703 = vmatpush1.bf16.msra.mxu0 %v787
    %1704 = vmatprep.subr.bf16.mxu0 %v792
    %1705 = vmatpush1.bf16.msra.mxu0 %v791
    %1706 = vmatprep.subr.bf16.mxu0 %v796
    %1707 = vmatpush1.bf16.msra.mxu0 %v795
    %1708 = vmatprep.subr.bf16.mxu0 0
    %1709 = vmatpush1.bf16.msra.mxu0 0
    %1710 = vmatprep.subr.bf16.mxu0 0
    %1711 = vmatpush1.bf16.msra.mxu0 0
    %1712 = vmatprep.subr.bf16.mxu0 0
    %1713 = vmatpush1.bf16.msra.mxu0 0
    %1714 = vmatprep.subr.bf16.mxu0 0
    %1715 = vmatpush1.bf16.msra.mxu0 0
    %1716 = vmatprep.subr.bf16.mxu0 0
    %1717 = vmatpush1.bf16.msra.mxu0 0
    %1718 = vmatprep.subr.bf16.mxu0 0
    %1719 = vmatpush1.bf16.msra.mxu0 0
    %1720 = vmatprep.subr.bf16.mxu0 0
    %1721 = vmatpush1.bf16.msra.mxu0 0
    %1722 = vmatprep.subr.bf16.mxu0 0
    %1723 = vmatpush1.bf16.msra.mxu0 0
    %1724 = vmatprep.mubr.bf16.mxu0 0
    %1725 = vmatmul.mubr.bf16.gmra.mrb[0].mxu0 %v1650
    %v1726 = vpop.f32.mrb[0].mxu0
    %v1727 = vadd.f32 0.0, %v1726
    %v1728 = vpop.f32.mrb[0].mxu0
    %v1729 = vadd.f32 0.0, %v1728
    %v1730 = vpop.f32.mrb[0].mxu0
    %v1731 = vpop.f32.mrb[0].mxu0
    %1732 = vdwg.mxu0
    %s1733 = scalar_lea.vmem [#allocation2], 64
    %v1734 = vld [vmem:[%s1733] sm:$0xff]
    %v1735 = vld [vmem:[%s1733 + $0x8] sm:$0xff]
    %v1736 = vld [vmem:[%s1733 + $0x10] sm:$0xff]
    %v1737 = vld [vmem:[%s1733 + $0x18] sm:$0xff]
    %v1738 = vadd.f32 %v1734, %v1603
    %v1739 = vadd.f32 %v1735, %v1605
    %v1740 = vadd.f32 %v1736, %v1644
    %v1741 = vadd.f32 %v1737, %v1646
    %v1742 = vxor.u32 %v1738, 2147483648
    %v1743 = vmul.f32 %v1742, 1.442695
    %v1744 = vpow.pop %v1743
    %v1745 = vadd.f32 %v1744, 1.0
    %v1746 = vrcp.pop %v1745
    %v1747 = vmul.f32 1.0, %v1746
    %v1748 = vxor.u32 %v1739, 2147483648
    %v1749 = vmul.f32 %v1748, 1.442695
    %v1750 = vpow.pop %v1749
    %v1751 = vadd.f32 %v1750, 1.0
    %v1752 = vrcp.pop %v1751
    %v1753 = vmul.f32 1.0, %v1752
    %v1754 = vtanh.pop %v1740
    %v1755 = vxor.u32 %v1741, 2147483648
    %v1756 = vmul.f32 %v1755, 1.442695
    %v1757 = vpow.pop %v1756
    %v1758 = vadd.f32 %v1757, 1.0
    %v1759 = vrcp.pop %v1758
    %v1760 = vmul.f32 1.0, %v1759
    %v1761 = vmul.f32 %v1753, %v1450
    %v1762 = vmul.f32 %v1747, %v1754
    %v1763 = vadd.f32 %v1761, %v1762
    %v1764 = vtanh.pop %v1763
    %v1765 = vmul.f32 %v1760, %v1764
    %v1766 = vsel %vm1567, 1, 0
    %1767 = vset.pattern.permute.xlu0 0
    %1768 = vperm.xlu0 %1767, %v1766
    %v1769 = vpop.permute.xlu0 %1768
    %vm1770 = vcmp.eq.s32.totalorder %v1769, 1
    %v1771 = vsel %vm1770, %v1765, %v1449
    %v1772 = vsel %vm1770, %v1763, %v1450
    %v1773 = vpack.c.bf16 %v1771, %v1771
    %1774 = vmatprep.subr.bf16.mxu0 %v1048
    %1775 = vmatpush1.bf16.msra.mxu0 %v1047
    %1776 = vmatprep.subr.bf16.mxu0 %v1052
    %1777 = vmatpush1.bf16.msra.mxu0 %v1051
    %1778 = vmatprep.subr.bf16.mxu0 %v1056
    %1779 = vmatpush1.bf16.msra.mxu0 %v1055
    %1780 = vmatprep.subr.bf16.mxu0 %v1060
    %1781 = vmatpush1.bf16.msra.mxu0 %v1059
    %1782 = vmatprep.subr.bf16.mxu0 %v1064
    %1783 = vmatpush1.bf16.msra.mxu0 %v1063
    %1784 = vmatprep.subr.bf16.mxu0 %v1068
    %1785 = vmatpush1.bf16.msra.mxu0 %v1067
    %1786 = vmatprep.subr.bf16.mxu0 %v1072
    %1787 = vmatpush1.bf16.msra.mxu0 %v1071
    %1788 = vmatprep.subr.bf16.mxu0 %v1076
    %1789 = vmatpush1.bf16.msra.mxu0 %v1075
    %1790 = vmatprep.subr.bf16.mxu0 0
    %1791 = vmatpush1.bf16.msra.mxu0 0
    %1792 = vmatprep.subr.bf16.mxu0 0
    %1793 = vmatpush1.bf16.msra.mxu0 0
    %1794 = vmatprep.subr.bf16.mxu0 0
    %1795 = vmatpush1.bf16.msra.mxu0 0
    %1796 = vmatprep.subr.bf16.mxu0 0
    %1797 = vmatpush1.bf16.msra.mxu0 0
    %1798 = vmatprep.subr.bf16.mxu0 0
    %1799 = vmatpush1.bf16.msra.mxu0 0
    %1800 = vmatprep.subr.bf16.mxu0 0
    %1801 = vmatpush1.bf16.msra.mxu0 0
    %1802 = vmatprep.subr.bf16.mxu0 0
    %1803 = vmatpush1.bf16.msra.mxu0 0
    %1804 = vmatprep.subr.bf16.mxu0 0
    %1805 = vmatpush1.bf16.msra.mxu0 0
    %1806 = vmatprep.mubr.bf16.mxu0 0
    %1807 = vmatmul.mubr.bf16.gmra.mrb[0].mxu0 %v1773
    %v1808 = vpop.f32.mrb[0].mxu0
    %v1809 = vadd.f32 %v1686, %v1808
    %v1810 = vpop.f32.mrb[0].mxu0
    %v1811 = vadd.f32 %v1688, %v1810
    %v1812 = vpop.f32.mrb[0].mxu0
    %v1813 = vpop.f32.mrb[0].mxu0
    %1814 = vdwg.mxu0
    %1815 = vmatprep.subr.bf16.mxu0 %v1050
    %1816 = vmatpush1.bf16.msra.mxu0 %v1049
    %1817 = vmatprep.subr.bf16.mxu0 %v1054
    %1818 = vmatpush1.bf16.msra.mxu0 %v1053
    %1819 = vmatprep.subr.bf16.mxu0 %v1058
    %1820 = vmatpush1.bf16.msra.mxu0 %v1057
    %1821 = vmatprep.subr.bf16.mxu0 %v1062
    %1822 = vmatpush1.bf16.msra.mxu0 %v1061
    %1823 = vmatprep.subr.bf16.mxu0 %v1066
    %1824 = vmatpush1.bf16.msra.mxu0 %v1065
    %1825 = vmatprep.subr.bf16.mxu0 %v1070
    %1826 = vmatpush1.bf16.msra.mxu0 %v1069
    %1827 = vmatprep.subr.bf16.mxu0 %v1074
    %1828 = vmatpush1.bf16.msra.mxu0 %v1073
    %1829 = vmatprep.subr.bf16.mxu0 %v1078
    %1830 = vmatpush1.bf16.msra.mxu0 %v1077
    %1831 = vmatprep.subr.bf16.mxu0 0
    %1832 = vmatpush1.bf16.msra.mxu0 0
    %1833 = vmatprep.subr.bf16.mxu0 0
    %1834 = vmatpush1.bf16.msra.mxu0 0
    %1835 = vmatprep.subr.bf16.mxu0 0
    %1836 = vmatpush1.bf16.msra.mxu0 0
    %1837 = vmatprep.subr.bf16.mxu0 0
    %1838 = vmatpush1.bf16.msra.mxu0 0
    %1839 = vmatprep.subr.bf16.mxu0 0
    %1840 = vmatpush1.bf16.msra.mxu0 0
    %1841 = vmatprep.subr.bf16.mxu0 0
    %1842 = vmatpush1.bf16.msra.mxu0 0
    %1843 = vmatprep.subr.bf16.mxu0 0
    %1844 = vmatpush1.bf16.msra.mxu0 0
    %1845 = vmatprep.subr.bf16.mxu0 0
    %1846 = vmatpush1.bf16.msra.mxu0 0
    %1847 = vmatprep.mubr.bf16.mxu0 0
    %1848 = vmatmul.mubr.bf16.gmra.mrb[0].mxu0 %v1773
    %v1849 = vpop.f32.mrb[0].mxu0
    %v1850 = vadd.f32 %v1727, %v1849
    %v1851 = vpop.f32.mrb[0].mxu0
    %v1852 = vadd.f32 %v1729, %v1851
    %v1853 = vpop.f32.mrb[0].mxu0
    %v1854 = vpop.f32.mrb[0].mxu0
    %1855 = vdwg.mxu0
    %v1856 = vadd.f32 %v1809, %v1197
    %v1857 = vadd.f32 %v1811, %v1201
    %v1858 = vadd.f32 %v1850, %v1205
    %v1859 = vadd.f32 %v1852, %v1209
    %v1860 = vxor.u32 %v1856, 2147483648
    %v1861 = vmul.f32 %v1860, 1.442695
    %v1862 = vpow.pop %v1861
    %v1863 = vadd.f32 %v1862, 1.0
    %v1864 = vrcp.pop %v1863
    %v1865 = vmul.f32 1.0, %v1864
    %v1866 = vxor.u32 %v1857, 2147483648
    %v1867 = vmul.f32 %v1866, 1.442695
    %v1868 = vpow.pop %v1867
    %v1869 = vadd.f32 %v1868, 1.0
    %v1870 = vrcp.pop %v1869
    %v1871 = vmul.f32 1.0, %v1870
    %v1872 = vtanh.pop %v1858
    %v1873 = vxor.u32 %v1859, 2147483648
    %v1874 = vmul.f32 %v1873, 1.442695
    %v1875 = vpow.pop %v1874
    %v1876 = vadd.f32 %v1875, 1.0
    %v1877 = vrcp.pop %v1876
    %v1878 = vmul.f32 1.0, %v1877
    %v1879 = vmul.f32 %v1871, %v1563
    %v1880 = vmul.f32 %v1865, %v1872
    %v1881 = vadd.f32 %v1879, %v1880
    %v1882 = vtanh.pop %v1881
    %v1883 = vmul.f32 %v1878, %v1882
    %v1884 = vsel %vm1770, %v1883, %v1562
    %v1885 = vsel %vm1770, %v1881, %v1563
    %v1886 = vsel %vm1770, %v1883, 0.0
    %s1887 = scalar_lea.vmem [#allocation3], 16
    %1888 = vst [vmem:[%s1887] sm:$0xff] %v1886
    %vm1889 = vcmp.gt.s32.totalorder %v328, 3
    %1890 = vmatprep.subr.bf16.mxu0 %v524
    %1891 = vmatpush1.bf16.msra.mxu0 %v523
    %1892 = vmatprep.subr.bf16.mxu0 %v528
    %1893 = vmatpush1.bf16.msra.mxu0 %v527
    %1894 = vmatprep.subr.bf16.mxu0 %v532
    %1895 = vmatpush1.bf16.msra.mxu0 %v531
    %1896 = vmatprep.subr.bf16.mxu0 %v536
    %1897 = vmatpush1.bf16.msra.mxu0 %v535
    %1898 = vmatprep.subr.bf16.mxu0 %v540
    %1899 = vmatpush1.bf16.msra.mxu0 %v539
    %1900 = vmatprep.subr.bf16.mxu0 %v544
    %1901 = vmatpush1.bf16.msra.mxu0 %v543
    %1902 = vmatprep.subr.bf16.mxu0 %v548
    %1903 = vmatpush1.bf16.msra.mxu0 %v547
    %1904 = vmatprep.subr.bf16.mxu0 %v552
    %1905 = vmatpush1.bf16.msra.mxu0 %v551
    %1906 = vmatprep.subr.bf16.mxu0 0
    %1907 = vmatpush1.bf16.msra.mxu0 0
    %1908 = vmatprep.subr.bf16.mxu0 0
    %1909 = vmatpush1.bf16.msra.mxu0 0
    %1910 = vmatprep.subr.bf16.mxu0 0
    %1911 = vmatpush1.bf16.msra.mxu0 0
    %1912 = vmatprep.subr.bf16.mxu0 0
    %1913 = vmatpush1.bf16.msra.mxu0 0
    %1914 = vmatprep.subr.bf16.mxu0 0
    %1915 = vmatpush1.bf16.msra.mxu0 0
    %1916 = vmatprep.subr.bf16.mxu0 0
    %1917 = vmatpush1.bf16.msra.mxu0 0
    %1918 = vmatprep.subr.bf16.mxu0 0
    %1919 = vmatpush1.bf16.msra.mxu0 0
    %1920 = vmatprep.subr.bf16.mxu0 0
    %1921 = vmatpush1.bf16.msra.mxu0 0
    %1922 = vmatprep.mubr.bf16.mxu0 0
    %1923 = vmatmul.mubr.bf16.gmra.mrb[0].mxu0 %v1773
    %v1924 = vpop.f32.mrb[0].mxu0
    %v1925 = vadd.f32 0.0, %v1924
    %v1926 = vpop.f32.mrb[0].mxu0
    %v1927 = vadd.f32 0.0, %v1926
    %v1928 = vpop.f32.mrb[0].mxu0
    %v1929 = vpop.f32.mrb[0].mxu0
    %1930 = vdwg.mxu0
    %1931 = vmatprep.subr.bf16.mxu0 %v526
    %1932 = vmatpush1.bf16.msra.mxu0 %v525
    %1933 = vmatprep.subr.bf16.mxu0 %v530
    %1934 = vmatpush1.bf16.msra.mxu0 %v529
    %1935 = vmatprep.subr.bf16.mxu0 %v534
    %1936 = vmatpush1.bf16.msra.mxu0 %v533
    %1937 = vmatprep.subr.bf16.mxu0 %v538
    %1938 = vmatpush1.bf16.msra.mxu0 %v537
    %1939 = vmatprep.subr.bf16.mxu0 %v542
    %1940 = vmatpush1.bf16.msra.mxu0 %v541
    %1941 = vmatprep.subr.bf16.mxu0 %v546
    %1942 = vmatpush1.bf16.msra.mxu0 %v545
    %1943 = vmatprep.subr.bf16.mxu0 %v550
    %1944 = vmatpush1.bf16.msra.mxu0 %v549
    %1945 = vmatprep.subr.bf16.mxu0 %v554
    %1946 = vmatpush1.bf16.msra.mxu0 %v553
    %1947 = vmatprep.subr.bf16.mxu0 0
    %1948 = vmatpush1.bf16.msra.mxu0 0
    %1949 = vmatprep.subr.bf16.mxu0 0
    %1950 = vmatpush1.bf16.msra.mxu0 0
    %1951 = vmatprep.subr.bf16.mxu0 0
    %1952 = vmatpush1.bf16.msra.mxu0 0
    %1953 = vmatprep.subr.bf16.mxu0 0
    %1954 = vmatpush1.bf16.msra.mxu0 0
    %1955 = vmatprep.subr.bf16.mxu0 0
    %1956 = vmatpush1.bf16.msra.mxu0 0
    %1957 = vmatprep.subr.bf16.mxu0 0
    %1958 = vmatpush1.bf16.msra.mxu0 0
    %1959 = vmatprep.subr.bf16.mxu0 0
    %1960 = vmatpush1.bf16.msra.mxu0 0
    %1961 = vmatprep.subr.bf16.mxu0 0
    %1962 = vmatpush1.bf16.msra.mxu0 0
    %1963 = vmatprep.mubr.bf16.mxu0 0
    %1964 = vmatmul.mubr.bf16.gmra.mrb[0].mxu0 %v1773
    %v1965 = vpop.f32.mrb[0].mxu0
    %v1966 = vadd.f32 0.0, %v1965
    %v1967 = vpop.f32.mrb[0].mxu0
    %v1968 = vadd.f32 0.0, %v1967
    %v1969 = vpop.f32.mrb[0].mxu0
    %v1970 = vpop.f32.mrb[0].mxu0
    %1971 = vdwg.mxu0
    %v1972 = vpack.c.bf16 %v1884, %v1884
    %1973 = vmatprep.subr.bf16.mxu0 %v766
    %1974 = vmatpush1.bf16.msra.mxu0 %v765
    %1975 = vmatprep.subr.bf16.mxu0 %v770
    %1976 = vmatpush1.bf16.msra.mxu0 %v769
    %1977 = vmatprep.subr.bf16.mxu0 %v774
    %1978 = vmatpush1.bf16.msra.mxu0 %v773
    %1979 = vmatprep.subr.bf16.mxu0 %v778
    %1980 = vmatpush1.bf16.msra.mxu0 %v777
    %1981 = vmatprep.subr.bf16.mxu0 %v782
    %1982 = vmatpush1.bf16.msra.mxu0 %v781
    %1983 = vmatprep.subr.bf16.mxu0 %v786
    %1984 = vmatpush1.bf16.msra.mxu0 %v785
    %1985 = vmatprep.subr.bf16.mxu0 %v790
    %1986 = vmatpush1.bf16.msra.mxu0 %v789
    %1987 = vmatprep.subr.bf16.mxu0 %v794
    %1988 = vmatpush1.bf16.msra.mxu0 %v793
    %1989 = vmatprep.subr.bf16.mxu0 0
    %1990 = vmatpush1.bf16.msra.mxu0 0
    %1991 = vmatprep.subr.bf16.mxu0 0
    %1992 = vmatpush1.bf16.msra.mxu0 0
    %1993 = vmatprep.subr.bf16.mxu0 0
    %1994 = vmatpush1.bf16.msra.mxu0 0
    %1995 = vmatprep.subr.bf16.mxu0 0
    %1996 = vmatpush1.bf16.msra.mxu0 0
    %1997 = vmatprep.subr.bf16.mxu0 0
    %1998 = vmatpush1.bf16.msra.mxu0 0
    %1999 = vmatprep.subr.bf16.mxu0 0
    %2000 = vmatpush1.bf16.msra.mxu0 0
    %2001 = vmatprep.subr.bf16.mxu0 0
    %2002 = vmatpush1.bf16.msra.mxu0 0
    %2003 = vmatprep.subr.bf16.mxu0 0
    %2004 = vmatpush1.bf16.msra.mxu0 0
    %2005 = vmatprep.mubr.bf16.mxu0 0
    %2006 = vmatmul.mubr.bf16.gmra.mrb[0].mxu0 %v1972
    %v2007 = vpop.f32.mrb[0].mxu0
    %v2008 = vadd.f32 0.0, %v2007
    %v2009 = vpop.f32.mrb[0].mxu0
    %v2010 = vadd.f32 0.0, %v2009
    %v2011 = vpop.f32.mrb[0].mxu0
    %v2012 = vpop.f32.mrb[0].mxu0
    %2013 = vdwg.mxu0
    %2014 = vmatprep.subr.bf16.mxu0 %v768
    %2015 = vmatpush1.bf16.msra.mxu0 %v767
    %2016 = vmatprep.subr.bf16.mxu0 %v772
    %2017 = vmatpush1.bf16.msra.mxu0 %v771
    %2018 = vmatprep.subr.bf16.mxu0 %v776
    %2019 = vmatpush1.bf16.msra.mxu0 %v775
    %2020 = vmatprep.subr.bf16.mxu0 %v780
    %2021 = vmatpush1.bf16.msra.mxu0 %v779
    %2022 = vmatprep.subr.bf16.mxu0 %v784
    %2023 = vmatpush1.bf16.msra.mxu0 %v783
    %2024 = vmatprep.subr.bf16.mxu0 %v788
    %2025 = vmatpush1.bf16.msra.mxu0 %v787
    %2026 = vmatprep.subr.bf16.mxu0 %v792
    %2027 = vmatpush1.bf16.msra.mxu0 %v791
    %2028 = vmatprep.subr.bf16.mxu0 %v796
    %2029 = vmatpush1.bf16.msra.mxu0 %v795
    %2030 = vmatprep.subr.bf16.mxu0 0
    %2031 = vmatpush1.bf16.msra.mxu0 0
    %2032 = vmatprep.subr.bf16.mxu0 0
    %2033 = vmatpush1.bf16.msra.mxu0 0
    %2034 = vmatprep.subr.bf16.mxu0 0
    %2035 = vmatpush1.bf16.msra.mxu0 0
    %2036 = vmatprep.subr.bf16.mxu0 0
    %2037 = vmatpush1.bf16.msra.mxu0 0
    %2038 = vmatprep.subr.bf16.mxu0 0
    %2039 = vmatpush1.bf16.msra.mxu0 0
    %2040 = vmatprep.subr.bf16.mxu0 0
    %2041 = vmatpush1.bf16.msra.mxu0 0
    %2042 = vmatprep.subr.bf16.mxu0 0
    %2043 = vmatpush1.bf16.msra.mxu0 0
    %2044 = vmatprep.subr.bf16.mxu0 0
    %2045 = vmatpush1.bf16.msra.mxu0 0
    %2046 = vmatprep.mubr.bf16.mxu0 0
    %2047 = vmatmul.mubr.bf16.gmra.mrb[0].mxu0 %v1972
    %v2048 = vpop.f32.mrb[0].mxu0
    %v2049 = vadd.f32 0.0, %v2048
    %v2050 = vpop.f32.mrb[0].mxu0
    %v2051 = vadd.f32 0.0, %v2050
    %v2052 = vpop.f32.mrb[0].mxu0
    %v2053 = vpop.f32.mrb[0].mxu0
    %2054 = vdwg.mxu0
    %s2055 = scalar_lea.vmem [#allocation2], 96
    %v2056 = vld [vmem:[%s2055] sm:$0xff]
    %v2057 = vld [vmem:[%s2055 + $0x8] sm:$0xff]
    %v2058 = vld [vmem:[%s2055 + $0x10] sm:$0xff]
    %v2059 = vld [vmem:[%s2055 + $0x18] sm:$0xff]
    %v2060 = vadd.f32 %v2056, %v1925
    %v2061 = vadd.f32 %v2057, %v1927
    %v2062 = vadd.f32 %v2058, %v1966
    %v2063 = vadd.f32 %v2059, %v1968
    %v2064 = vxor.u32 %v2060, 2147483648
    %v2065 = vmul.f32 %v2064, 1.442695
    %v2066 = vpow.pop %v2065
    %v2067 = vadd.f32 %v2066, 1.0
    %v2068 = vrcp.pop %v2067
    %v2069 = vmul.f32 1.0, %v2068
    %v2070 = vxor.u32 %v2061, 2147483648
    %v2071 = vmul.f32 %v2070, 1.442695
    %v2072 = vpow.pop %v2071
    %v2073 = vadd.f32 %v2072, 1.0
    %v2074 = vrcp.pop %v2073
    %v2075 = vmul.f32 1.0, %v2074
    %v2076 = vtanh.pop %v2062
    %v2077 = vxor.u32 %v2063, 2147483648
    %v2078 = vmul.f32 %v2077, 1.442695
    %v2079 = vpow.pop %v2078
    %v2080 = vadd.f32 %v2079, 1.0
    %v2081 = vrcp.pop %v2080
    %v2082 = vmul.f32 1.0, %v2081
    %v2083 = vmul.f32 %v2075, %v1772
    %v2084 = vmul.f32 %v2069, %v2076
    %v2085 = vadd.f32 %v2083, %v2084
    %v2086 = vtanh.pop %v2085
    %v2087 = vmul.f32 %v2082, %v2086
    %v2088 = vsel %vm1889, 1, 0
    %2089 = vset.pattern.permute.xlu0 0
    %2090 = vperm.xlu0 %2089, %v2088
    %v2091 = vpop.permute.xlu0 %2090
    %vm2092 = vcmp.eq.s32.totalorder %v2091, 1
    %v2093 = vsel %vm2092, %v2087, %v1771
    %v2094 = vsel %vm2092, %v2085, %v1772
    %v2095 = vpack.c.bf16 %v2093, %v2093
    %2096 = vmatprep.subr.bf16.mxu0 %v1048
    %2097 = vmatpush1.bf16.msra.mxu0 %v1047
    %2098 = vmatprep.subr.bf16.mxu0 %v1052
    %2099 = vmatpush1.bf16.msra.mxu0 %v1051
    %2100 = vmatprep.subr.bf16.mxu0 %v1056
    %2101 = vmatpush1.bf16.msra.mxu0 %v1055
    %2102 = vmatprep.subr.bf16.mxu0 %v1060
    %2103 = vmatpush1.bf16.msra.mxu0 %v1059
    %2104 = vmatprep.subr.bf16.mxu0 %v1064
    %2105 = vmatpush1.bf16.msra.mxu0 %v1063
    %2106 = vmatprep.subr.bf16.mxu0 %v1068
    %2107 = vmatpush1.bf16.msra.mxu0 %v1067
    %2108 = vmatprep.subr.bf16.mxu0 %v1072
    %2109 = vmatpush1.bf16.msra.mxu0 %v1071
    %2110 = vmatprep.subr.bf16.mxu0 %v1076
    %2111 = vmatpush1.bf16.msra.mxu0 %v1075
    %2112 = vmatprep.subr.bf16.mxu0 0
    %2113 = vmatpush1.bf16.msra.mxu0 0
    %2114 = vmatprep.subr.bf16.mxu0 0
    %2115 = vmatpush1.bf16.msra.mxu0 0
    %2116 = vmatprep.subr.bf16.mxu0 0
    %2117 = vmatpush1.bf16.msra.mxu0 0
    %2118 = vmatprep.subr.bf16.mxu0 0
    %2119 = vmatpush1.bf16.msra.mxu0 0
    %2120 = vmatprep.subr.bf16.mxu0 0
    %2121 = vmatpush1.bf16.msra.mxu0 0
    %2122 = vmatprep.subr.bf16.mxu0 0
    %2123 = vmatpush1.bf16.msra.mxu0 0
    %2124 = vmatprep.subr.bf16.mxu0 0
    %2125 = vmatpush1.bf16.msra.mxu0 0
    %2126 = vmatprep.subr.bf16.mxu0 0
    %2127 = vmatpush1.bf16.msra.mxu0 0
    %2128 = vmatprep.mubr.bf16.mxu0 0
    %2129 = vmatmul.mubr.bf16.gmra.mrb[0].mxu0 %v2095
    %v2130 = vpop.f32.mrb[0].mxu0
    %v2131 = vadd.f32 %v2008, %v2130
    %v2132 = vpop.f32.mrb[0].mxu0
    %v2133 = vadd.f32 %v2010, %v2132
    %v2134 = vpop.f32.mrb[0].mxu0
    %v2135 = vpop.f32.mrb[0].mxu0
    %2136 = vdwg.mxu0
    %2137 = vmatprep.subr.bf16.mxu0 %v1050
    %2138 = vmatpush1.bf16.msra.mxu0 %v1049
    %2139 = vmatprep.subr.bf16.mxu0 %v1054
    %2140 = vmatpush1.bf16.msra.mxu0 %v1053
    %2141 = vmatprep.subr.bf16.mxu0 %v1058
    %2142 = vmatpush1.bf16.msra.mxu0 %v1057
    %2143 = vmatprep.subr.bf16.mxu0 %v1062
    %2144 = vmatpush1.bf16.msra.mxu0 %v1061
    %2145 = vmatprep.subr.bf16.mxu0 %v1066
    %2146 = vmatpush1.bf16.msra.mxu0 %v1065
    %2147 = vmatprep.subr.bf16.mxu0 %v1070
    %2148 = vmatpush1.bf16.msra.mxu0 %v1069
    %2149 = vmatprep.subr.bf16.mxu0 %v1074
    %2150 = vmatpush1.bf16.msra.mxu0 %v1073
    %2151 = vmatprep.subr.bf16.mxu0 %v1078
    %2152 = vmatpush1.bf16.msra.mxu0 %v1077
    %2153 = vmatprep.subr.bf16.mxu0 0
    %2154 = vmatpush1.bf16.msra.mxu0 0
    %2155 = vmatprep.subr.bf16.mxu0 0
    %2156 = vmatpush1.bf16.msra.mxu0 0
    %2157 = vmatprep.subr.bf16.mxu0 0
    %2158 = vmatpush1.bf16.msra.mxu0 0
    %2159 = vmatprep.subr.bf16.mxu0 0
    %2160 = vmatpush1.bf16.msra.mxu0 0
    %2161 = vmatprep.subr.bf16.mxu0 0
    %2162 = vmatpush1.bf16.msra.mxu0 0
    %2163 = vmatprep.subr.bf16.mxu0 0
    %2164 = vmatpush1.bf16.msra.mxu0 0
    %2165 = vmatprep.subr.bf16.mxu0 0
    %2166 = vmatpush1.bf16.msra.mxu0 0
    %2167 = vmatprep.subr.bf16.mxu0 0
    %2168 = vmatpush1.bf16.msra.mxu0 0
    %2169 = vmatprep.mubr.bf16.mxu0 0
    %2170 = vmatmul.mubr.bf16.gmra.mrb[0].mxu0 %v2095
    %v2171 = vpop.f32.mrb[0].mxu0
    %v2172 = vadd.f32 %v2049, %v2171
    %v2173 = vpop.f32.mrb[0].mxu0
    %v2174 = vadd.f32 %v2051, %v2173
    %v2175 = vpop.f32.mrb[0].mxu0
    %v2176 = vpop.f32.mrb[0].mxu0
    %2177 = vdwg.mxu0
    %v2178 = vadd.f32 %v2131, %v1197
    %v2179 = vadd.f32 %v2133, %v1201
    %v2180 = vadd.f32 %v2172, %v1205
    %v2181 = vadd.f32 %v2174, %v1209
    %v2182 = vxor.u32 %v2178, 2147483648
    %v2183 = vmul.f32 %v2182, 1.442695
    %v2184 = vpow.pop %v2183
    %v2185 = vadd.f32 %v2184, 1.0
    %v2186 = vrcp.pop %v2185
    %v2187 = vmul.f32 1.0, %v2186
    %v2188 = vxor.u32 %v2179, 2147483648
    %v2189 = vmul.f32 %v2188, 1.442695
    %v2190 = vpow.pop %v2189
    %v2191 = vadd.f32 %v2190, 1.0
    %v2192 = vrcp.pop %v2191
    %v2193 = vmul.f32 1.0, %v2192
    %v2194 = vtanh.pop %v2180
    %v2195 = vxor.u32 %v2181, 2147483648
    %v2196 = vmul.f32 %v2195, 1.442695
    %v2197 = vpow.pop %v2196
    %v2198 = vadd.f32 %v2197, 1.0
    %v2199 = vrcp.pop %v2198
    %v2200 = vmul.f32 1.0, %v2199
    %v2201 = vmul.f32 %v2193, %v1885
    %v2202 = vmul.f32 %v2187, %v2194
    %v2203 = vadd.f32 %v2201, %v2202
    %v2204 = vtanh.pop %v2203
    %v2205 = vmul.f32 %v2200, %v2204
    %v2206 = vsel %vm2092, %v2205, %v1884
    %v2207 = vsel %vm2092, %v2203, %v1885
    %v2208 = vsel %vm2092, %v2205, 0.0
    %s2209 = scalar_lea.vmem [#allocation3], 24
    %2210 = vst [vmem:[%s2209] sm:$0xff] %v2208
    %vm2211 = vcmp.gt.s32.totalorder %v328, 4
    %2212 = vmatprep.subr.bf16.mxu0 %v524
    %2213 = vmatpush1.bf16.msra.mxu0 %v523
    %2214 = vmatprep.subr.bf16.mxu0 %v528
    %2215 = vmatpush1.bf16.msra.mxu0 %v527
    %2216 = vmatprep.subr.bf16.mxu0 %v532
    %2217 = vmatpush1.bf16.msra.mxu0 %v531
    %2218 = vmatprep.subr.bf16.mxu0 %v536
    %2219 = vmatpush1.bf16.msra.mxu0 %v535
    %2220 = vmatprep.subr.bf16.mxu0 %v540
    %2221 = vmatpush1.bf16.msra.mxu0 %v539
    %2222 = vmatprep.subr.bf16.mxu0 %v544
    %2223 = vmatpush1.bf16.msra.mxu0 %v543
    %2224 = vmatprep.subr.bf16.mxu0 %v548
    %2225 = vmatpush1.bf16.msra.mxu0 %v547
    %2226 = vmatprep.subr.bf16.mxu0 %v552
    %2227 = vmatpush1.bf16.msra.mxu0 %v551
    %2228 = vmatprep.subr.bf16.mxu0 0
    %2229 = vmatpush1.bf16.msra.mxu0 0
    %2230 = vmatprep.subr.bf16.mxu0 0
    %2231 = vmatpush1.bf16.msra.mxu0 0
    %2232 = vmatprep.subr.bf16.mxu0 0
    %2233 = vmatpush1.bf16.msra.mxu0 0
    %2234 = vmatprep.subr.bf16.mxu0 0
    %2235 = vmatpush1.bf16.msra.mxu0 0
    %2236 = vmatprep.subr.bf16.mxu0 0
    %2237 = vmatpush1.bf16.msra.mxu0 0
    %2238 = vmatprep.subr.bf16.mxu0 0
    %2239 = vmatpush1.bf16.msra.mxu0 0
    %2240 = vmatprep.subr.bf16.mxu0 0
    %2241 = vmatpush1.bf16.msra.mxu0 0
    %2242 = vmatprep.subr.bf16.mxu0 0
    %2243 = vmatpush1.bf16.msra.mxu0 0
    %2244 = vmatprep.mubr.bf16.mxu0 0
    %2245 = vmatmul.mubr.bf16.gmra.mrb[0].mxu0 %v2095
    %v2246 = vpop.f32.mrb[0].mxu0
    %v2247 = vadd.f32 0.0, %v2246
    %v2248 = vpop.f32.mrb[0].mxu0
    %v2249 = vadd.f32 0.0, %v2248
    %v2250 = vpop.f32.mrb[0].mxu0
    %v2251 = vpop.f32.mrb[0].mxu0
    %2252 = vdwg.mxu0
    %2253 = vmatprep.subr.bf16.mxu0 %v526
    %2254 = vmatpush1.bf16.msra.mxu0 %v525
    %2255 = vmatprep.subr.bf16.mxu0 %v530
    %2256 = vmatpush1.bf16.msra.mxu0 %v529
    %2257 = vmatprep.subr.bf16.mxu0 %v534
    %2258 = vmatpush1.bf16.msra.mxu0 %v533
    %2259 = vmatprep.subr.bf16.mxu0 %v538
    %2260 = vmatpush1.bf16.msra.mxu0 %v537
    %2261 = vmatprep.subr.bf16.mxu0 %v542
    %2262 = vmatpush1.bf16.msra.mxu0 %v541
    %2263 = vmatprep.subr.bf16.mxu0 %v546
    %2264 = vmatpush1.bf16.msra.mxu0 %v545
    %2265 = vmatprep.subr.bf16.mxu0 %v550
    %2266 = vmatpush1.bf16.msra.mxu0 %v549
    %2267 = vmatprep.subr.bf16.mxu0 %v554
    %2268 = vmatpush1.bf16.msra.mxu0 %v553
    %2269 = vmatprep.subr.bf16.mxu0 0
    %2270 = vmatpush1.bf16.msra.mxu0 0
    %2271 = vmatprep.subr.bf16.mxu0 0
    %2272 = vmatpush1.bf16.msra.mxu0 0
    %2273 = vmatprep.subr.bf16.mxu0 0
    %2274 = vmatpush1.bf16.msra.mxu0 0
    %2275 = vmatprep.subr.bf16.mxu0 0
    %2276 = vmatpush1.bf16.msra.mxu0 0
    %2277 = vmatprep.subr.bf16.mxu0 0
    %2278 = vmatpush1.bf16.msra.mxu0 0
    %2279 = vmatprep.subr.bf16.mxu0 0
    %2280 = vmatpush1.bf16.msra.mxu0 0
    %2281 = vmatprep.subr.bf16.mxu0 0
    %2282 = vmatpush1.bf16.msra.mxu0 0
    %2283 = vmatprep.subr.bf16.mxu0 0
    %2284 = vmatpush1.bf16.msra.mxu0 0
    %2285 = vmatprep.mubr.bf16.mxu0 0
    %2286 = vmatmul.mubr.bf16.gmra.mrb[0].mxu0 %v2095
    %v2287 = vpop.f32.mrb[0].mxu0
    %v2288 = vadd.f32 0.0, %v2287
    %v2289 = vpop.f32.mrb[0].mxu0
    %v2290 = vadd.f32 0.0, %v2289
    %v2291 = vpop.f32.mrb[0].mxu0
    %v2292 = vpop.f32.mrb[0].mxu0
    %2293 = vdwg.mxu0
    %v2294 = vpack.c.bf16 %v2206, %v2206
    %2295 = vmatprep.subr.bf16.mxu0 %v766
    %2296 = vmatpush1.bf16.msra.mxu0 %v765
    %2297 = vmatprep.subr.bf16.mxu0 %v770
    %2298 = vmatpush1.bf16.msra.mxu0 %v769
    %2299 = vmatprep.subr.bf16.mxu0 %v774
    %2300 = vmatpush1.bf16.msra.mxu0 %v773
    %2301 = vmatprep.subr.bf16.mxu0 %v778
    %2302 = vmatpush1.bf16.msra.mxu0 %v777
    %2303 = vmatprep.subr.bf16.mxu0 %v782
    %2304 = vmatpush1.bf16.msra.mxu0 %v781
    %2305 = vmatprep.subr.bf16.mxu0 %v786
    %2306 = vmatpush1.bf16.msra.mxu0 %v785
    %2307 = vmatprep.subr.bf16.mxu0 %v790
    %2308 = vmatpush1.bf16.msra.mxu0 %v789
    %2309 = vmatprep.subr.bf16.mxu0 %v794
    %2310 = vmatpush1.bf16.msra.mxu0 %v793
    %2311 = vmatprep.subr.bf16.mxu0 0
    %2312 = vmatpush1.bf16.msra.mxu0 0
    %2313 = vmatprep.subr.bf16.mxu0 0
    %2314 = vmatpush1.bf16.msra.mxu0 0
    %2315 = vmatprep.subr.bf16.mxu0 0
    %2316 = vmatpush1.bf16.msra.mxu0 0
    %2317 = vmatprep.subr.bf16.mxu0 0
    %2318 = vmatpush1.bf16.msra.mxu0 0
    %2319 = vmatprep.subr.bf16.mxu0 0
    %2320 = vmatpush1.bf16.msra.mxu0 0
    %2321 = vmatprep.subr.bf16.mxu0 0
    %2322 = vmatpush1.bf16.msra.mxu0 0
    %2323 = vmatprep.subr.bf16.mxu0 0
    %2324 = vmatpush1.bf16.msra.mxu0 0
    %2325 = vmatprep.subr.bf16.mxu0 0
    %2326 = vmatpush1.bf16.msra.mxu0 0
    %2327 = vmatprep.mubr.bf16.mxu0 0
    %2328 = vmatmul.mubr.bf16.gmra.mrb[0].mxu0 %v2294
    %v2329 = vpop.f32.mrb[0].mxu0
    %v2330 = vadd.f32 0.0, %v2329
    %v2331 = vpop.f32.mrb[0].mxu0
    %v2332 = vadd.f32 0.0, %v2331
    %v2333 = vpop.f32.mrb[0].mxu0
    %v2334 = vpop.f32.mrb[0].mxu0
    %2335 = vdwg.mxu0
    %2336 = vmatprep.subr.bf16.mxu0 %v768
    %2337 = vmatpush1.bf16.msra.mxu0 %v767
    %2338 = vmatprep.subr.bf16.mxu0 %v772
    %2339 = vmatpush1.bf16.msra.mxu0 %v771
    %2340 = vmatprep.subr.bf16.mxu0 %v776
    %2341 = vmatpush1.bf16.msra.mxu0 %v775
    %2342 = vmatprep.subr.bf16.mxu0 %v780
    %2343 = vmatpush1.bf16.msra.mxu0 %v779
    %2344 = vmatprep.subr.bf16.mxu0 %v784
    %2345 = vmatpush1.bf16.msra.mxu0 %v783
    %2346 = vmatprep.subr.bf16.mxu0 %v788
    %2347 = vmatpush1.bf16.msra.mxu0 %v787
    %2348 = vmatprep.subr.bf16.mxu0 %v792
    %2349 = vmatpush1.bf16.msra.mxu0 %v791
    %2350 = vmatprep.subr.bf16.mxu0 %v796
    %2351 = vmatpush1.bf16.msra.mxu0 %v795
    %2352 = vmatprep.subr.bf16.mxu0 0
    %2353 = vmatpush1.bf16.msra.mxu0 0
    %2354 = vmatprep.subr.bf16.mxu0 0
    %2355 = vmatpush1.bf16.msra.mxu0 0
    %2356 = vmatprep.subr.bf16.mxu0 0
    %2357 = vmatpush1.bf16.msra.mxu0 0
    %2358 = vmatprep.subr.bf16.mxu0 0
    %2359 = vmatpush1.bf16.msra.mxu0 0
    %2360 = vmatprep.subr.bf16.mxu0 0
    %2361 = vmatpush1.bf16.msra.mxu0 0
    %2362 = vmatprep.subr.bf16.mxu0 0
    %2363 = vmatpush1.bf16.msra.mxu0 0
    %2364 = vmatprep.subr.bf16.mxu0 0
    %2365 = vmatpush1.bf16.msra.mxu0 0
    %2366 = vmatprep.subr.bf16.mxu0 0
    %2367 = vmatpush1.bf16.msra.mxu0 0
    %2368 = vmatprep.mubr.bf16.mxu0 0
    %2369 = vmatmul.mubr.bf16.gmra.mrb[0].mxu0 %v2294
    %v2370 = vpop.f32.mrb[0].mxu0
    %v2371 = vadd.f32 0.0, %v2370
    %v2372 = vpop.f32.mrb[0].mxu0
    %v2373 = vadd.f32 0.0, %v2372
    %v2374 = vpop.f32.mrb[0].mxu0
    %v2375 = vpop.f32.mrb[0].mxu0
    %2376 = vdwg.mxu0
    %s2377 = scalar_lea.vmem [#allocation2], 128
    %v2378 = vld [vmem:[%s2377] sm:$0xff]
    %v2379 = vld [vmem:[%s2377 + $0x8] sm:$0xff]
    %v2380 = vld [vmem:[%s2377 + $0x10] sm:$0xff]
    %v2381 = vld [vmem:[%s2377 + $0x18] sm:$0xff]
    %v2382 = vadd.f32 %v2378, %v2247
    %v2383 = vadd.f32 %v2379, %v2249
    %v2384 = vadd.f32 %v2380, %v2288
    %v2385 = vadd.f32 %v2381, %v2290
    %v2386 = vxor.u32 %v2382, 2147483648
    %v2387 = vmul.f32 %v2386, 1.442695
    %v2388 = vpow.pop %v2387
    %v2389 = vadd.f32 %v2388, 1.0
    %v2390 = vrcp.pop %v2389
    %v2391 = vmul.f32 1.0, %v2390
    %v2392 = vxor.u32 %v2383, 2147483648
    %v2393 = vmul.f32 %v2392, 1.442695
    %v2394 = vpow.pop %v2393
    %v2395 = vadd.f32 %v2394, 1.0
    %v2396 = vrcp.pop %v2395
    %v2397 = vmul.f32 1.0, %v2396
    %v2398 = vtanh.pop %v2384
    %v2399 = vxor.u32 %v2385, 2147483648
    %v2400 = vmul.f32 %v2399, 1.442695
    %v2401 = vpow.pop %v2400
    %v2402 = vadd.f32 %v2401, 1.0
    %v2403 = vrcp.pop %v2402
    %v2404 = vmul.f32 1.0, %v2403
    %v2405 = vmul.f32 %v2397, %v2094
    %v2406 = vmul.f32 %v2391, %v2398
    %v2407 = vadd.f32 %v2405, %v2406
    %v2408 = vtanh.pop %v2407
    %v2409 = vmul.f32 %v2404, %v2408
    %v2410 = vsel %vm2211, 1, 0
    %2411 = vset.pattern.permute.xlu0 0
    %2412 = vperm.xlu0 %2411, %v2410
    %v2413 = vpop.permute.xlu0 %2412
    %vm2414 = vcmp.eq.s32.totalorder %v2413, 1
    %v2415 = vsel %vm2414, %v2409, %v2093
    %v2416 = vsel %vm2414, %v2407, %v2094
    %v2417 = vpack.c.bf16 %v2415, %v2415
    %2418 = vmatprep.subr.bf16.mxu0 %v1048
    %2419 = vmatpush1.bf16.msra.mxu0 %v1047
    %2420 = vmatprep.subr.bf16.mxu0 %v1052
    %2421 = vmatpush1.bf16.msra.mxu0 %v1051
    %2422 = vmatprep.subr.bf16.mxu0 %v1056
    %2423 = vmatpush1.bf16.msra.mxu0 %v1055
    %2424 = vmatprep.subr.bf16.mxu0 %v1060
    %2425 = vmatpush1.bf16.msra.mxu0 %v1059
    %2426 = vmatprep.subr.bf16.mxu0 %v1064
    %2427 = vmatpush1.bf16.msra.mxu0 %v1063
    %2428 = vmatprep.subr.bf16.mxu0 %v1068
    %2429 = vmatpush1.bf16.msra.mxu0 %v1067
    %2430 = vmatprep.subr.bf16.mxu0 %v1072
    %2431 = vmatpush1.bf16.msra.mxu0 %v1071
    %2432 = vmatprep.subr.bf16.mxu0 %v1076
    %2433 = vmatpush1.bf16.msra.mxu0 %v1075
    %2434 = vmatprep.subr.bf16.mxu0 0
    %2435 = vmatpush1.bf16.msra.mxu0 0
    %2436 = vmatprep.subr.bf16.mxu0 0
    %2437 = vmatpush1.bf16.msra.mxu0 0
    %2438 = vmatprep.subr.bf16.mxu0 0
    %2439 = vmatpush1.bf16.msra.mxu0 0
    %2440 = vmatprep.subr.bf16.mxu0 0
    %2441 = vmatpush1.bf16.msra.mxu0 0
    %2442 = vmatprep.subr.bf16.mxu0 0
    %2443 = vmatpush1.bf16.msra.mxu0 0
    %2444 = vmatprep.subr.bf16.mxu0 0
    %2445 = vmatpush1.bf16.msra.mxu0 0
    %2446 = vmatprep.subr.bf16.mxu0 0
    %2447 = vmatpush1.bf16.msra.mxu0 0
    %2448 = vmatprep.subr.bf16.mxu0 0
    %2449 = vmatpush1.bf16.msra.mxu0 0
    %2450 = vmatprep.mubr.bf16.mxu0 0
    %2451 = vmatmul.mubr.bf16.gmra.mrb[0].mxu0 %v2417
    %v2452 = vpop.f32.mrb[0].mxu0
    %v2453 = vadd.f32 %v2330, %v2452
    %v2454 = vpop.f32.mrb[0].mxu0
    %v2455 = vadd.f32 %v2332, %v2454
    %v2456 = vpop.f32.mrb[0].mxu0
    %v2457 = vpop.f32.mrb[0].mxu0
    %2458 = vdwg.mxu0
    %2459 = vmatprep.subr.bf16.mxu0 %v1050
    %2460 = vmatpush1.bf16.msra.mxu0 %v1049
    %2461 = vmatprep.subr.bf16.mxu0 %v1054
    %2462 = vmatpush1.bf16.msra.mxu0 %v1053
    %2463 = vmatprep.subr.bf16.mxu0 %v1058
    %2464 = vmatpush1.bf16.msra.mxu0 %v1057
    %2465 = vmatprep.subr.bf16.mxu0 %v1062
    %2466 = vmatpush1.bf16.msra.mxu0 %v1061
    %2467 = vmatprep.subr.bf16.mxu0 %v1066
    %2468 = vmatpush1.bf16.msra.mxu0 %v1065
    %2469 = vmatprep.subr.bf16.mxu0 %v1070
    %2470 = vmatpush1.bf16.msra.mxu0 %v1069
    %2471 = vmatprep.subr.bf16.mxu0 %v1074
    %2472 = vmatpush1.bf16.msra.mxu0 %v1073
    %2473 = vmatprep.subr.bf16.mxu0 %v1078
    %2474 = vmatpush1.bf16.msra.mxu0 %v1077
    %2475 = vmatprep.subr.bf16.mxu0 0
    %2476 = vmatpush1.bf16.msra.mxu0 0
    %2477 = vmatprep.subr.bf16.mxu0 0
    %2478 = vmatpush1.bf16.msra.mxu0 0
    %2479 = vmatprep.subr.bf16.mxu0 0
    %2480 = vmatpush1.bf16.msra.mxu0 0
    %2481 = vmatprep.subr.bf16.mxu0 0
    %2482 = vmatpush1.bf16.msra.mxu0 0
    %2483 = vmatprep.subr.bf16.mxu0 0
    %2484 = vmatpush1.bf16.msra.mxu0 0
    %2485 = vmatprep.subr.bf16.mxu0 0
    %2486 = vmatpush1.bf16.msra.mxu0 0
    %2487 = vmatprep.subr.bf16.mxu0 0
    %2488 = vmatpush1.bf16.msra.mxu0 0
    %2489 = vmatprep.subr.bf16.mxu0 0
    %2490 = vmatpush1.bf16.msra.mxu0 0
    %2491 = vmatprep.mubr.bf16.mxu0 0
    %2492 = vmatmul.mubr.bf16.gmra.mrb[0].mxu0 %v2417
    %v2493 = vpop.f32.mrb[0].mxu0
    %v2494 = vadd.f32 %v2371, %v2493
    %v2495 = vpop.f32.mrb[0].mxu0
    %v2496 = vadd.f32 %v2373, %v2495
    %v2497 = vpop.f32.mrb[0].mxu0
    %v2498 = vpop.f32.mrb[0].mxu0
    %2499 = vdwg.mxu0
    %v2500 = vadd.f32 %v2453, %v1197
    %v2501 = vadd.f32 %v2455, %v1201
    %v2502 = vadd.f32 %v2494, %v1205
    %v2503 = vadd.f32 %v2496, %v1209
    %v2504 = vxor.u32 %v2500, 2147483648
    %v2505 = vmul.f32 %v2504, 1.442695
    %v2506 = vpow.pop %v2505
    %v2507 = vadd.f32 %v2506, 1.0
    %v2508 = vrcp.pop %v2507
    %v2509 = vmul.f32 1.0, %v2508
    %v2510 = vxor.u32 %v2501, 2147483648
    %v2511 = vmul.f32 %v2510, 1.442695
    %v2512 = vpow.pop %v2511
    %v2513 = vadd.f32 %v2512, 1.0
    %v2514 = vrcp.pop %v2513
    %v2515 = vmul.f32 1.0, %v2514
    %v2516 = vtanh.pop %v2502
    %v2517 = vxor.u32 %v2503, 2147483648
    %v2518 = vmul.f32 %v2517, 1.442695
    %v2519 = vpow.pop %v2518
    %v2520 = vadd.f32 %v2519, 1.0
    %v2521 = vrcp.pop %v2520
    %v2522 = vmul.f32 1.0, %v2521
    %v2523 = vmul.f32 %v2515, %v2207
    %v2524 = vmul.f32 %v2509, %v2516
    %v2525 = vadd.f32 %v2523, %v2524
    %v2526 = vtanh.pop %v2525
    %v2527 = vmul.f32 %v2522, %v2526
    %v2528 = vsel %vm2414, %v2527, %v2206
    %v2529 = vsel %vm2414, %v2525, %v2207
    %v2530 = vsel %vm2414, %v2527, 0.0
    %s2531 = scalar_lea.vmem [#allocation3], 32
    %2532 = vst [vmem:[%s2531] sm:$0xff] %v2530
    %vm2533 = vcmp.gt.s32.totalorder %v328, 5
    %2534 = vmatprep.subr.bf16.mxu0 %v524
    %2535 = vmatpush1.bf16.msra.mxu0 %v523
    %2536 = vmatprep.subr.bf16.mxu0 %v528
    %2537 = vmatpush1.bf16.msra.mxu0 %v527
    %2538 = vmatprep.subr.bf16.mxu0 %v532
    %2539 = vmatpush1.bf16.msra.mxu0 %v531
    %2540 = vmatprep.subr.bf16.mxu0 %v536
    %2541 = vmatpush1.bf16.msra.mxu0 %v535
    %2542 = vmatprep.subr.bf16.mxu0 %v540
    %2543 = vmatpush1.bf16.msra.mxu0 %v539
    %2544 = vmatprep.subr.bf16.mxu0 %v544
    %2545 = vmatpush1.bf16.msra.mxu0 %v543
    %2546 = vmatprep.subr.bf16.mxu0 %v548
    %2547 = vmatpush1.bf16.msra.mxu0 %v547
    %2548 = vmatprep.subr.bf16.mxu0 %v552
    %2549 = vmatpush1.bf16.msra.mxu0 %v551
    %2550 = vmatprep.subr.bf16.mxu0 0
    %2551 = vmatpush1.bf16.msra.mxu0 0
    %2552 = vmatprep.subr.bf16.mxu0 0
    %2553 = vmatpush1.bf16.msra.mxu0 0
    %2554 = vmatprep.subr.bf16.mxu0 0
    %2555 = vmatpush1.bf16.msra.mxu0 0
    %2556 = vmatprep.subr.bf16.mxu0 0
    %2557 = vmatpush1.bf16.msra.mxu0 0
    %2558 = vmatprep.subr.bf16.mxu0 0
    %2559 = vmatpush1.bf16.msra.mxu0 0
    %2560 = vmatprep.subr.bf16.mxu0 0
    %2561 = vmatpush1.bf16.msra.mxu0 0
    %2562 = vmatprep.subr.bf16.mxu0 0
    %2563 = vmatpush1.bf16.msra.mxu0 0
    %2564 = vmatprep.subr.bf16.mxu0 0
    %2565 = vmatpush1.bf16.msra.mxu0 0
    %2566 = vmatprep.mubr.bf16.mxu0 0
    %2567 = vmatmul.mubr.bf16.gmra.mrb[0].mxu0 %v2417
    %v2568 = vpop.f32.mrb[0].mxu0
    %v2569 = vadd.f32 0.0, %v2568
    %v2570 = vpop.f32.mrb[0].mxu0
    %v2571 = vadd.f32 0.0, %v2570
    %v2572 = vpop.f32.mrb[0].mxu0
    %v2573 = vpop.f32.mrb[0].mxu0
    %2574 = vdwg.mxu0
    %2575 = vmatprep.subr.bf16.mxu0 %v526
    %2576 = vmatpush1.bf16.msra.mxu0 %v525
    %2577 = vmatprep.subr.bf16.mxu0 %v530
    %2578 = vmatpush1.bf16.msra.mxu0 %v529
    %2579 = vmatprep.subr.bf16.mxu0 %v534
    %2580 = vmatpush1.bf16.msra.mxu0 %v533
    %2581 = vmatprep.subr.bf16.mxu0 %v538
    %2582 = vmatpush1.bf16.msra.mxu0 %v537
    %2583 = vmatprep.subr.bf16.mxu0 %v542
    %2584 = vmatpush1.bf16.msra.mxu0 %v541
    %2585 = vmatprep.subr.bf16.mxu0 %v546
    %2586 = vmatpush1.bf16.msra.mxu0 %v545
    %2587 = vmatprep.subr.bf16.mxu0 %v550
    %2588 = vmatpush1.bf16.msra.mxu0 %v549
    %2589 = vmatprep.subr.bf16.mxu0 %v554
    %2590 = vmatpush1.bf16.msra.mxu0 %v553
    %2591 = vmatprep.subr.bf16.mxu0 0
    %2592 = vmatpush1.bf16.msra.mxu0 0
    %2593 = vmatprep.subr.bf16.mxu0 0
    %2594 = vmatpush1.bf16.msra.mxu0 0
    %2595 = vmatprep.subr.bf16.mxu0 0
    %2596 = vmatpush1.bf16.msra.mxu0 0
    %2597 = vmatprep.subr.bf16.mxu0 0
    %2598 = vmatpush1.bf16.msra.mxu0 0
    %2599 = vmatprep.subr.bf16.mxu0 0
    %2600 = vmatpush1.bf16.msra.mxu0 0
    %2601 = vmatprep.subr.bf16.mxu0 0
    %2602 = vmatpush1.bf16.msra.mxu0 0
    %2603 = vmatprep.subr.bf16.mxu0 0
    %2604 = vmatpush1.bf16.msra.mxu0 0
    %2605 = vmatprep.subr.bf16.mxu0 0
    %2606 = vmatpush1.bf16.msra.mxu0 0
    %2607 = vmatprep.mubr.bf16.mxu0 0
    %2608 = vmatmul.mubr.bf16.gmra.mrb[0].mxu0 %v2417
    %v2609 = vpop.f32.mrb[0].mxu0
    %v2610 = vadd.f32 0.0, %v2609
    %v2611 = vpop.f32.mrb[0].mxu0
    %v2612 = vadd.f32 0.0, %v2611
    %v2613 = vpop.f32.mrb[0].mxu0
    %v2614 = vpop.f32.mrb[0].mxu0
    %2615 = vdwg.mxu0
    %v2616 = vpack.c.bf16 %v2528, %v2528
    %2617 = vmatprep.subr.bf16.mxu0 %v766
    %2618 = vmatpush1.bf16.msra.mxu0 %v765
    %2619 = vmatprep.subr.bf16.mxu0 %v770
    %2620 = vmatpush1.bf16.msra.mxu0 %v769
    %2621 = vmatprep.subr.bf16.mxu0 %v774
    %2622 = vmatpush1.bf16.msra.mxu0 %v773
    %2623 = vmatprep.subr.bf16.mxu0 %v778
    %2624 = vmatpush1.bf16.msra.mxu0 %v777
    %2625 = vmatprep.subr.bf16.mxu0 %v782
    %2626 = vmatpush1.bf16.msra.mxu0 %v781
    %2627 = vmatprep.subr.bf16.mxu0 %v786
    %2628 = vmatpush1.bf16.msra.mxu0 %v785
    %2629 = vmatprep.subr.bf16.mxu0 %v790
    %2630 = vmatpush1.bf16.msra.mxu0 %v789
    %2631 = vmatprep.subr.bf16.mxu0 %v794
    %2632 = vmatpush1.bf16.msra.mxu0 %v793
    %2633 = vmatprep.subr.bf16.mxu0 0
    %2634 = vmatpush1.bf16.msra.mxu0 0
    %2635 = vmatprep.subr.bf16.mxu0 0
    %2636 = vmatpush1.bf16.msra.mxu0 0
    %2637 = vmatprep.subr.bf16.mxu0 0
    %2638 = vmatpush1.bf16.msra.mxu0 0
    %2639 = vmatprep.subr.bf16.mxu0 0
    %2640 = vmatpush1.bf16.msra.mxu0 0
    %2641 = vmatprep.subr.bf16.mxu0 0
    %2642 = vmatpush1.bf16.msra.mxu0 0
    %2643 = vmatprep.subr.bf16.mxu0 0
    %2644 = vmatpush1.bf16.msra.mxu0 0
    %2645 = vmatprep.subr.bf16.mxu0 0
    %2646 = vmatpush1.bf16.msra.mxu0 0
    %2647 = vmatprep.subr.bf16.mxu0 0
    %2648 = vmatpush1.bf16.msra.mxu0 0
    %2649 = vmatprep.mubr.bf16.mxu0 0
    %2650 = vmatmul.mubr.bf16.gmra.mrb[0].mxu0 %v2616
    %v2651 = vpop.f32.mrb[0].mxu0
    %v2652 = vadd.f32 0.0, %v2651
    %v2653 = vpop.f32.mrb[0].mxu0
    %v2654 = vadd.f32 0.0, %v2653
    %v2655 = vpop.f32.mrb[0].mxu0
    %v2656 = vpop.f32.mrb[0].mxu0
    %2657 = vdwg.mxu0
    %2658 = vmatprep.subr.bf16.mxu0 %v768
    %2659 = vmatpush1.bf16.msra.mxu0 %v767
    %2660 = vmatprep.subr.bf16.mxu0 %v772
    %2661 = vmatpush1.bf16.msra.mxu0 %v771
    %2662 = vmatprep.subr.bf16.mxu0 %v776
    %2663 = vmatpush1.bf16.msra.mxu0 %v775
    %2664 = vmatprep.subr.bf16.mxu0 %v780
    %2665 = vmatpush1.bf16.msra.mxu0 %v779
    %2666 = vmatprep.subr.bf16.mxu0 %v784
    %2667 = vmatpush1.bf16.msra.mxu0 %v783
    %2668 = vmatprep.subr.bf16.mxu0 %v788
    %2669 = vmatpush1.bf16.msra.mxu0 %v787
    %2670 = vmatprep.subr.bf16.mxu0 %v792
    %2671 = vmatpush1.bf16.msra.mxu0 %v791
    %2672 = vmatprep.subr.bf16.mxu0 %v796
    %2673 = vmatpush1.bf16.msra.mxu0 %v795
    %2674 = vmatprep.subr.bf16.mxu0 0
    %2675 = vmatpush1.bf16.msra.mxu0 0
    %2676 = vmatprep.subr.bf16.mxu0 0
    %2677 = vmatpush1.bf16.msra.mxu0 0
    %2678 = vmatprep.subr.bf16.mxu0 0
    %2679 = vmatpush1.bf16.msra.mxu0 0
    %2680 = vmatprep.subr.bf16.mxu0 0
    %2681 = vmatpush1.bf16.msra.mxu0 0
    %2682 = vmatprep.subr.bf16.mxu0 0
    %2683 = vmatpush1.bf16.msra.mxu0 0
    %2684 = vmatprep.subr.bf16.mxu0 0
    %2685 = vmatpush1.bf16.msra.mxu0 0
    %2686 = vmatprep.subr.bf16.mxu0 0
    %2687 = vmatpush1.bf16.msra.mxu0 0
    %2688 = vmatprep.subr.bf16.mxu0 0
    %2689 = vmatpush1.bf16.msra.mxu0 0
    %2690 = vmatprep.mubr.bf16.mxu0 0
    %2691 = vmatmul.mubr.bf16.gmra.mrb[0].mxu0 %v2616
    %v2692 = vpop.f32.mrb[0].mxu0
    %v2693 = vadd.f32 0.0, %v2692
    %v2694 = vpop.f32.mrb[0].mxu0
    %v2695 = vadd.f32 0.0, %v2694
    %v2696 = vpop.f32.mrb[0].mxu0
    %v2697 = vpop.f32.mrb[0].mxu0
    %2698 = vdwg.mxu0
    %s2699 = scalar_lea.vmem [#allocation2], 160
    %v2700 = vld [vmem:[%s2699] sm:$0xff]
    %v2701 = vld [vmem:[%s2699 + $0x8] sm:$0xff]
    %v2702 = vld [vmem:[%s2699 + $0x10] sm:$0xff]
    %v2703 = vld [vmem:[%s2699 + $0x18] sm:$0xff]
    %v2704 = vadd.f32 %v2700, %v2569
    %v2705 = vadd.f32 %v2701, %v2571
    %v2706 = vadd.f32 %v2702, %v2610
    %v2707 = vadd.f32 %v2703, %v2612
    %v2708 = vxor.u32 %v2704, 2147483648
    %v2709 = vmul.f32 %v2708, 1.442695
    %v2710 = vpow.pop %v2709
    %v2711 = vadd.f32 %v2710, 1.0
    %v2712 = vrcp.pop %v2711
    %v2713 = vmul.f32 1.0, %v2712
    %v2714 = vxor.u32 %v2705, 2147483648
    %v2715 = vmul.f32 %v2714, 1.442695
    %v2716 = vpow.pop %v2715
    %v2717 = vadd.f32 %v2716, 1.0
    %v2718 = vrcp.pop %v2717
    %v2719 = vmul.f32 1.0, %v2718
    %v2720 = vtanh.pop %v2706
    %v2721 = vxor.u32 %v2707, 2147483648
    %v2722 = vmul.f32 %v2721, 1.442695
    %v2723 = vpow.pop %v2722
    %v2724 = vadd.f32 %v2723, 1.0
    %v2725 = vrcp.pop %v2724
    %v2726 = vmul.f32 1.0, %v2725
    %v2727 = vmul.f32 %v2719, %v2416
    %v2728 = vmul.f32 %v2713, %v2720
    %v2729 = vadd.f32 %v2727, %v2728
    %v2730 = vtanh.pop %v2729
    %v2731 = vmul.f32 %v2726, %v2730
    %v2732 = vsel %vm2533, 1, 0
    %2733 = vset.pattern.permute.xlu0 0
    %2734 = vperm.xlu0 %2733, %v2732
    %v2735 = vpop.permute.xlu0 %2734
    %vm2736 = vcmp.eq.s32.totalorder %v2735, 1
    %v2737 = vsel %vm2736, %v2731, %v2415
    %v2738 = vsel %vm2736, %v2729, %v2416
    %v2739 = vpack.c.bf16 %v2737, %v2737
    %2740 = vmatprep.subr.bf16.mxu0 %v1048
    %2741 = vmatpush1.bf16.msra.mxu0 %v1047
    %2742 = vmatprep.subr.bf16.mxu0 %v1052
    %2743 = vmatpush1.bf16.msra.mxu0 %v1051
    %2744 = vmatprep.subr.bf16.mxu0 %v1056
    %2745 = vmatpush1.bf16.msra.mxu0 %v1055
    %2746 = vmatprep.subr.bf16.mxu0 %v1060
    %2747 = vmatpush1.bf16.msra.mxu0 %v1059
    %2748 = vmatprep.subr.bf16.mxu0 %v1064
    %2749 = vmatpush1.bf16.msra.mxu0 %v1063
    %2750 = vmatprep.subr.bf16.mxu0 %v1068
    %2751 = vmatpush1.bf16.msra.mxu0 %v1067
    %2752 = vmatprep.subr.bf16.mxu0 %v1072
    %2753 = vmatpush1.bf16.msra.mxu0 %v1071
    %2754 = vmatprep.subr.bf16.mxu0 %v1076
    %2755 = vmatpush1.bf16.msra.mxu0 %v1075
    %2756 = vmatprep.subr.bf16.mxu0 0
    %2757 = vmatpush1.bf16.msra.mxu0 0
    %2758 = vmatprep.subr.bf16.mxu0 0
    %2759 = vmatpush1.bf16.msra.mxu0 0
    %2760 = vmatprep.subr.bf16.mxu0 0
    %2761 = vmatpush1.bf16.msra.mxu0 0
    %2762 = vmatprep.subr.bf16.mxu0 0
    %2763 = vmatpush1.bf16.msra.mxu0 0
    %2764 = vmatprep.subr.bf16.mxu0 0
    %2765 = vmatpush1.bf16.msra.mxu0 0
    %2766 = vmatprep.subr.bf16.mxu0 0
    %2767 = vmatpush1.bf16.msra.mxu0 0
    %2768 = vmatprep.subr.bf16.mxu0 0
    %2769 = vmatpush1.bf16.msra.mxu0 0
    %2770 = vmatprep.subr.bf16.mxu0 0
    %2771 = vmatpush1.bf16.msra.mxu0 0
    %2772 = vmatprep.mubr.bf16.mxu0 0
    %2773 = vmatmul.mubr.bf16.gmra.mrb[0].mxu0 %v2739
    %v2774 = vpop.f32.mrb[0].mxu0
    %v2775 = vadd.f32 %v2652, %v2774
    %v2776 = vpop.f32.mrb[0].mxu0
    %v2777 = vadd.f32 %v2654, %v2776
    %v2778 = vpop.f32.mrb[0].mxu0
    %v2779 = vpop.f32.mrb[0].mxu0
    %2780 = vdwg.mxu0
    %2781 = vmatprep.subr.bf16.mxu0 %v1050
    %2782 = vmatpush1.bf16.msra.mxu0 %v1049
    %2783 = vmatprep.subr.bf16.mxu0 %v1054
    %2784 = vmatpush1.bf16.msra.mxu0 %v1053
    %2785 = vmatprep.subr.bf16.mxu0 %v1058
    %2786 = vmatpush1.bf16.msra.mxu0 %v1057
    %2787 = vmatprep.subr.bf16.mxu0 %v1062
    %2788 = vmatpush1.bf16.msra.mxu0 %v1061
    %2789 = vmatprep.subr.bf16.mxu0 %v1066
    %2790 = vmatpush1.bf16.msra.mxu0 %v1065
    %2791 = vmatprep.subr.bf16.mxu0 %v1070
    %2792 = vmatpush1.bf16.msra.mxu0 %v1069
    %2793 = vmatprep.subr.bf16.mxu0 %v1074
    %2794 = vmatpush1.bf16.msra.mxu0 %v1073
    %2795 = vmatprep.subr.bf16.mxu0 %v1078
    %2796 = vmatpush1.bf16.msra.mxu0 %v1077
    %2797 = vmatprep.subr.bf16.mxu0 0
    %2798 = vmatpush1.bf16.msra.mxu0 0
    %2799 = vmatprep.subr.bf16.mxu0 0
    %2800 = vmatpush1.bf16.msra.mxu0 0
    %2801 = vmatprep.subr.bf16.mxu0 0
    %2802 = vmatpush1.bf16.msra.mxu0 0
    %2803 = vmatprep.subr.bf16.mxu0 0
    %2804 = vmatpush1.bf16.msra.mxu0 0
    %2805 = vmatprep.subr.bf16.mxu0 0
    %2806 = vmatpush1.bf16.msra.mxu0 0
    %2807 = vmatprep.subr.bf16.mxu0 0
    %2808 = vmatpush1.bf16.msra.mxu0 0
    %2809 = vmatprep.subr.bf16.mxu0 0
    %2810 = vmatpush1.bf16.msra.mxu0 0
    %2811 = vmatprep.subr.bf16.mxu0 0
    %2812 = vmatpush1.bf16.msra.mxu0 0
    %2813 = vmatprep.mubr.bf16.mxu0 0
    %2814 = vmatmul.mubr.bf16.gmra.mrb[0].mxu0 %v2739
    %v2815 = vpop.f32.mrb[0].mxu0
    %v2816 = vadd.f32 %v2693, %v2815
    %v2817 = vpop.f32.mrb[0].mxu0
    %v2818 = vadd.f32 %v2695, %v2817
    %v2819 = vpop.f32.mrb[0].mxu0
    %v2820 = vpop.f32.mrb[0].mxu0
    %2821 = vdwg.mxu0
    %v2822 = vadd.f32 %v2775, %v1197
    %v2823 = vadd.f32 %v2777, %v1201
    %v2824 = vadd.f32 %v2816, %v1205
    %v2825 = vadd.f32 %v2818, %v1209
    %v2826 = vxor.u32 %v2822, 2147483648
    %v2827 = vmul.f32 %v2826, 1.442695
    %v2828 = vpow.pop %v2827
    %v2829 = vadd.f32 %v2828, 1.0
    %v2830 = vrcp.pop %v2829
    %v2831 = vmul.f32 1.0, %v2830
    %v2832 = vxor.u32 %v2823, 2147483648
    %v2833 = vmul.f32 %v2832, 1.442695
    %v2834 = vpow.pop %v2833
    %v2835 = vadd.f32 %v2834, 1.0
    %v2836 = vrcp.pop %v2835
    %v2837 = vmul.f32 1.0, %v2836
    %v2838 = vtanh.pop %v2824
    %v2839 = vxor.u32 %v2825, 2147483648
    %v2840 = vmul.f32 %v2839, 1.442695
    %v2841 = vpow.pop %v2840
    %v2842 = vadd.f32 %v2841, 1.0
    %v2843 = vrcp.pop %v2842
    %v2844 = vmul.f32 1.0, %v2843
    %v2845 = vmul.f32 %v2837, %v2529
    %v2846 = vmul.f32 %v2831, %v2838
    %v2847 = vadd.f32 %v2845, %v2846
    %v2848 = vtanh.pop %v2847
    %v2849 = vmul.f32 %v2844, %v2848
    %v2850 = vsel %vm2736, %v2849, %v2528
    %v2851 = vsel %vm2736, %v2847, %v2529
    %v2852 = vsel %vm2736, %v2849, 0.0
    %s2853 = scalar_lea.vmem [#allocation3], 40
    %2854 = vst [vmem:[%s2853] sm:$0xff] %v2852
    %vm2855 = vcmp.gt.s32.totalorder %v328, 6
    %2856 = vmatprep.subr.bf16.mxu0 %v524
    %2857 = vmatpush1.bf16.msra.mxu0 %v523
    %2858 = vmatprep.subr.bf16.mxu0 %v528
    %2859 = vmatpush1.bf16.msra.mxu0 %v527
    %2860 = vmatprep.subr.bf16.mxu0 %v532
    %2861 = vmatpush1.bf16.msra.mxu0 %v531
    %2862 = vmatprep.subr.bf16.mxu0 %v536
    %2863 = vmatpush1.bf16.msra.mxu0 %v535
    %2864 = vmatprep.subr.bf16.mxu0 %v540
    %2865 = vmatpush1.bf16.msra.mxu0 %v539
    %2866 = vmatprep.subr.bf16.mxu0 %v544
    %2867 = vmatpush1.bf16.msra.mxu0 %v543
    %2868 = vmatprep.subr.bf16.mxu0 %v548
    %2869 = vmatpush1.bf16.msra.mxu0 %v547
    %2870 = vmatprep.subr.bf16.mxu0 %v552
    %2871 = vmatpush1.bf16.msra.mxu0 %v551
    %2872 = vmatprep.subr.bf16.mxu0 0
    %2873 = vmatpush1.bf16.msra.mxu0 0
    %2874 = vmatprep.subr.bf16.mxu0 0
    %2875 = vmatpush1.bf16.msra.mxu0 0
    %2876 = vmatprep.subr.bf16.mxu0 0
    %2877 = vmatpush1.bf16.msra.mxu0 0
    %2878 = vmatprep.subr.bf16.mxu0 0
    %2879 = vmatpush1.bf16.msra.mxu0 0
    %2880 = vmatprep.subr.bf16.mxu0 0
    %2881 = vmatpush1.bf16.msra.mxu0 0
    %2882 = vmatprep.subr.bf16.mxu0 0
    %2883 = vmatpush1.bf16.msra.mxu0 0
    %2884 = vmatprep.subr.bf16.mxu0 0
    %2885 = vmatpush1.bf16.msra.mxu0 0
    %2886 = vmatprep.subr.bf16.mxu0 0
    %2887 = vmatpush1.bf16.msra.mxu0 0
    %2888 = vmatprep.mubr.bf16.mxu0 0
    %2889 = vmatmul.mubr.bf16.gmra.mrb[0].mxu0 %v2739
    %v2890 = vpop.f32.mrb[0].mxu0
    %v2891 = vadd.f32 0.0, %v2890
    %v2892 = vpop.f32.mrb[0].mxu0
    %v2893 = vadd.f32 0.0, %v2892
    %v2894 = vpop.f32.mrb[0].mxu0
    %v2895 = vpop.f32.mrb[0].mxu0
    %2896 = vdwg.mxu0
    %2897 = vmatprep.subr.bf16.mxu0 %v526
    %2898 = vmatpush1.bf16.msra.mxu0 %v525
    %2899 = vmatprep.subr.bf16.mxu0 %v530
    %2900 = vmatpush1.bf16.msra.mxu0 %v529
    %2901 = vmatprep.subr.bf16.mxu0 %v534
    %2902 = vmatpush1.bf16.msra.mxu0 %v533
    %2903 = vmatprep.subr.bf16.mxu0 %v538
    %2904 = vmatpush1.bf16.msra.mxu0 %v537
    %2905 = vmatprep.subr.bf16.mxu0 %v542
    %2906 = vmatpush1.bf16.msra.mxu0 %v541
    %2907 = vmatprep.subr.bf16.mxu0 %v546
    %2908 = vmatpush1.bf16.msra.mxu0 %v545
    %2909 = vmatprep.subr.bf16.mxu0 %v550
    %2910 = vmatpush1.bf16.msra.mxu0 %v549
    %2911 = vmatprep.subr.bf16.mxu0 %v554
    %2912 = vmatpush1.bf16.msra.mxu0 %v553
    %2913 = vmatprep.subr.bf16.mxu0 0
    %2914 = vmatpush1.bf16.msra.mxu0 0
    %2915 = vmatprep.subr.bf16.mxu0 0
    %2916 = vmatpush1.bf16.msra.mxu0 0
    %2917 = vmatprep.subr.bf16.mxu0 0
    %2918 = vmatpush1.bf16.msra.mxu0 0
    %2919 = vmatprep.subr.bf16.mxu0 0
    %2920 = vmatpush1.bf16.msra.mxu0 0
    %2921 = vmatprep.subr.bf16.mxu0 0
    %2922 = vmatpush1.bf16.msra.mxu0 0
    %2923 = vmatprep.subr.bf16.mxu0 0
    %2924 = vmatpush1.bf16.msra.mxu0 0
    %2925 = vmatprep.subr.bf16.mxu0 0
    %2926 = vmatpush1.bf16.msra.mxu0 0
    %2927 = vmatprep.subr.bf16.mxu0 0
    %2928 = vmatpush1.bf16.msra.mxu0 0
    %2929 = vmatprep.mubr.bf16.mxu0 0
    %2930 = vmatmul.mubr.bf16.gmra.mrb[0].mxu0 %v2739
    %v2931 = vpop.f32.mrb[0].mxu0
    %v2932 = vadd.f32 0.0, %v2931
    %v2933 = vpop.f32.mrb[0].mxu0
    %v2934 = vadd.f32 0.0, %v2933
    %v2935 = vpop.f32.mrb[0].mxu0
    %v2936 = vpop.f32.mrb[0].mxu0
    %2937 = vdwg.mxu0
    %v2938 = vpack.c.bf16 %v2850, %v2850
    %2939 = vmatprep.subr.bf16.mxu0 %v766
    %2940 = vmatpush1.bf16.msra.mxu0 %v765
    %2941 = vmatprep.subr.bf16.mxu0 %v770
    %2942 = vmatpush1.bf16.msra.mxu0 %v769
    %2943 = vmatprep.subr.bf16.mxu0 %v774
    %2944 = vmatpush1.bf16.msra.mxu0 %v773
    %2945 = vmatprep.subr.bf16.mxu0 %v778
    %2946 = vmatpush1.bf16.msra.mxu0 %v777
    %2947 = vmatprep.subr.bf16.mxu0 %v782
    %2948 = vmatpush1.bf16.msra.mxu0 %v781
    %2949 = vmatprep.subr.bf16.mxu0 %v786
    %2950 = vmatpush1.bf16.msra.mxu0 %v785
    %2951 = vmatprep.subr.bf16.mxu0 %v790
    %2952 = vmatpush1.bf16.msra.mxu0 %v789
    %2953 = vmatprep.subr.bf16.mxu0 %v794
    %2954 = vmatpush1.bf16.msra.mxu0 %v793
    %2955 = vmatprep.subr.bf16.mxu0 0
    %2956 = vmatpush1.bf16.msra.mxu0 0
    %2957 = vmatprep.subr.bf16.mxu0 0
    %2958 = vmatpush1.bf16.msra.mxu0 0
    %2959 = vmatprep.subr.bf16.mxu0 0
    %2960 = vmatpush1.bf16.msra.mxu0 0
    %2961 = vmatprep.subr.bf16.mxu0 0
    %2962 = vmatpush1.bf16.msra.mxu0 0
    %2963 = vmatprep.subr.bf16.mxu0 0
    %2964 = vmatpush1.bf16.msra.mxu0 0
    %2965 = vmatprep.subr.bf16.mxu0 0
    %2966 = vmatpush1.bf16.msra.mxu0 0
    %2967 = vmatprep.subr.bf16.mxu0 0
    %2968 = vmatpush1.bf16.msra.mxu0 0
    %2969 = vmatprep.subr.bf16.mxu0 0
    %2970 = vmatpush1.bf16.msra.mxu0 0
    %2971 = vmatprep.mubr.bf16.mxu0 0
    %2972 = vmatmul.mubr.bf16.gmra.mrb[0].mxu0 %v2938
    %v2973 = vpop.f32.mrb[0].mxu0
    %v2974 = vadd.f32 0.0, %v2973
    %v2975 = vpop.f32.mrb[0].mxu0
    %v2976 = vadd.f32 0.0, %v2975
    %v2977 = vpop.f32.mrb[0].mxu0
    %v2978 = vpop.f32.mrb[0].mxu0
    %2979 = vdwg.mxu0
    %2980 = vmatprep.subr.bf16.mxu0 %v768
    %2981 = vmatpush1.bf16.msra.mxu0 %v767
    %2982 = vmatprep.subr.bf16.mxu0 %v772
    %2983 = vmatpush1.bf16.msra.mxu0 %v771
    %2984 = vmatprep.subr.bf16.mxu0 %v776
    %2985 = vmatpush1.bf16.msra.mxu0 %v775
    %2986 = vmatprep.subr.bf16.mxu0 %v780
    %2987 = vmatpush1.bf16.msra.mxu0 %v779
    %2988 = vmatprep.subr.bf16.mxu0 %v784
    %2989 = vmatpush1.bf16.msra.mxu0 %v783
    %2990 = vmatprep.subr.bf16.mxu0 %v788
    %2991 = vmatpush1.bf16.msra.mxu0 %v787
    %2992 = vmatprep.subr.bf16.mxu0 %v792
    %2993 = vmatpush1.bf16.msra.mxu0 %v791
    %2994 = vmatprep.subr.bf16.mxu0 %v796
    %2995 = vmatpush1.bf16.msra.mxu0 %v795
    %2996 = vmatprep.subr.bf16.mxu0 0
    %2997 = vmatpush1.bf16.msra.mxu0 0
    %2998 = vmatprep.subr.bf16.mxu0 0
    %2999 = vmatpush1.bf16.msra.mxu0 0
    %3000 = vmatprep.subr.bf16.mxu0 0
    %3001 = vmatpush1.bf16.msra.mxu0 0
    %3002 = vmatprep.subr.bf16.mxu0 0
    %3003 = vmatpush1.bf16.msra.mxu0 0
    %3004 = vmatprep.subr.bf16.mxu0 0
    %3005 = vmatpush1.bf16.msra.mxu0 0
    %3006 = vmatprep.subr.bf16.mxu0 0
    %3007 = vmatpush1.bf16.msra.mxu0 0
    %3008 = vmatprep.subr.bf16.mxu0 0
    %3009 = vmatpush1.bf16.msra.mxu0 0
    %3010 = vmatprep.subr.bf16.mxu0 0
    %3011 = vmatpush1.bf16.msra.mxu0 0
    %3012 = vmatprep.mubr.bf16.mxu0 0
    %3013 = vmatmul.mubr.bf16.gmra.mrb[0].mxu0 %v2938
    %v3014 = vpop.f32.mrb[0].mxu0
    %v3015 = vadd.f32 0.0, %v3014
    %v3016 = vpop.f32.mrb[0].mxu0
    %v3017 = vadd.f32 0.0, %v3016
    %v3018 = vpop.f32.mrb[0].mxu0
    %v3019 = vpop.f32.mrb[0].mxu0
    %3020 = vdwg.mxu0
    %s3021 = scalar_lea.vmem [#allocation2], 192
    %v3022 = vld [vmem:[%s3021] sm:$0xff]
    %v3023 = vld [vmem:[%s3021 + $0x8] sm:$0xff]
    %v3024 = vld [vmem:[%s3021 + $0x10] sm:$0xff]
    %v3025 = vld [vmem:[%s3021 + $0x18] sm:$0xff]
    %v3026 = vadd.f32 %v3022, %v2891
    %v3027 = vadd.f32 %v3023, %v2893
    %v3028 = vadd.f32 %v3024, %v2932
    %v3029 = vadd.f32 %v3025, %v2934
    %v3030 = vxor.u32 %v3026, 2147483648
    %v3031 = vmul.f32 %v3030, 1.442695
    %v3032 = vpow.pop %v3031
    %v3033 = vadd.f32 %v3032, 1.0
    %v3034 = vrcp.pop %v3033
    %v3035 = vmul.f32 1.0, %v3034
    %v3036 = vxor.u32 %v3027, 2147483648
    %v3037 = vmul.f32 %v3036, 1.442695
    %v3038 = vpow.pop %v3037
    %v3039 = vadd.f32 %v3038, 1.0
    %v3040 = vrcp.pop %v3039
    %v3041 = vmul.f32 1.0, %v3040
    %v3042 = vtanh.pop %v3028
    %v3043 = vxor.u32 %v3029, 2147483648
    %v3044 = vmul.f32 %v3043, 1.442695
    %v3045 = vpow.pop %v3044
    %v3046 = vadd.f32 %v3045, 1.0
    %v3047 = vrcp.pop %v3046
    %v3048 = vmul.f32 1.0, %v3047
    %v3049 = vmul.f32 %v3041, %v2738
    %v3050 = vmul.f32 %v3035, %v3042
    %v3051 = vadd.f32 %v3049, %v3050
    %v3052 = vtanh.pop %v3051
    %v3053 = vmul.f32 %v3048, %v3052
    %v3054 = vsel %vm2855, 1, 0
    %3055 = vset.pattern.permute.xlu0 0
    %3056 = vperm.xlu0 %3055, %v3054
    %v3057 = vpop.permute.xlu0 %3056
    %vm3058 = vcmp.eq.s32.totalorder %v3057, 1
    %v3059 = vsel %vm3058, %v3053, %v2737
    %v3060 = vsel %vm3058, %v3051, %v2738
    %v3061 = vpack.c.bf16 %v3059, %v3059
    %3062 = vmatprep.subr.bf16.mxu0 %v1048
    %3063 = vmatpush1.bf16.msra.mxu0 %v1047
    %3064 = vmatprep.subr.bf16.mxu0 %v1052
    %3065 = vmatpush1.bf16.msra.mxu0 %v1051
    %3066 = vmatprep.subr.bf16.mxu0 %v1056
    %3067 = vmatpush1.bf16.msra.mxu0 %v1055
    %3068 = vmatprep.subr.bf16.mxu0 %v1060
    %3069 = vmatpush1.bf16.msra.mxu0 %v1059
    %3070 = vmatprep.subr.bf16.mxu0 %v1064
    %3071 = vmatpush1.bf16.msra.mxu0 %v1063
    %3072 = vmatprep.subr.bf16.mxu0 %v1068
    %3073 = vmatpush1.bf16.msra.mxu0 %v1067
    %3074 = vmatprep.subr.bf16.mxu0 %v1072
    %3075 = vmatpush1.bf16.msra.mxu0 %v1071
    %3076 = vmatprep.subr.bf16.mxu0 %v1076
    %3077 = vmatpush1.bf16.msra.mxu0 %v1075
    %3078 = vmatprep.subr.bf16.mxu0 0
    %3079 = vmatpush1.bf16.msra.mxu0 0
    %3080 = vmatprep.subr.bf16.mxu0 0
    %3081 = vmatpush1.bf16.msra.mxu0 0
    %3082 = vmatprep.subr.bf16.mxu0 0
    %3083 = vmatpush1.bf16.msra.mxu0 0
    %3084 = vmatprep.subr.bf16.mxu0 0
    %3085 = vmatpush1.bf16.msra.mxu0 0
    %3086 = vmatprep.subr.bf16.mxu0 0
    %3087 = vmatpush1.bf16.msra.mxu0 0
    %3088 = vmatprep.subr.bf16.mxu0 0
    %3089 = vmatpush1.bf16.msra.mxu0 0
    %3090 = vmatprep.subr.bf16.mxu0 0
    %3091 = vmatpush1.bf16.msra.mxu0 0
    %3092 = vmatprep.subr.bf16.mxu0 0
    %3093 = vmatpush1.bf16.msra.mxu0 0
    %3094 = vmatprep.mubr.bf16.mxu0 0
    %3095 = vmatmul.mubr.bf16.gmra.mrb[0].mxu0 %v3061
    %v3096 = vpop.f32.mrb[0].mxu0
    %v3097 = vadd.f32 %v2974, %v3096
    %v3098 = vpop.f32.mrb[0].mxu0
    %v3099 = vadd.f32 %v2976, %v3098
    %v3100 = vpop.f32.mrb[0].mxu0
    %v3101 = vpop.f32.mrb[0].mxu0
    %3102 = vdwg.mxu0
    %3103 = vmatprep.subr.bf16.mxu0 %v1050
    %3104 = vmatpush1.bf16.msra.mxu0 %v1049
    %3105 = vmatprep.subr.bf16.mxu0 %v1054
    %3106 = vmatpush1.bf16.msra.mxu0 %v1053
    %3107 = vmatprep.subr.bf16.mxu0 %v1058
    %3108 = vmatpush1.bf16.msra.mxu0 %v1057
    %3109 = vmatprep.subr.bf16.mxu0 %v1062
    %3110 = vmatpush1.bf16.msra.mxu0 %v1061
    %3111 = vmatprep.subr.bf16.mxu0 %v1066
    %3112 = vmatpush1.bf16.msra.mxu0 %v1065
    %3113 = vmatprep.subr.bf16.mxu0 %v1070
    %3114 = vmatpush1.bf16.msra.mxu0 %v1069
    %3115 = vmatprep.subr.bf16.mxu0 %v1074
    %3116 = vmatpush1.bf16.msra.mxu0 %v1073
    %3117 = vmatprep.subr.bf16.mxu0 %v1078
    %3118 = vmatpush1.bf16.msra.mxu0 %v1077
    %3119 = vmatprep.subr.bf16.mxu0 0
    %3120 = vmatpush1.bf16.msra.mxu0 0
    %3121 = vmatprep.subr.bf16.mxu0 0
    %3122 = vmatpush1.bf16.msra.mxu0 0
    %3123 = vmatprep.subr.bf16.mxu0 0
    %3124 = vmatpush1.bf16.msra.mxu0 0
    %3125 = vmatprep.subr.bf16.mxu0 0
    %3126 = vmatpush1.bf16.msra.mxu0 0
    %3127 = vmatprep.subr.bf16.mxu0 0
    %3128 = vmatpush1.bf16.msra.mxu0 0
    %3129 = vmatprep.subr.bf16.mxu0 0
    %3130 = vmatpush1.bf16.msra.mxu0 0
    %3131 = vmatprep.subr.bf16.mxu0 0
    %3132 = vmatpush1.bf16.msra.mxu0 0
    %3133 = vmatprep.subr.bf16.mxu0 0
    %3134 = vmatpush1.bf16.msra.mxu0 0
    %3135 = vmatprep.mubr.bf16.mxu0 0
    %3136 = vmatmul.mubr.bf16.gmra.mrb[0].mxu0 %v3061
    %v3137 = vpop.f32.mrb[0].mxu0
    %v3138 = vadd.f32 %v3015, %v3137
    %v3139 = vpop.f32.mrb[0].mxu0
    %v3140 = vadd.f32 %v3017, %v3139
    %v3141 = vpop.f32.mrb[0].mxu0
    %v3142 = vpop.f32.mrb[0].mxu0
    %3143 = vdwg.mxu0
    %v3144 = vadd.f32 %v3097, %v1197
    %v3145 = vadd.f32 %v3099, %v1201
    %v3146 = vadd.f32 %v3138, %v1205
    %v3147 = vadd.f32 %v3140, %v1209
    %v3148 = vxor.u32 %v3144, 2147483648
    %v3149 = vmul.f32 %v3148, 1.442695
    %v3150 = vpow.pop %v3149
    %v3151 = vadd.f32 %v3150, 1.0
    %v3152 = vrcp.pop %v3151
    %v3153 = vmul.f32 1.0, %v3152
    %v3154 = vxor.u32 %v3145, 2147483648
    %v3155 = vmul.f32 %v3154, 1.442695
    %v3156 = vpow.pop %v3155
    %v3157 = vadd.f32 %v3156, 1.0
    %v3158 = vrcp.pop %v3157
    %v3159 = vmul.f32 1.0, %v3158
    %v3160 = vtanh.pop %v3146
    %v3161 = vxor.u32 %v3147, 2147483648
    %v3162 = vmul.f32 %v3161, 1.442695
    %v3163 = vpow.pop %v3162
    %v3164 = vadd.f32 %v3163, 1.0
    %v3165 = vrcp.pop %v3164
    %v3166 = vmul.f32 1.0, %v3165
    %v3167 = vmul.f32 %v3159, %v2851
    %v3168 = vmul.f32 %v3153, %v3160
    %v3169 = vadd.f32 %v3167, %v3168
    %v3170 = vtanh.pop %v3169
    %v3171 = vmul.f32 %v3166, %v3170
    %v3172 = vsel %vm3058, %v3171, %v2850
    %v3173 = vsel %vm3058, %v3169, %v2851
    %v3174 = vsel %vm3058, %v3171, 0.0
    %s3175 = scalar_lea.vmem [#allocation3], 48
    %3176 = vst [vmem:[%s3175] sm:$0xff] %v3174
    %vm3177 = vcmp.gt.s32.totalorder %v328, 7
    %3178 = vmatprep.subr.bf16.mxu0 %v524
    %3179 = vmatpush1.bf16.msra.mxu0 %v523
    %3180 = vmatprep.subr.bf16.mxu0 %v528
    %3181 = vmatpush1.bf16.msra.mxu0 %v527
    %3182 = vmatprep.subr.bf16.mxu0 %v532
    %3183 = vmatpush1.bf16.msra.mxu0 %v531
    %3184 = vmatprep.subr.bf16.mxu0 %v536
    %3185 = vmatpush1.bf16.msra.mxu0 %v535
    %3186 = vmatprep.subr.bf16.mxu0 %v540
    %3187 = vmatpush1.bf16.msra.mxu0 %v539
    %3188 = vmatprep.subr.bf16.mxu0 %v544
    %3189 = vmatpush1.bf16.msra.mxu0 %v543
    %3190 = vmatprep.subr.bf16.mxu0 %v548
    %3191 = vmatpush1.bf16.msra.mxu0 %v547
    %3192 = vmatprep.subr.bf16.mxu0 %v552
    %3193 = vmatpush1.bf16.msra.mxu0 %v551
    %3194 = vmatprep.subr.bf16.mxu0 0
    %3195 = vmatpush1.bf16.msra.mxu0 0
    %3196 = vmatprep.subr.bf16.mxu0 0
    %3197 = vmatpush1.bf16.msra.mxu0 0
    %3198 = vmatprep.subr.bf16.mxu0 0
    %3199 = vmatpush1.bf16.msra.mxu0 0
    %3200 = vmatprep.subr.bf16.mxu0 0
    %3201 = vmatpush1.bf16.msra.mxu0 0
    %3202 = vmatprep.subr.bf16.mxu0 0
    %3203 = vmatpush1.bf16.msra.mxu0 0
    %3204 = vmatprep.subr.bf16.mxu0 0
    %3205 = vmatpush1.bf16.msra.mxu0 0
    %3206 = vmatprep.subr.bf16.mxu0 0
    %3207 = vmatpush1.bf16.msra.mxu0 0
    %3208 = vmatprep.subr.bf16.mxu0 0
    %3209 = vmatpush1.bf16.msra.mxu0 0
    %3210 = vmatprep.mubr.bf16.mxu0 0
    %3211 = vmatmul.mubr.bf16.gmra.mrb[0].mxu0 %v3061
    %v3212 = vpop.f32.mrb[0].mxu0
    %v3213 = vadd.f32 0.0, %v3212
    %v3214 = vpop.f32.mrb[0].mxu0
    %v3215 = vadd.f32 0.0, %v3214
    %v3216 = vpop.f32.mrb[0].mxu0
    %v3217 = vpop.f32.mrb[0].mxu0
    %3218 = vdwg.mxu0
    %3219 = vmatprep.subr.bf16.mxu0 %v526
    %3220 = vmatpush1.bf16.msra.mxu0 %v525
    %3221 = vmatprep.subr.bf16.mxu0 %v530
    %3222 = vmatpush1.bf16.msra.mxu0 %v529
    %3223 = vmatprep.subr.bf16.mxu0 %v534
    %3224 = vmatpush1.bf16.msra.mxu0 %v533
    %3225 = vmatprep.subr.bf16.mxu0 %v538
    %3226 = vmatpush1.bf16.msra.mxu0 %v537
    %3227 = vmatprep.subr.bf16.mxu0 %v542
    %3228 = vmatpush1.bf16.msra.mxu0 %v541
    %3229 = vmatprep.subr.bf16.mxu0 %v546
    %3230 = vmatpush1.bf16.msra.mxu0 %v545
    %3231 = vmatprep.subr.bf16.mxu0 %v550
    %3232 = vmatpush1.bf16.msra.mxu0 %v549
    %3233 = vmatprep.subr.bf16.mxu0 %v554
    %3234 = vmatpush1.bf16.msra.mxu0 %v553
    %3235 = vmatprep.subr.bf16.mxu0 0
    %3236 = vmatpush1.bf16.msra.mxu0 0
    %3237 = vmatprep.subr.bf16.mxu0 0
    %3238 = vmatpush1.bf16.msra.mxu0 0
    %3239 = vmatprep.subr.bf16.mxu0 0
    %3240 = vmatpush1.bf16.msra.mxu0 0
    %3241 = vmatprep.subr.bf16.mxu0 0
    %3242 = vmatpush1.bf16.msra.mxu0 0
    %3243 = vmatprep.subr.bf16.mxu0 0
    %3244 = vmatpush1.bf16.msra.mxu0 0
    %3245 = vmatprep.subr.bf16.mxu0 0
    %3246 = vmatpush1.bf16.msra.mxu0 0
    %3247 = vmatprep.subr.bf16.mxu0 0
    %3248 = vmatpush1.bf16.msra.mxu0 0
    %3249 = vmatprep.subr.bf16.mxu0 0
    %3250 = vmatpush1.bf16.msra.mxu0 0
    %3251 = vmatprep.mubr.bf16.mxu0 0
    %3252 = vmatmul.mubr.bf16.gmra.mrb[0].mxu0 %v3061
    %v3253 = vpop.f32.mrb[0].mxu0
    %v3254 = vadd.f32 0.0, %v3253
    %v3255 = vpop.f32.mrb[0].mxu0
    %v3256 = vadd.f32 0.0, %v3255
    %v3257 = vpop.f32.mrb[0].mxu0
    %v3258 = vpop.f32.mrb[0].mxu0
    %3259 = vdwg.mxu0
    %v3260 = vpack.c.bf16 %v3172, %v3172
    %3261 = vmatprep.subr.bf16.mxu0 %v766
    %3262 = vmatpush1.bf16.msra.mxu0 %v765
    %3263 = vmatprep.subr.bf16.mxu0 %v770
    %3264 = vmatpush1.bf16.msra.mxu0 %v769
    %3265 = vmatprep.subr.bf16.mxu0 %v774
    %3266 = vmatpush1.bf16.msra.mxu0 %v773
    %3267 = vmatprep.subr.bf16.mxu0 %v778
    %3268 = vmatpush1.bf16.msra.mxu0 %v777
    %3269 = vmatprep.subr.bf16.mxu0 %v782
    %3270 = vmatpush1.bf16.msra.mxu0 %v781
    %3271 = vmatprep.subr.bf16.mxu0 %v786
    %3272 = vmatpush1.bf16.msra.mxu0 %v785
    %3273 = vmatprep.subr.bf16.mxu0 %v790
    %3274 = vmatpush1.bf16.msra.mxu0 %v789
    %3275 = vmatprep.subr.bf16.mxu0 %v794
    %3276 = vmatpush1.bf16.msra.mxu0 %v793
    %3277 = vmatprep.subr.bf16.mxu0 0
    %3278 = vmatpush1.bf16.msra.mxu0 0
    %3279 = vmatprep.subr.bf16.mxu0 0
    %3280 = vmatpush1.bf16.msra.mxu0 0
    %3281 = vmatprep.subr.bf16.mxu0 0
    %3282 = vmatpush1.bf16.msra.mxu0 0
    %3283 = vmatprep.subr.bf16.mxu0 0
    %3284 = vmatpush1.bf16.msra.mxu0 0
    %3285 = vmatprep.subr.bf16.mxu0 0
    %3286 = vmatpush1.bf16.msra.mxu0 0
    %3287 = vmatprep.subr.bf16.mxu0 0
    %3288 = vmatpush1.bf16.msra.mxu0 0
    %3289 = vmatprep.subr.bf16.mxu0 0
    %3290 = vmatpush1.bf16.msra.mxu0 0
    %3291 = vmatprep.subr.bf16.mxu0 0
    %3292 = vmatpush1.bf16.msra.mxu0 0
    %3293 = vmatprep.mubr.bf16.mxu0 0
    %3294 = vmatmul.mubr.bf16.gmra.mrb[0].mxu0 %v3260
    %v3295 = vpop.f32.mrb[0].mxu0
    %v3296 = vadd.f32 0.0, %v3295
    %v3297 = vpop.f32.mrb[0].mxu0
    %v3298 = vadd.f32 0.0, %v3297
    %v3299 = vpop.f32.mrb[0].mxu0
    %v3300 = vpop.f32.mrb[0].mxu0
    %3301 = vdwg.mxu0
    %3302 = vmatprep.subr.bf16.mxu0 %v768
    %3303 = vmatpush1.bf16.msra.mxu0 %v767
    %3304 = vmatprep.subr.bf16.mxu0 %v772
    %3305 = vmatpush1.bf16.msra.mxu0 %v771
    %3306 = vmatprep.subr.bf16.mxu0 %v776
    %3307 = vmatpush1.bf16.msra.mxu0 %v775
    %3308 = vmatprep.subr.bf16.mxu0 %v780
    %3309 = vmatpush1.bf16.msra.mxu0 %v779
    %3310 = vmatprep.subr.bf16.mxu0 %v784
    %3311 = vmatpush1.bf16.msra.mxu0 %v783
    %3312 = vmatprep.subr.bf16.mxu0 %v788
    %3313 = vmatpush1.bf16.msra.mxu0 %v787
    %3314 = vmatprep.subr.bf16.mxu0 %v792
    %3315 = vmatpush1.bf16.msra.mxu0 %v791
    %3316 = vmatprep.subr.bf16.mxu0 %v796
    %3317 = vmatpush1.bf16.msra.mxu0 %v795
    %3318 = vmatprep.subr.bf16.mxu0 0
    %3319 = vmatpush1.bf16.msra.mxu0 0
    %3320 = vmatprep.subr.bf16.mxu0 0
    %3321 = vmatpush1.bf16.msra.mxu0 0
    %3322 = vmatprep.subr.bf16.mxu0 0
    %3323 = vmatpush1.bf16.msra.mxu0 0
    %3324 = vmatprep.subr.bf16.mxu0 0
    %3325 = vmatpush1.bf16.msra.mxu0 0
    %3326 = vmatprep.subr.bf16.mxu0 0
    %3327 = vmatpush1.bf16.msra.mxu0 0
    %3328 = vmatprep.subr.bf16.mxu0 0
    %3329 = vmatpush1.bf16.msra.mxu0 0
    %3330 = vmatprep.subr.bf16.mxu0 0
    %3331 = vmatpush1.bf16.msra.mxu0 0
    %3332 = vmatprep.subr.bf16.mxu0 0
    %3333 = vmatpush1.bf16.msra.mxu0 0
    %3334 = vmatprep.mubr.bf16.mxu0 0
    %3335 = vmatmul.mubr.bf16.gmra.mrb[0].mxu0 %v3260
    %v3336 = vpop.f32.mrb[0].mxu0
    %v3337 = vadd.f32 0.0, %v3336
    %v3338 = vpop.f32.mrb[0].mxu0
    %v3339 = vadd.f32 0.0, %v3338
    %v3340 = vpop.f32.mrb[0].mxu0
    %v3341 = vpop.f32.mrb[0].mxu0
    %3342 = vdwg.mxu0
    %s3343 = scalar_lea.vmem [#allocation2], 224
    %v3344 = vld [vmem:[%s3343] sm:$0xff]
    %v3345 = vld [vmem:[%s3343 + $0x8] sm:$0xff]
    %v3346 = vld [vmem:[%s3343 + $0x10] sm:$0xff]
    %v3347 = vld [vmem:[%s3343 + $0x18] sm:$0xff]
    %v3348 = vadd.f32 %v3344, %v3213
    %v3349 = vadd.f32 %v3345, %v3215
    %v3350 = vadd.f32 %v3346, %v3254
    %v3351 = vadd.f32 %v3347, %v3256
    %v3352 = vxor.u32 %v3348, 2147483648
    %v3353 = vmul.f32 %v3352, 1.442695
    %v3354 = vpow.pop %v3353
    %v3355 = vadd.f32 %v3354, 1.0
    %v3356 = vrcp.pop %v3355
    %v3357 = vmul.f32 1.0, %v3356
    %v3358 = vxor.u32 %v3349, 2147483648
    %v3359 = vmul.f32 %v3358, 1.442695
    %v3360 = vpow.pop %v3359
    %v3361 = vadd.f32 %v3360, 1.0
    %v3362 = vrcp.pop %v3361
    %v3363 = vmul.f32 1.0, %v3362
    %v3364 = vtanh.pop %v3350
    %v3365 = vxor.u32 %v3351, 2147483648
    %v3366 = vmul.f32 %v3365, 1.442695
    %v3367 = vpow.pop %v3366
    %v3368 = vadd.f32 %v3367, 1.0
    %v3369 = vrcp.pop %v3368
    %v3370 = vmul.f32 1.0, %v3369
    %v3371 = vmul.f32 %v3363, %v3060
    %v3372 = vmul.f32 %v3357, %v3364
    %v3373 = vadd.f32 %v3371, %v3372
    %v3374 = vtanh.pop %v3373
    %v3375 = vmul.f32 %v3370, %v3374
    %v3376 = vsel %vm3177, 1, 0
    %3377 = vset.pattern.permute.xlu0 0
    %3378 = vperm.xlu0 %3377, %v3376
    %v3379 = vpop.permute.xlu0 %3378
    %vm3380 = vcmp.eq.s32.totalorder %v3379, 1
    %v3381 = vsel %vm3380, %v3375, %v3059
    %v3382 = vpack.c.bf16 %v3381, %v3381
    %3383 = vmatprep.subr.bf16.mxu0 %v1048
    %3384 = vmatpush1.bf16.msra.mxu0 %v1047
    %3385 = vmatprep.subr.bf16.mxu0 %v1052
    %3386 = vmatpush1.bf16.msra.mxu0 %v1051
    %3387 = vmatprep.subr.bf16.mxu0 %v1056
    %3388 = vmatpush1.bf16.msra.mxu0 %v1055
    %3389 = vmatprep.subr.bf16.mxu0 %v1060
    %3390 = vmatpush1.bf16.msra.mxu0 %v1059
    %3391 = vmatprep.subr.bf16.mxu0 %v1064
    %3392 = vmatpush1.bf16.msra.mxu0 %v1063
    %3393 = vmatprep.subr.bf16.mxu0 %v1068
    %3394 = vmatpush1.bf16.msra.mxu0 %v1067
    %3395 = vmatprep.subr.bf16.mxu0 %v1072
    %3396 = vmatpush1.bf16.msra.mxu0 %v1071
    %3397 = vmatprep.subr.bf16.mxu0 %v1076
    %3398 = vmatpush1.bf16.msra.mxu0 %v1075
    %3399 = vmatprep.subr.bf16.mxu0 0
    %3400 = vmatpush1.bf16.msra.mxu0 0
    %3401 = vmatprep.subr.bf16.mxu0 0
    %3402 = vmatpush1.bf16.msra.mxu0 0
    %3403 = vmatprep.subr.bf16.mxu0 0
    %3404 = vmatpush1.bf16.msra.mxu0 0
    %3405 = vmatprep.subr.bf16.mxu0 0
    %3406 = vmatpush1.bf16.msra.mxu0 0
    %3407 = vmatprep.subr.bf16.mxu0 0
    %3408 = vmatpush1.bf16.msra.mxu0 0
    %3409 = vmatprep.subr.bf16.mxu0 0
    %3410 = vmatpush1.bf16.msra.mxu0 0
    %3411 = vmatprep.subr.bf16.mxu0 0
    %3412 = vmatpush1.bf16.msra.mxu0 0
    %3413 = vmatprep.subr.bf16.mxu0 0
    %3414 = vmatpush1.bf16.msra.mxu0 0
    %3415 = vmatprep.mubr.bf16.mxu0 0
    %3416 = vmatmul.mubr.bf16.gmra.mrb[0].mxu0 %v3382
    %v3417 = vpop.f32.mrb[0].mxu0
    %v3418 = vadd.f32 %v3296, %v3417
    %v3419 = vpop.f32.mrb[0].mxu0
    %v3420 = vadd.f32 %v3298, %v3419
    %v3421 = vpop.f32.mrb[0].mxu0
    %v3422 = vpop.f32.mrb[0].mxu0
    %3423 = vdwg.mxu0
    %3424 = vmatprep.subr.bf16.mxu0 %v1050
    %3425 = vmatpush1.bf16.msra.mxu0 %v1049
    %3426 = vmatprep.subr.bf16.mxu0 %v1054
    %3427 = vmatpush1.bf16.msra.mxu0 %v1053
    %3428 = vmatprep.subr.bf16.mxu0 %v1058
    %3429 = vmatpush1.bf16.msra.mxu0 %v1057
    %3430 = vmatprep.subr.bf16.mxu0 %v1062
    %3431 = vmatpush1.bf16.msra.mxu0 %v1061
    %3432 = vmatprep.subr.bf16.mxu0 %v1066
    %3433 = vmatpush1.bf16.msra.mxu0 %v1065
    %3434 = vmatprep.subr.bf16.mxu0 %v1070
    %3435 = vmatpush1.bf16.msra.mxu0 %v1069
    %3436 = vmatprep.subr.bf16.mxu0 %v1074
    %3437 = vmatpush1.bf16.msra.mxu0 %v1073
    %3438 = vmatprep.subr.bf16.mxu0 %v1078
    %3439 = vmatpush1.bf16.msra.mxu0 %v1077
    %3440 = vmatprep.subr.bf16.mxu0 0
    %3441 = vmatpush1.bf16.msra.mxu0 0
    %3442 = vmatprep.subr.bf16.mxu0 0
    %3443 = vmatpush1.bf16.msra.mxu0 0
    %3444 = vmatprep.subr.bf16.mxu0 0
    %3445 = vmatpush1.bf16.msra.mxu0 0
    %3446 = vmatprep.subr.bf16.mxu0 0
    %3447 = vmatpush1.bf16.msra.mxu0 0
    %3448 = vmatprep.subr.bf16.mxu0 0
    %3449 = vmatpush1.bf16.msra.mxu0 0
    %3450 = vmatprep.subr.bf16.mxu0 0
    %3451 = vmatpush1.bf16.msra.mxu0 0
    %3452 = vmatprep.subr.bf16.mxu0 0
    %3453 = vmatpush1.bf16.msra.mxu0 0
    %3454 = vmatprep.subr.bf16.mxu0 0
    %3455 = vmatpush1.bf16.msra.mxu0 0
    %3456 = vmatprep.mubr.bf16.mxu0 0
    %3457 = vmatmul.mubr.bf16.gmra.mrb[0].mxu0 %v3382
    %v3458 = vpop.f32.mrb[0].mxu0
    %v3459 = vadd.f32 %v3337, %v3458
    %v3460 = vpop.f32.mrb[0].mxu0
    %v3461 = vadd.f32 %v3339, %v3460
    %v3462 = vpop.f32.mrb[0].mxu0
    %v3463 = vpop.f32.mrb[0].mxu0
    %3464 = vdwg.mxu0
    %v3465 = vadd.f32 %v3418, %v1197
    %v3466 = vadd.f32 %v3420, %v1201
    %v3467 = vadd.f32 %v3459, %v1205
    %v3468 = vadd.f32 %v3461, %v1209
    %v3469 = vxor.u32 %v3465, 2147483648
    %v3470 = vmul.f32 %v3469, 1.442695
    %v3471 = vpow.pop %v3470
    %v3472 = vadd.f32 %v3471, 1.0
    %v3473 = vrcp.pop %v3472
    %v3474 = vmul.f32 1.0, %v3473
    %v3475 = vxor.u32 %v3466, 2147483648
    %v3476 = vmul.f32 %v3475, 1.442695
    %v3477 = vpow.pop %v3476
    %v3478 = vadd.f32 %v3477, 1.0
    %v3479 = vrcp.pop %v3478
    %v3480 = vmul.f32 1.0, %v3479
    %v3481 = vtanh.pop %v3467
    %v3482 = vxor.u32 %v3468, 2147483648
    %v3483 = vmul.f32 %v3482, 1.442695
    %v3484 = vpow.pop %v3483
    %v3485 = vadd.f32 %v3484, 1.0
    %v3486 = vrcp.pop %v3485
    %v3487 = vmul.f32 1.0, %v3486
    %v3488 = vmul.f32 %v3480, %v3173
    %v3489 = vmul.f32 %v3474, %v3481
    %v3490 = vadd.f32 %v3488, %v3489
    %v3491 = vtanh.pop %v3490
    %v3492 = vmul.f32 %v3487, %v3491
    %v3493 = vsel %vm3380, %v3492, 0.0
    %s3494 = scalar_lea.vmem [#allocation3], 56
    %3495 = vst [vmem:[%s3494] sm:$0xff] %v3493
    %v3496 = vld [vmem:[#allocation3] sm:$0xff]
    %v3497 = vld [vmem:[#allocation3 + $0x8] sm:$0xff]
    %v3498 = vld [vmem:[#allocation3 + $0x10] sm:$0xff]
    %v3499 = vld [vmem:[#allocation3 + $0x18] sm:$0xff]
    %v3500 = vld [vmem:[#allocation3 + $0x20] sm:$0xff]
    %v3501 = vld [vmem:[#allocation3 + $0x28] sm:$0xff]
    %v3502 = vld [vmem:[#allocation3 + $0x30] sm:$0xff]
    %v3503 = vld [vmem:[#allocation3 + $0x38] sm:$0xff]
    %v3504 = vpack.c.bf16 %v3497, %v3496
    %v3505 = vpack.c.bf16 %v3499, %v3498
    %v3506 = vpack.c.bf16 %v3501, %v3500
    %v3507 = vpack.c.bf16 %v3503, %v3502
    %v3508 = vld [vmem:[%s8] sm:$0xf]
    %v3509 = vld [vmem:[%s8 + $0x4] sm:$0xf]
    %v3510 = vld [vmem:[%s8 + $0x8] sm:$0xf]
    %v3511 = vld [vmem:[%s8 + $0xc] sm:$0xf]
    %v3512 = vld [vmem:[%s8 + $0x10] sm:$0xf]
    %v3513 = vld [vmem:[%s8 + $0x14] sm:$0xf]
    %v3514 = vld [vmem:[%s8 + $0x18] sm:$0xf]
    %v3515 = vld [vmem:[%s8 + $0x1c] sm:$0xf]
    %v3516 = vld [vmem:[%s8 + $0x20] sm:$0xf]
    %v3517 = vld [vmem:[%s8 + $0x24] sm:$0xf]
    %v3518 = vld [vmem:[%s8 + $0x28] sm:$0xf]
    %v3519 = vld [vmem:[%s8 + $0x2c] sm:$0xf]
    %v3520 = vld [vmem:[%s8 + $0x30] sm:$0xf]
    %v3521 = vld [vmem:[%s8 + $0x34] sm:$0xf]
    %v3522 = vld [vmem:[%s8 + $0x38] sm:$0xf]
    %v3523 = vld [vmem:[%s8 + $0x3c] sm:$0xf]
    %v3524 = vld [vmem:[%s9] sm:$0x1]
    %v3526 = vlaneseq
    %v3527 = vshrl.u32 %v3526, 7
    %v3528 = vsub.s32 0, %v3527
    %v3529 = vrot.slane %v3524, %v3528
    %v3547 = vunpack.c.l.b16 %v3508
    %v3548 = vunpack.c.l.b16 %v3509
    %v3549 = vunpack.c.l.b16 %v3510
    %v3550 = vunpack.c.l.b16 %v3511
    %v3551 = vunpack.c.l.b16 %v3512
    %v3552 = vunpack.c.l.b16 %v3513
    %v3553 = vunpack.c.l.b16 %v3514
    %v3554 = vunpack.c.l.b16 %v3515
    %v3555 = vunpack.c.l.b16 %v3516
    %v3556 = vunpack.c.l.b16 %v3517
    %v3557 = vunpack.c.l.b16 %v3518
    %v3558 = vunpack.c.l.b16 %v3519
    %v3559 = vunpack.c.l.b16 %v3520
    %v3560 = vunpack.c.l.b16 %v3521
    %v3561 = vunpack.c.l.b16 %v3522
    %v3562 = vunpack.c.l.b16 %v3523
    %v3563 = vpack.c.b16 %v3548, %v3547
    %v3564 = vpack.c.b16 %v3550, %v3549
    %v3565 = vpack.c.b16 %v3552, %v3551
    %v3566 = vpack.c.b16 %v3554, %v3553
    %v3567 = vpack.c.b16 %v3556, %v3555
    %v3568 = vpack.c.b16 %v3558, %v3557
    %v3569 = vpack.c.b16 %v3560, %v3559
    %v3570 = vpack.c.b16 %v3562, %v3561
    %3579 = vmatprep.subr.bf16.mxu0 0
    %3580 = vmatpush1.bf16.msra.mxu0 %v3563
    %3581 = vmatprep.subr.bf16.mxu0 0
    %3582 = vmatpush1.bf16.msra.mxu0 %v3564
    %3583 = vmatprep.subr.bf16.mxu0 0
    %3584 = vmatpush1.bf16.msra.mxu0 %v3565
    %3585 = vmatprep.subr.bf16.mxu0 0
    %3586 = vmatpush1.bf16.msra.mxu0 %v3566
    %3587 = vmatprep.subr.bf16.mxu0 0
    %3588 = vmatpush1.bf16.msra.mxu0 %v3567
    %3589 = vmatprep.subr.bf16.mxu0 0
    %3590 = vmatpush1.bf16.msra.mxu0 %v3568
    %3591 = vmatprep.subr.bf16.mxu0 0
    %3592 = vmatpush1.bf16.msra.mxu0 %v3569
    %3593 = vmatprep.subr.bf16.mxu0 0
    %3594 = vmatpush1.bf16.msra.mxu0 %v3570
    %3595 = vmatprep.subr.bf16.mxu0 0
    %3596 = vmatpush1.bf16.msra.mxu0 0
    %3597 = vmatprep.subr.bf16.mxu0 0
    %3598 = vmatpush1.bf16.msra.mxu0 0
    %3599 = vmatprep.subr.bf16.mxu0 0
    %3600 = vmatpush1.bf16.msra.mxu0 0
    %3601 = vmatprep.subr.bf16.mxu0 0
    %3602 = vmatpush1.bf16.msra.mxu0 0
    %3603 = vmatprep.subr.bf16.mxu0 0
    %3604 = vmatpush1.bf16.msra.mxu0 0
    %3605 = vmatprep.subr.bf16.mxu0 0
    %3606 = vmatpush1.bf16.msra.mxu0 0
    %3607 = vmatprep.subr.bf16.mxu0 0
    %3608 = vmatpush1.bf16.msra.mxu0 0
    %3609 = vmatprep.subr.bf16.mxu0 0
    %3610 = vmatpush1.bf16.msra.mxu0 0
    %3611 = vmatprep.mubr.bf16.mxu0 0
    %3612 = vmatmul.mubr.bf16.gmra.mrb[0].mxu0 %v3504
    %v3613 = vpop.f32.mrb[0].mxu0
    %v3614 = vadd.f32 %v3529, %v3613
    %v3615 = vpop.f32.mrb[0].mxu0
    %v3616 = vpop.f32.mrb[0].mxu0
    %v3617 = vadd.f32 %v3529, %v3616
    %v3618 = vpop.f32.mrb[0].mxu0
    %3619 = vmatprep.mubr.bf16.mxu0 0
    %3620 = vmatmul.mubr.bf16.gmra.mrb[0].mxu0 %v3505
    %v3621 = vpop.f32.mrb[0].mxu0
    %v3622 = vadd.f32 %v3529, %v3621
    %v3623 = vpop.f32.mrb[0].mxu0
    %v3624 = vpop.f32.mrb[0].mxu0
    %v3625 = vadd.f32 %v3529, %v3624
    %v3626 = vpop.f32.mrb[0].mxu0
    %3627 = vmatprep.mubr.bf16.mxu0 0
    %3628 = vmatmul.mubr.bf16.gmra.mrb[0].mxu0 %v3506
    %v3629 = vpop.f32.mrb[0].mxu0
    %v3630 = vadd.f32 %v3529, %v3629
    %v3631 = vpop.f32.mrb[0].mxu0
    %v3632 = vpop.f32.mrb[0].mxu0
    %v3633 = vadd.f32 %v3529, %v3632
    %v3634 = vpop.f32.mrb[0].mxu0
    %3635 = vmatprep.mubr.bf16.mxu0 0
    %3636 = vmatmul.mubr.bf16.gmra.mrb[0].mxu0 %v3507
    %v3637 = vpop.f32.mrb[0].mxu0
    %v3638 = vadd.f32 %v3529, %v3637
    %v3639 = vpop.f32.mrb[0].mxu0
    %v3640 = vpop.f32.mrb[0].mxu0
    %v3641 = vadd.f32 %v3529, %v3640
    %v3642 = vpop.f32.mrb[0].mxu0
    %3643 = vdwg.mxu0
    %3644 = vst [vmem:[#allocation10] sm:$0xff] %v3614
    %3645 = vst [vmem:[#allocation10 + $0x8] sm:$0xff] %v3617
    %3646 = vst [vmem:[#allocation10 + $0x10] sm:$0xff] %v3622
    %3647 = vst [vmem:[#allocation10 + $0x18] sm:$0xff] %v3625
    %3648 = vst [vmem:[#allocation10 + $0x20] sm:$0xff] %v3630
    %3649 = vst [vmem:[#allocation10 + $0x28] sm:$0xff] %v3633
    %3650 = vst [vmem:[#allocation10 + $0x30] sm:$0xff] %v3638
    %3651 = vst [vmem:[#allocation10 + $0x38] sm:$0xff] %v3641
    // Predicated region
    $region54: #{tpu_custom_call.1} parent=1 // pred_check
      _
    $region55: #{tpu_custom_call.1} parent=1 // pred_check_branch
      %3653 = sbr.rel (0) target = $region57
    $region56: #{tpu_custom_call.1} parent=1 // pred_region
      %s3655 = ssub.s32 1024, 1024
      %3656 = vsyncadd [#allocation6], %s3655
      %s3657 = sshll.u32 [#allocation10], 4
      %s3658 = int_to_ptr.vmem [resolvable:$true] %s3657
      %3663 = dma.vmem_to_hbm [thread:$0]  %s3658, 1024, %s10, [#allocation6], 128, 128, 8
    $region57: #{tpu_custom_call.1} parent=1 // pred_fallthru
      _
    // Predicated region
    $region58: #{tpu_custom_call.1} parent=1 // pred_check
      _
    $region59: #{tpu_custom_call.1} parent=1 // pred_check_branch
      %3665 = sbr.rel (0) target = $region61
    $region60: #{tpu_custom_call.1} parent=1 // pred_region
      %3666 = dma.done [#allocation6], 1024
    $region61: #{tpu_custom_call.1} parent=1 // pred_fallthru
      _
    %3667 = vsyncpa [#allocation5], 1
    %3668 = vsyncpa [#allocation8], 1
    %3669 = vsyncpa [#allocation6], 1

</llo_original>
